<compile_context>
chip_gen: v5e
topology: v5e:2x2
jax: 0.10.0
libtpu: 0.0.40
codegen_flags: <defaults>
</compile_context>

<pallas_src>
import numpy as np
import jax
import jax.numpy as jnp
from jax.experimental import pallas as pl
from jax.experimental.pallas import tpu as pltpu

# ----------------------------- small synthetic config -----------------------------
BATCH        = 2
TIME_WINDOW  = 3          # T
PRED_WINDOW  = 2
IN_CHANNELS  = 4          # C
OUT_CHANNELS = 4
IN_H = IN_W  = 16         # raw input spatial size
VIT_IN_SHAPE = (32, 32)   # analogue of the 224x224 ViT input
PATCH_SIZE   = 8
HIDDEN_SIZE  = 32
NUM_HEADS    = 4
HEAD_DIM     = HIDDEN_SIZE // NUM_HEADS
NUM_LAYERS   = 2
MLP_DIM      = 4 * HIDDEN_SIZE
OUT_SHAPE    = (16, 24)
LN_EPS       = 1e-12
DT           = 1.0 / TIME_WINDOW          # one Euler step per frame

HP = VIT_IN_SHAPE[0] // PATCH_SIZE        # 4
WP = VIT_IN_SHAPE[1] // PATCH_SIZE        # 4
NUM_PATCHES = HP * WP                     # 16
N_VALID   = NUM_PATCHES + 1               # 17 real tokens (patches + CLS)
N_PAD     = 32                            # padded token count (multiple of 8 sublanes)
TC        = TIME_WINDOW * IN_CHANNELS     # 12
PP        = PATCH_SIZE * PATCH_SIZE       # 64
PATCH_DIM = TC * PP                       # 768
HW        = IN_H * IN_W                   # 256
OHW       = VIT_IN_SHAPE[0] * VIT_IN_SHAPE[1]   # 1024
SN        = NUM_HEADS * N_PAD             # 128 packed score lanes (lane dense)
HEAD_OUT  = OUT_SHAPE[0] * OUT_SHAPE[1]   # 384

_PAR = pltpu.CompilerParams(dimension_semantics=("parallel",))


def _bilinear_matrix(in_size, out_size):
    """PyTorch F.interpolate(mode='bilinear', align_corners=False) weights (numpy)."""
    scale = in_size / out_size
    o = np.arange(out_size, dtype=np.float64)
    src = np.maximum((o + 0.5) * scale - 0.5, 0.0)
    i0 = np.minimum(np.floor(src).astype(np.int64), in_size - 1)
    i1 = np.minimum(i0 + 1, in_size - 1)
    l1 = src - i0
    l0 = 1.0 - l1
    m = np.zeros((out_size, in_size), dtype=np.float32)
    m[np.arange(out_size), i0] += l0
    m[np.arange(out_size), i1] += l1
    return m


# ======================= kernel 1: ODE Euler step + input resize ====================

def _ode_resize_kernel(cols_ref, x_ref, wrep_ref, brep_ref, kron_ref, o_ref):
    # All T frames of one batch element at once: block-replicated conv weight makes the
    # 3x3 conv a single (12, 108) @ (108, 256) matmul; bias + tanh + Euler are epilogues;
    # the separable bilinear 16x16 -> 32x32 resize is one (12, 256) @ (256, 1024) matmul.
    conv = jnp.dot(wrep_ref[...], cols_ref[0],
                   preferred_element_type=jnp.float32)                 # (TC, HW)
    upd = x_ref[0] + DT * jnp.tanh(conv + brep_ref[...])               # (TC, HW)
    o_ref[0] = jnp.dot(upd.astype(jnp.bfloat16), kron_ref[...],
                       preferred_element_type=jnp.float32)             # (TC, OHW)


def ode_and_resize(x, f):
    """x: (B, T, C, H, W) -> (B, T*C, 32*32).  One fused kernel, grid=(B,)."""
    # TODO(synk): ODEModel/CNNDynamics bodies are not in the reference source; modeled
    # as one explicit-Euler step per frame with a padded 3x3 conv(c->c) + tanh.
    B = x.shape[0]
    xb = x.reshape(B * TIME_WINDOW, IN_CHANNELS, IN_H, IN_W)
    xp = jnp.pad(xb, ((0, 0), (0, 0), (1, 1), (1, 1)))
    shifts = [xp[:, :, di:di + IN_H, dj:dj + IN_W]
              for di in range(3) for dj in range(3)]
    cols = jnp.stack(shifts, axis=2)                                   # (BT, C, 9, H, W)
    cols = cols.reshape(B, TC * 9, HW)                                 # row = t*(C*9)+c*9+k
    x_r = x.reshape(B, TC, HW)                                         # row = t*C + c

    return pl.pallas_call(
        _ode_resize_kernel,
        out_shape=jax.ShapeDtypeStruct((B, TC, OHW), jnp.float32),
        grid=(B,),
        in_specs=[
            pl.BlockSpec((1, TC * 9, HW), lambda b: (b, 0, 0)),
            pl.BlockSpec((1, TC, HW), lambda b: (b, 0, 0)),
            pl.BlockSpec((TC, TC * 9), lambda b: (0, 0)),
            pl.BlockSpec((TC, 1), lambda b: (0, 0)),
            pl.BlockSpec((HW, OHW), lambda b: (0, 0)),
        ],
        out_specs=pl.BlockSpec((1, TC, OHW), lambda b: (b, 0, 0)),
        compiler_params=_PAR,
    )(cols, x_r, f["ode_wrep"], f["ode_brep"], f["kron_in"])


# ============ kernel 2: patch embed + all layers + final LN + head (fused) ==========

def _vit_forward_kernel(patch_ref, w_comb_ref, add_ref, attb_ref, hmask_ref,
                        ones_ref, lnfg_ref, lnfb_ref, regw_ref, regb_ref,
                        kron_ref, *layer_and_out):
    *lw, o_ref = layer_and_out
    scale = 1.0 / float(np.sqrt(HEAD_DIM))
    c_gelu = float(np.sqrt(2.0 / np.pi))

    def ln(v, g_ref, b_ref):
        mu = jnp.mean(v, axis=-1, keepdims=True)
        var = jnp.mean((v - mu) ** 2, axis=-1, keepdims=True)
        return (v - mu) * jax.lax.rsqrt(var + LN_EPS) * g_ref[...] + b_ref[...]

    # --- patch embedding (12->3 1x1 conv folded into the patch weight, exact) ---
    pt = jnp.dot(patch_ref[0], w_comb_ref[...],
                 preferred_element_type=jnp.float32)                    # (16, D)
    x = jnp.concatenate(
        [pt, jnp.zeros((N_PAD - NUM_PATCHES, HIDDEN_SIZE), jnp.float32)],
        axis=0) + add_ref[...]                                          # (N_PAD, D)
    # rows 0..15 = patches(+bias+pos), row 16 = CLS(+pos0), rows 17..31 = padding.

    hmask = hmask_ref[...]        # (SN, D)  block-diag head selector
    ones_bd = ones_ref[...]       # (SN, SN) block-diag ones: per-head denom broadcast
    att_bias = attb_ref[...]      # (1, SN)  0 for valid keys, -1e30 for padded keys

    for li in range(NUM_LAYERS):
        (ln1g, ln1b, wqkv, bqkv, wo, bo,
         ln2g, ln2b, w1, b1, w2, b2) = lw[12 * li: 12 * li + 12]

        # ---- attention: LN1 + fused QKV + block-diag packed softmax + out proj + residual
        h = ln(x, ln1g, ln1b)
        qkv = jnp.dot(h, wqkv[...], preferred_element_type=jnp.float32) + bqkv[...]
        q = qkv[:, :HIDDEN_SIZE]
        k = qkv[:, HIDDEN_SIZE:2 * HIDDEN_SIZE]
        v = qkv[:, 2 * HIDDEN_SIZE:]
        k_bd = jnp.concatenate([k] * NUM_HEADS, axis=0) * hmask          # (SN, D)
        v_bd = jnp.concatenate([v] * NUM_HEADS, axis=0) * hmask          # (SN, D)
        s = jax.lax.dot_general(q, k_bd, (((1,), (1,)), ((), ())),
                                preferred_element_type=jnp.float32) * scale + att_bias
        m = jnp.max(s, axis=-1, keepdims=True)       # per-row max: valid per-head stabilizer
        e = jnp.exp(s - m)                           # masked key columns underflow to 0
        den = jnp.dot(e, ones_bd, preferred_element_type=jnp.float32)    # per-head sums
        p = e * pl.reciprocal(den, approx=True)
        ctx = jnp.dot(p, v_bd, preferred_element_type=jnp.float32)       # (N_PAD, D)
        x = x + jnp.dot(ctx, wo[...], preferred_element_type=jnp.float32) + bo[...]

        # ---- MLP: LN2 + W1 + GELU(tanh approx, EUP) + W2 + residual
        h2 = ln(x, ln2g, ln2b)
        u = jnp.dot(h2, w1[...], preferred_element_type=jnp.float32) + b1[...]
        g = 0.5 * u * (1.0 + jnp.tanh(c_gelu * (u + 0.044715 * u * u * u)))
        x = x + jnp.dot(g, w2[...], preferred_element_type=jnp.float32) + b2[...]

    x = ln(x, lnfg_ref, lnfb_ref)                                        # final encoder LN

    # --- regression head: 1x1 conv + output bilinear resize as two lane-friendly matmuls
    tok = x[:NUM_PATCHES, :]                                             # (16, D)
    reg = jax.lax.dot_general(regw_ref[...], tok, (((1,), (1,)), ((), ())),
                              preferred_element_type=jnp.float32) + regb_ref[...]  # (C_out, 16)
    o_ref[0] = jnp.dot(reg, kron_ref[...],
                       preferred_element_type=jnp.float32)               # (C_out, 384)


def vit_forward(patches, f):
    """patches: (B, 16, 768) -> (B, OUT_CHANNELS, OH*OW).  One fused kernel, grid=(B,)."""
    B = patches.shape[0]
    fixed = [f["w_comb"], f["add_rows"], f["att_bias"], f["head_mask"], f["ones_bd"],
             f["lnf_g"], f["lnf_b"], f["reg_wT"], f["reg_b"], f["kron_out"]]
    layer_args = []
    for lp in f["layers"]:
        layer_args += [lp["ln1_g"], lp["ln1_b"], lp["wqkv"], lp["bqkv"],
                       lp["wo"], lp["bo"], lp["ln2_g"], lp["ln2_b"],
                       lp["w1"], lp["b1"], lp["w2"], lp["b2"]]
    args = [patches] + fixed + layer_args

    def const_spec(a):
        nd = a.ndim
        return pl.BlockSpec(a.shape, lambda b, _nd=nd: (0,) * _nd)

    in_specs = ([pl.BlockSpec((1, NUM_PATCHES, PATCH_DIM), lambda b: (b, 0, 0))]
                + [const_spec(a) for a in args[1:]])

    return pl.pallas_call(
        _vit_forward_kernel,
        out_shape=jax.ShapeDtypeStruct((B, OUT_CHANNELS, HEAD_OUT), jnp.float32),
        grid=(B,),
        in_specs=in_specs,
        out_specs=pl.BlockSpec((1, OUT_CHANNELS, HEAD_OUT), lambda b: (b, 0, 0)),
        compiler_params=_PAR,
    )(*args)


# ==================================== forward =======================================

def vision_transformer_forward(x, f):
    """x: (B, T, C, H, W) float32 -> (B, PRED_WINDOW, OUT_CHANNELS, *OUT_SHAPE)."""
    B = x.shape[0]
    x12 = ode_and_resize(x, f)                                       # (B, TC, 1024)
    img = x12.reshape(B, TC, VIT_IN_SHAPE[0], VIT_IN_SHAPE[1])
    t = img.reshape(B, TC, HP, PATCH_SIZE, WP, PATCH_SIZE)
    patches = t.transpose(0, 2, 4, 1, 3, 5).reshape(B, NUM_PATCHES, PATCH_DIM)
    out = vit_forward(patches, f)                                    # (B, C_out, 384)
    y = out.reshape(B, OUT_CHANNELS, OUT_SHAPE[0], OUT_SHAPE[1])
    # the reference module repeats the single prediction across the pred window
    return jnp.repeat(y[:, None], PRED_WINDOW, axis=1)


# ======================= parameter init + one-time weight folding ===================

def init_params(key):
    def nrm(k, shape, scale=0.02):
        return scale * jax.random.normal(k, shape, dtype=jnp.float32)

    keys = iter(jax.random.split(key, 64))
    D = HIDDEN_SIZE
    p = {
        "cnn_w": nrm(next(keys), (IN_CHANNELS * 9, IN_CHANNELS)),   # [ci*9+kh*3+kw, co]
        "cnn_b": jnp.zeros((IN_CHANNELS,), jnp.float32),
        "conv_w": nrm(next(keys), (TC, 3)),                         # 1x1 conv, in(t*C+c)->out
        "conv_b": jnp.zeros((3,), jnp.float32),
        "patch_w": nrm(next(keys), (3 * PP, D)),
        "patch_b": jnp.zeros((D,), jnp.float32),
        "cls_token": nrm(next(keys), (1, 1, D)),
        "pos_emb": nrm(next(keys), (1, N_VALID, D)),
        "ln_f_g": jnp.ones((D,), jnp.float32),
        "ln_f_b": jnp.zeros((D,), jnp.float32),
        "reg_w": nrm(next(keys), (D, OUT_CHANNELS)),
        "reg_b": jnp.zeros((OUT_CHANNELS,), jnp.float32),
        "layers": [],
    }
    for _ in range(NUM_LAYERS):
        p["layers"].append({
            "ln1_g": jnp.ones((D,), jnp.float32), "ln1_b": jnp.zeros((D,), jnp.float32),
            "wq": nrm(next(keys), (D, D)), "bq": jnp.zeros((D,), jnp.float32),
            "wk": nrm(next(keys), (D, D)), "bk": jnp.zeros((D,), jnp.float32),
            "wv": nrm(next(keys), (D, D)), "bv": jnp.zeros((D,), jnp.float32),
            "wo": nrm(next(keys), (D, D)), "bo": jnp.zeros((D,), jnp.float32),
            "ln2_g": jnp.ones((D,), jnp.float32), "ln2_b": jnp.zeros((D,), jnp.float32),
            "w1": nrm(next(keys), (D, MLP_DIM)), "b1": jnp.zeros((MLP_DIM,), jnp.float32),
            "w2": nrm(next(keys), (MLP_DIM, D)), "b2": jnp.zeros((D,), jnp.float32),
        })
    return p


def prepare_folded(p):
    """One-time (outside jit) folding of all exact linear maps into kernel-ready arrays."""
    D = HIDDEN_SIZE
    C = IN_CHANNELS
    T = TIME_WINDOW
    f = {}

    # ODE conv: block-replicated weight so all T frames are one matmul.
    wmat = p["cnn_w"].T.astype(jnp.float32)                         # (C, C*9)
    wrep = jnp.zeros((T * C, T * C * 9), jnp.float32)
    for t in range(T):
        wrep = wrep.at[t * C:(t + 1) * C, t * C * 9:(t + 1) * C * 9].set(wmat)
    f["ode_wrep"] = wrep
    f["ode_brep"] = jnp.tile(p["cnn_b"], T).reshape(T * C, 1).astype(jnp.float32)

    # input bilinear resize 16x16 -> 32x32 as one Kron matmul (bf16 halves its DMA)
    wh_in = _bilinear_matrix(IN_H, VIT_IN_SHAPE[0])
    ww_in = _bilinear_matrix(IN_W, VIT_IN_SHAPE[1])
    f["kron_in"] = jnp.asarray(np.kron(wh_in, ww_in).T, dtype=jnp.bfloat16)   # (256, 1024)

    # exact fold of the 12->3 1x1 conv into the patch-embedding weight
    pw = p["patch_w"].reshape(3, PP, D)
    f["w_comb"] = jnp.einsum('ic,cpd->ipd', p["conv_w"], pw).reshape(PATCH_DIM, D)
    b_comb = p["patch_b"] + jnp.einsum('c,cpd->d', p["conv_b"], pw)
    add = jnp.zeros((N_PAD, D), jnp.float32)
    add = add.at[:NUM_PATCHES, :].set(b_comb[None, :] + p["pos_emb"][0, 1:N_VALID])
    add = add.at[NUM_PATCHES, :].set(p["cls_token"].reshape(D) + p["pos_emb"][0, 0])
    f["add_rows"] = add

    # attention helper constants (padded-key bias, head selector, per-head denom broadcast)
    colv = np.arange(SN) % N_PAD
    f["att_bias"] = jnp.asarray(
        np.where(colv < N_VALID, 0.0, -1e30).astype(np.float32)).reshape(1, SN)
    hm = np.zeros((SN, D), np.float32)
    ob = np.zeros((SN, SN), np.float32)
    for h in range(NUM_HEADS):
        hm[h * N_PAD:(h + 1) * N_PAD, h * HEAD_DIM:(h + 1) * HEAD_DIM] = 1.0
        ob[h * N_PAD:(h + 1) * N_PAD, h * N_PAD:(h + 1) * N_PAD] = 1.0
    f["head_mask"] = jnp.asarray(hm)
    f["ones_bd"] = jnp.asarray(ob)

    f["lnf_g"] = p["ln_f_g"].reshape(1, D)
    f["lnf_b"] = p["ln_f_b"].reshape(1, D)

    # regression head: 1x1 conv weight (transposed) + output bilinear resize Kron matrix
    f["reg_wT"] = p["reg_w"].T                                       # (C_out, D)
    f["reg_b"] = p["reg_b"].reshape(OUT_CHANNELS, 1)
    wh_out = _bilinear_matrix(HP, OUT_SHAPE[0])
    ww_out = _bilinear_matrix(WP, OUT_SHAPE[1])
    f["kron_out"] = jnp.asarray(np.kron(wh_out, ww_out).T)           # (16, 384)

    f["layers"] = []
    for lp in p["layers"]:
        f["layers"].append({
            "ln1_g": lp["ln1_g"].reshape(1, D), "ln1_b": lp["ln1_b"].reshape(1, D),
            "wqkv": jnp.concatenate([lp["wq"], lp["wk"], lp["wv"]], axis=1),
            "bqkv": jnp.concatenate([lp["bq"], lp["bk"], lp["bv"]]).reshape(1, 3 * D),
            "wo": lp["wo"], "bo": lp["bo"].reshape(1, D),
            "ln2_g": lp["ln2_g"].reshape(1, D), "ln2_b": lp["ln2_b"].reshape(1, D),
            "w1": lp["w1"], "b1": lp["b1"].reshape(1, MLP_DIM),
            "w2": lp["w2"], "b2": lp["b2"].reshape(1, D),
        })
    return f


# ===================================== main ==========================================

if __name__ == "__main__":
    key = jax.random.PRNGKey(0)
    kx, kp = jax.random.split(key)
    x = jax.random.normal(kx, (BATCH, TIME_WINDOW, IN_CHANNELS, IN_H, IN_W),
                          dtype=jnp.float32)
    params = init_params(kp)
    folded = prepare_folded(params)        # weight folding done once, outside the jit

    fwd = jax.jit(vision_transformer_forward)
    out = jax.block_until_ready(fwd(x, folded))

    expected = (BATCH, PRED_WINDOW, OUT_CHANNELS, OUT_SHAPE[0], OUT_SHAPE[1])
    assert out.shape == expected, (out.shape, expected)
    assert out.dtype == jnp.float32
    assert bool(jnp.all(jnp.isfinite(out)))
    print("KERNEL_OK")
</pallas_src>

<mosaic_0001>
module attributes {stable_mosaic.version = 11 : i64} {
  func.func @_ode_resize_kernel(%arg0: i32, %arg1: memref<1x108x256xf32, #tpu.memory_space<vmem>>, %arg2: memref<1x12x256xf32, #tpu.memory_space<vmem>>, %arg3: memref<12x108xf32, #tpu.memory_space<vmem>>, %arg4: memref<12x1xf32, #tpu.memory_space<vmem>>, %arg5: memref<256x1024xbf16, #tpu.memory_space<vmem>>, %arg6: memref<1x12x1024xf32, #tpu.memory_space<vmem>>) attributes {dimension_semantics = [#tpu.dimension_semantics<parallel>], iteration_bounds = array<i64: 2>, scalar_prefetch = 0 : i64, scratch_operands = 0 : i64, tpu.core_type = #tpu.core_type<tc>, window_params = [{transform_indices = @transform_0, window_bounds = array<i64: 1, 108, 256>}, {transform_indices = @transform_1, window_bounds = array<i64: 1, 12, 256>}, {pipeline_mode = #tpu.pipeline_mode<synchronous>, transform_indices = @transform_2, window_bounds = array<i64: 12, 108>}, {pipeline_mode = #tpu.pipeline_mode<synchronous>, transform_indices = @transform_3, window_bounds = array<i64: 12, 1>}, {pipeline_mode = #tpu.pipeline_mode<synchronous>, transform_indices = @transform_4, window_bounds = array<i64: 256, 1024>}, {transform_indices = @transform_5, window_bounds = array<i64: 1, 12, 1024>}]} {
    %c0 = arith.constant 0 : index
    %c0_0 = arith.constant 0 : index
    %0 = vector.load %arg3[%c0, %c0_0] : memref<12x108xf32, #tpu.memory_space<vmem>>, vector<12x108xf32>
    %c0_1 = arith.constant 0 : index
    %c0_2 = arith.constant 0 : index
    %c0_3 = arith.constant 0 : index
    %1 = vector.load %arg1[%c0_1, %c0_2, %c0_3] : memref<1x108x256xf32, #tpu.memory_space<vmem>>, vector<1x108x256xf32>
    %2 = vector.shape_cast %1 : vector<1x108x256xf32> to vector<108x256xf32>
    %cst = arith.constant dense<0.000000e+00> : vector<12x256xf32>
    %3 = tpu.matmul %0, %2, %cst {dimension_numbers = #tpu.dot_dimension_numbers<[1], [0], [0], [1], [0, 0, 1, 1], [], []>} : vector<12x108xf32>, vector<108x256xf32>, vector<12x256xf32> -> vector<12x256xf32>
    %c0_4 = arith.constant 0 : index
    %c0_5 = arith.constant 0 : index
    %c0_6 = arith.constant 0 : index
    %4 = vector.load %arg2[%c0_4, %c0_5, %c0_6] : memref<1x12x256xf32, #tpu.memory_space<vmem>>, vector<1x12x256xf32>
    %5 = vector.shape_cast %4 : vector<1x12x256xf32> to vector<12x256xf32>
    %c0_7 = arith.constant 0 : index
    %c0_8 = arith.constant 0 : index
    %6 = vector.load %arg4[%c0_7, %c0_8] : memref<12x1xf32, #tpu.memory_space<vmem>>, vector<12x1xf32>
    %7 = vector.broadcast %6 : vector<12x1xf32> to vector<12x256xf32>
    %8 = arith.addf %3, %7 : vector<12x256xf32>
    %9 = math.tanh %8 : vector<12x256xf32>
    %cst_9 = arith.constant 0.333333343 : f32
    %10 = vector.broadcast %cst_9 : f32 to vector<12x256xf32>
    %11 = arith.mulf %10, %9 : vector<12x256xf32>
    %12 = arith.addf %5, %11 : vector<12x256xf32>
    %13 = arith.truncf %12 : vector<12x256xf32> to vector<12x256xbf16>
    %c0_10 = arith.constant 0 : index
    %c0_11 = arith.constant 0 : index
    %14 = vector.load %arg5[%c0_10, %c0_11] : memref<256x1024xbf16, #tpu.memory_space<vmem>>, vector<256x1024xbf16>
    %cst_12 = arith.constant dense<0.000000e+00> : vector<12x1024xf32>
    %15 = tpu.matmul %13, %14, %cst_12 {dimension_numbers = #tpu.dot_dimension_numbers<[1], [0], [0], [1], [0, 0, 1, 1], [], []>} : vector<12x256xbf16>, vector<256x1024xbf16>, vector<12x1024xf32> -> vector<12x1024xf32>
    %c0_13 = arith.constant 0 : index
    %c0_14 = arith.constant 0 : index
    %c0_15 = arith.constant 0 : index
    %16 = vector.load %arg6[%c0_13, %c0_14, %c0_15] : memref<1x12x1024xf32, #tpu.memory_space<vmem>>, vector<1x12x1024xf32>
    %17 = vector.shape_cast %16 : vector<1x12x1024xf32> to vector<12x1024xf32>
    %18 = vector.shape_cast %15 : vector<12x1024xf32> to vector<1x12x1024xf32>
    tpu.vector_store %arg6[%c0_13, %c0_14, %c0_15], %18 {strides = array<i32>} : memref<1x12x1024xf32, #tpu.memory_space<vmem>>, vector<1x12x1024xf32>,
    return
  }
  func.func @transform_0(%arg0: i32) -> (i32, i32, i32) {
    %c0_i32 = arith.constant 0 : i32
    %c0_i32_0 = arith.constant 0 : i32
    %c0_i32_1 = arith.constant 0 : i32
    return %arg0, %c0_i32, %c0_i32_0 : i32, i32, i32
  }
  func.func @transform_1(%arg0: i32) -> (i32, i32, i32) {
    %c0_i32 = arith.constant 0 : i32
    %c0_i32_0 = arith.constant 0 : i32
    %c0_i32_1 = arith.constant 0 : i32
    return %arg0, %c0_i32, %c0_i32_0 : i32, i32, i32
  }
  func.func @transform_2(%arg0: i32) -> (i32, i32) {
    %c0_i32 = arith.constant 0 : i32
    %c0_i32_0 = arith.constant 0 : i32
    %c0_i32_1 = arith.constant 0 : i32
    return %c0_i32, %c0_i32_0 : i32, i32
  }
  func.func @transform_3(%arg0: i32) -> (i32, i32) {
    %c0_i32 = arith.constant 0 : i32
    %c0_i32_0 = arith.constant 0 : i32
    %c0_i32_1 = arith.constant 0 : i32
    return %c0_i32, %c0_i32_0 : i32, i32
  }
  func.func @transform_4(%arg0: i32) -> (i32, i32) {
    %c0_i32 = arith.constant 0 : i32
    %c0_i32_0 = arith.constant 0 : i32
    %c0_i32_1 = arith.constant 0 : i32
    return %c0_i32, %c0_i32_0 : i32, i32
  }
  func.func @transform_5(%arg0: i32) -> (i32, i32, i32) {
    %c0_i32 = arith.constant 0 : i32
    %c0_i32_0 = arith.constant 0 : i32
    %c0_i32_1 = arith.constant 0 : i32
    return %arg0, %c0_i32, %c0_i32_0 : i32, i32, i32
  }
}

module attributes {stable_mosaic.version = 11 : i64} {
  func.func @_vit_forward_kernel(%arg0: i32, %arg1: memref<1x16x768xf32, #tpu.memory_space<vmem>>, %arg2: memref<768x32xf32, #tpu.memory_space<vmem>>, %arg3: memref<32x32xf32, #tpu.memory_space<vmem>>, %arg4: memref<1x128xf32, #tpu.memory_space<vmem>>, %arg5: memref<128x32xf32, #tpu.memory_space<vmem>>, %arg6: memref<128x128xf32, #tpu.memory_space<vmem>>, %arg7: memref<1x32xf32, #tpu.memory_space<vmem>>, %arg8: memref<1x32xf32, #tpu.memory_space<vmem>>, %arg9: memref<4x32xf32, #tpu.memory_space<vmem>>, %arg10: memref<4x1xf32, #tpu.memory_space<vmem>>, %arg11: memref<16x384xf32, #tpu.memory_space<vmem>>, %arg12: memref<1x32xf32, #tpu.memory_space<vmem>>, %arg13: memref<1x32xf32, #tpu.memory_space<vmem>>, %arg14: memref<32x96xf32, #tpu.memory_space<vmem>>, %arg15: memref<1x96xf32, #tpu.memory_space<vmem>>, %arg16: memref<32x32xf32, #tpu.memory_space<vmem>>, %arg17: memref<1x32xf32, #tpu.memory_space<vmem>>, %arg18: memref<1x32xf32, #tpu.memory_space<vmem>>, %arg19: memref<1x32xf32, #tpu.memory_space<vmem>>, %arg20: memref<32x128xf32, #tpu.memory_space<vmem>>, %arg21: memref<1x128xf32, #tpu.memory_space<vmem>>, %arg22: memref<128x32xf32, #tpu.memory_space<vmem>>, %arg23: memref<1x32xf32, #tpu.memory_space<vmem>>, %arg24: memref<1x32xf32, #tpu.memory_space<vmem>>, %arg25: memref<1x32xf32, #tpu.memory_space<vmem>>, %arg26: memref<32x96xf32, #tpu.memory_space<vmem>>, %arg27: memref<1x96xf32, #tpu.memory_space<vmem>>, %arg28: memref<32x32xf32, #tpu.memory_space<vmem>>, %arg29: memref<1x32xf32, #tpu.memory_space<vmem>>, %arg30: memref<1x32xf32, #tpu.memory_space<vmem>>, %arg31: memref<1x32xf32, #tpu.memory_space<vmem>>, %arg32: memref<32x128xf32, #tpu.memory_space<vmem>>, %arg33: memref<1x128xf32, #tpu.memory_space<vmem>>, %arg34: memref<128x32xf32, #tpu.memory_space<vmem>>, %arg35: memref<1x32xf32, #tpu.memory_space<vmem>>, %arg36: memref<1x4x384xf32, #tpu.memory_space<vmem>>) attributes {dimension_semantics = [#tpu.dimension_semantics<parallel>], iteration_bounds = array<i64: 2>, scalar_prefetch = 0 : i64, scratch_operands = 0 : i64, tpu.core_type = #tpu.core_type<tc>, window_params = [{transform_indices = @transform_0, window_bounds = array<i64: 1, 16, 768>}, {pipeline_mode = #tpu.pipeline_mode<synchronous>, transform_indices = @transform_1, window_bounds = array<i64: 768, 32>}, {pipeline_mode = #tpu.pipeline_mode<synchronous>, transform_indices = @transform_2, window_bounds = array<i64: 32, 32>}, {pipeline_mode = #tpu.pipeline_mode<synchronous>, transform_indices = @transform_3, window_bounds = array<i64: 1, 128>}, {pipeline_mode = #tpu.pipeline_mode<synchronous>, transform_indices = @transform_4, window_bounds = array<i64: 128, 32>}, {pipeline_mode = #tpu.pipeline_mode<synchronous>, transform_indices = @transform_5, window_bounds = array<i64: 128, 128>}, {pipeline_mode = #tpu.pipeline_mode<synchronous>, transform_indices = @transform_6, window_bounds = array<i64: 1, 32>}, {pipeline_mode = #tpu.pipeline_mode<synchronous>, transform_indices = @transform_7, window_bounds = array<i64: 1, 32>}, {pipeline_mode = #tpu.pipeline_mode<synchronous>, transform_indices = @transform_8, window_bounds = array<i64: 4, 32>}, {pipeline_mode = #tpu.pipeline_mode<synchronous>, transform_indices = @transform_9, window_bounds = array<i64: 4, 1>}, {pipeline_mode = #tpu.pipeline_mode<synchronous>, transform_indices = @transform_10, window_bounds = array<i64: 16, 384>}, {pipeline_mode = #tpu.pipeline_mode<synchronous>, transform_indices = @transform_11, window_bounds = array<i64: 1, 32>}, {pipeline_mode = #tpu.pipeline_mode<synchronous>, transform_indices = @transform_12, window_bounds = array<i64: 1, 32>}, {pipeline_mode = #tpu.pipeline_mode<synchronous>, transform_indices = @transform_13, window_bounds = array<i64: 32, 96>}, {pipeline_mode = #tpu.pipeline_mode<synchronous>, transform_indices = @transform_14, window_bounds = array<i64: 1, 96>}, {pipeline_mode = #tpu.pipeline_mode<synchronous>, transform_indices = @transform_15, window_bounds = array<i64: 32, 32>}, {pipeline_mode = #tpu.pipeline_mode<synchronous>, transform_indices = @transform_16, window_bounds = array<i64: 1, 32>}, {pipeline_mode = #tpu.pipeline_mode<synchronous>, transform_indices = @transform_17, window_bounds = array<i64: 1, 32>}, {pipeline_mode = #tpu.pipeline_mode<synchronous>, transform_indices = @transform_18, window_bounds = array<i64: 1, 32>}, {pipeline_mode = #tpu.pipeline_mode<synchronous>, transform_indices = @transform_19, window_bounds = array<i64: 32, 128>}, {pipeline_mode = #tpu.pipeline_mode<synchronous>, transform_indices = @transform_20, window_bounds = array<i64: 1, 128>}, {pipeline_mode = #tpu.pipeline_mode<synchronous>, transform_indices = @transform_21, window_bounds = array<i64: 128, 32>}, {pipeline_mode = #tpu.pipeline_mode<synchronous>, transform_indices = @transform_22, window_bounds = array<i64: 1, 32>}, {pipeline_mode = #tpu.pipeline_mode<synchronous>, transform_indices = @transform_23, window_bounds = array<i64: 1, 32>}, {pipeline_mode = #tpu.pipeline_mode<synchronous>, transform_indices = @transform_24, window_bounds = array<i64: 1, 32>}, {pipeline_mode = #tpu.pipeline_mode<synchronous>, transform_indices = @transform_25, window_bounds = array<i64: 32, 96>}, {pipeline_mode = #tpu.pipeline_mode<synchronous>, transform_indices = @transform_26, window_bounds = array<i64: 1, 96>}, {pipeline_mode = #tpu.pipeline_mode<synchronous>, transform_indices = @transform_27, window_bounds = array<i64: 32, 32>}, {pipeline_mode = #tpu.pipeline_mode<synchronous>, transform_indices = @transform_28, window_bounds = array<i64: 1, 32>}, {pipeline_mode = #tpu.pipeline_mode<synchronous>, transform_indices = @transform_29, window_bounds = array<i64: 1, 32>}, {pipeline_mode = #tpu.pipeline_mode<synchronous>, transform_indices = @transform_30, window_bounds = array<i64: 1, 32>}, {pipeline_mode = #tpu.pipeline_mode<synchronous>, transform_indices = @transform_31, window_bounds = array<i64: 32, 128>}, {pipeline_mode = #tpu.pipeline_mode<synchronous>, transform_indices = @transform_32, window_bounds = array<i64: 1, 128>}, {pipeline_mode = #tpu.pipeline_mode<synchronous>, transform_indices = @transform_33, window_bounds = array<i64: 128, 32>}, {pipeline_mode = #tpu.pipeline_mode<synchronous>, transform_indices = @transform_34, window_bounds = array<i64: 1, 32>}, {transform_indices = @transform_35, window_bounds = array<i64: 1, 4, 384>}]} {
    %c0 = arith.constant 0 : index
    %c0_0 = arith.constant 0 : index
    %c0_1 = arith.constant 0 : index
    %0 = vector.load %arg1[%c0, %c0_0, %c0_1] : memref<1x16x768xf32, #tpu.memory_space<vmem>>, vector<1x16x768xf32>
    %1 = vector.shape_cast %0 : vector<1x16x768xf32> to vector<16x768xf32>
    %c0_2 = arith.constant 0 : index
    %c0_3 = arith.constant 0 : index
    %2 = vector.load %arg2[%c0_2, %c0_3] : memref<768x32xf32, #tpu.memory_space<vmem>>, vector<768x32xf32>
    %cst = arith.constant dense<0.000000e+00> : vector<16x32xf32>
    %3 = tpu.matmul %1, %2, %cst {dimension_numbers = #tpu.dot_dimension_numbers<[1], [0], [0], [1], [0, 0, 1, 1], [], []>} : vector<16x768xf32>, vector<768x32xf32>, vector<16x32xf32> -> vector<16x32xf32>
    %cst_4 = arith.constant 0.000000e+00 : f32
    %4 = vector.broadcast %cst_4 : f32 to vector<16x32xf32>
    %5 = tpu.concatenate %3, %4 in 0 : vector<16x32xf32>, vector<16x32xf32> -> vector<32x32xf32>
    %c0_5 = arith.constant 0 : index
    %c0_6 = arith.constant 0 : index
    %6 = vector.load %arg3[%c0_5, %c0_6] : memref<32x32xf32, #tpu.memory_space<vmem>>, vector<32x32xf32>
    %7 = arith.addf %5, %6 : vector<32x32xf32>
    %c0_7 = arith.constant 0 : index
    %c0_8 = arith.constant 0 : index
    %8 = vector.load %arg5[%c0_7, %c0_8] : memref<128x32xf32, #tpu.memory_space<vmem>>, vector<128x32xf32>
    %c0_9 = arith.constant 0 : index
    %c0_10 = arith.constant 0 : index
    %9 = vector.load %arg6[%c0_9, %c0_10] : memref<128x128xf32, #tpu.memory_space<vmem>>, vector<128x128xf32>
    %c0_11 = arith.constant 0 : index
    %c0_12 = arith.constant 0 : index
    %10 = vector.load %arg4[%c0_11, %c0_12] : memref<1x128xf32, #tpu.memory_space<vmem>>, vector<1x128xf32>
    %cst_13 = arith.constant dense<0.000000e+00> : vector<32xf32>
    %11 = vector.multi_reduction <add>, %7, %cst_13 [1] : vector<32x32xf32> to vector<32xf32>
    %12 = vector.shape_cast %11 : vector<32xf32> to vector<32x1xf32>
    %cst_14 = arith.constant 3.200000e+01 : f32
    %13 = vector.broadcast %cst_14 : f32 to vector<32x1xf32>
    %14 = arith.divf %12, %13 : vector<32x1xf32>
    %15 = vector.broadcast %14 : vector<32x1xf32> to vector<32x32xf32>
    %16 = arith.subf %7, %15 : vector<32x32xf32>
    %17 = arith.mulf %16, %16 : vector<32x32xf32>
    %cst_15 = arith.constant dense<0.000000e+00> : vector<32xf32>
    %18 = vector.multi_reduction <add>, %17, %cst_15 [1] : vector<32x32xf32> to vector<32xf32>
    %19 = vector.shape_cast %18 : vector<32xf32> to vector<32x1xf32>
    %cst_16 = arith.constant 3.200000e+01 : f32
    %20 = vector.broadcast %cst_16 : f32 to vector<32x1xf32>
    %21 = arith.divf %19, %20 : vector<32x1xf32>
    %22 = vector.broadcast %14 : vector<32x1xf32> to vector<32x32xf32>
    %23 = arith.subf %7, %22 : vector<32x32xf32>
    %cst_17 = arith.constant 9.99999996E-13 : f32
    %24 = vector.broadcast %cst_17 : f32 to vector<32x1xf32>
    %25 = arith.addf %21, %24 : vector<32x1xf32>
    %26 = math.rsqrt %25 : vector<32x1xf32>
    %27 = vector.broadcast %26 : vector<32x1xf32> to vector<32x32xf32>
    %28 = arith.mulf %23, %27 : vector<32x32xf32>
    %c0_18 = arith.constant 0 : index
    %c0_19 = arith.constant 0 : index
    %29 = vector.load %arg12[%c0_18, %c0_19] : memref<1x32xf32, #tpu.memory_space<vmem>>, vector<1x32xf32>
    %30 = vector.broadcast %29 : vector<1x32xf32> to vector<32x32xf32>
    %31 = arith.mulf %28, %30 : vector<32x32xf32>
    %c0_20 = arith.constant 0 : index
    %c0_21 = arith.constant 0 : index
    %32 = vector.load %arg13[%c0_20, %c0_21] : memref<1x32xf32, #tpu.memory_space<vmem>>, vector<1x32xf32>
    %33 = vector.broadcast %32 : vector<1x32xf32> to vector<32x32xf32>
    %34 = arith.addf %31, %33 : vector<32x32xf32>
    %c0_22 = arith.constant 0 : index
    %c0_23 = arith.constant 0 : index
    %35 = vector.load %arg14[%c0_22, %c0_23] : memref<32x96xf32, #tpu.memory_space<vmem>>, vector<32x96xf32>
    %cst_24 = arith.constant dense<0.000000e+00> : vector<32x96xf32>
    %36 = tpu.matmul %34, %35, %cst_24 {dimension_numbers = #tpu.dot_dimension_numbers<[1], [0], [0], [1], [0, 0, 1, 1], [], []>} : vector<32x32xf32>, vector<32x96xf32>, vector<32x96xf32> -> vector<32x96xf32>
    %c0_25 = arith.constant 0 : index
    %c0_26 = arith.constant 0 : index
    %37 = vector.load %arg15[%c0_25, %c0_26] : memref<1x96xf32, #tpu.memory_space<vmem>>, vector<1x96xf32>
    %38 = vector.broadcast %37 : vector<1x96xf32> to vector<32x96xf32>
    %39 = arith.addf %36, %38 : vector<32x96xf32>
    %40 = vector.extract_strided_slice %39 {offsets = [0, 0], sizes = [32, 32], strides = [1, 1]} : vector<32x96xf32> to vector<32x32xf32>
    %41 = vector.extract_strided_slice %39 {offsets = [0, 32], sizes = [32, 32], strides = [1, 1]} : vector<32x96xf32> to vector<32x32xf32>
    %42 = vector.extract_strided_slice %39 {offsets = [0, 64], sizes = [32, 32], strides = [1, 1]} : vector<32x96xf32> to vector<32x32xf32>
    %43 = tpu.concatenate %41, %41, %41, %41 in 0 : vector<32x32xf32>, vector<32x32xf32>, vector<32x32xf32>, vector<32x32xf32> -> vector<128x32xf32>
    %44 = arith.mulf %43, %8 : vector<128x32xf32>
    %45 = tpu.concatenate %42, %42, %42, %42 in 0 : vector<32x32xf32>, vector<32x32xf32>, vector<32x32xf32>, vector<32x32xf32> -> vector<128x32xf32>
    %46 = arith.mulf %45, %8 : vector<128x32xf32>
    %cst_27 = arith.constant dense<0.000000e+00> : vector<32x128xf32>
    %47 = tpu.matmul %40, %44, %cst_27 {dimension_numbers = #tpu.dot_dimension_numbers<[1], [1], [0], [0], [0, 0, 1, 0], [], []>} : vector<32x32xf32>, vector<128x32xf32>, vector<32x128xf32> -> vector<32x128xf32>
    %cst_28 = arith.constant 0.353553385 : f32
    %48 = vector.broadcast %cst_28 : f32 to vector<32x128xf32>
    %49 = arith.mulf %47, %48 : vector<32x128xf32>
    %50 = vector.broadcast %10 : vector<1x128xf32> to vector<32x128xf32>
    %51 = arith.addf %49, %50 : vector<32x128xf32>
    %cst_29 = arith.constant dense<0xFF800000> : vector<32xf32>
    %52 = vector.multi_reduction <maximumf>, %51, %cst_29 [1] : vector<32x128xf32> to vector<32xf32>
    %53 = vector.shape_cast %52 : vector<32xf32> to vector<32x1xf32>
    %54 = vector.broadcast %53 : vector<32x1xf32> to vector<32x128xf32>
    %55 = arith.subf %51, %54 : vector<32x128xf32>
    %56 = math.exp %55 : vector<32x128xf32>
    %cst_30 = arith.constant dense<0.000000e+00> : vector<32x128xf32>
    %57 = tpu.matmul %56, %9, %cst_30 {dimension_numbers = #tpu.dot_dimension_numbers<[1], [0], [0], [1], [0, 0, 1, 1], [], []>} : vector<32x128xf32>, vector<128x128xf32>, vector<32x128xf32> -> vector<32x128xf32>
    %58 = tpu.reciprocal %57 {approx = true} : vector<32x128xf32> -> vector<32x128xf32>
    %59 = arith.mulf %56, %58 : vector<32x128xf32>
    %cst_31 = arith.constant dense<0.000000e+00> : vector<32x32xf32>
    %60 = tpu.matmul %59, %46, %cst_31 {dimension_numbers = #tpu.dot_dimension_numbers<[1], [0], [0], [1], [0, 0, 1, 1], [], []>} : vector<32x128xf32>, vector<128x32xf32>, vector<32x32xf32> -> vector<32x32xf32>
    %c0_32 = arith.constant 0 : index
    %c0_33 = arith.constant 0 : index
    %61 = vector.load %arg16[%c0_32, %c0_33] : memref<32x32xf32, #tpu.memory_space<vmem>>, vector<32x32xf32>
    %cst_34 = arith.constant dense<0.000000e+00> : vector<32x32xf32>
    %62 = tpu.matmul %60, %61, %cst_34 {dimension_numbers = #tpu.dot_dimension_numbers<[1], [0], [0], [1], [0, 0, 1, 1], [], []>} : vector<32x32xf32>, vector<32x32xf32>, vector<32x32xf32> -> vector<32x32xf32>
    %63 = arith.addf %7, %62 : vector<32x32xf32>
    %c0_35 = arith.constant 0 : index
    %c0_36 = arith.constant 0 : index
    %64 = vector.load %arg17[%c0_35, %c0_36] : memref<1x32xf32, #tpu.memory_space<vmem>>, vector<1x32xf32>
    %65 = vector.broadcast %64 : vector<1x32xf32> to vector<32x32xf32>
    %66 = arith.addf %63, %65 : vector<32x32xf32>
    %cst_37 = arith.constant dense<0.000000e+00> : vector<32xf32>
    %67 = vector.multi_reduction <add>, %66, %cst_37 [1] : vector<32x32xf32> to vector<32xf32>
    %68 = vector.shape_cast %67 : vector<32xf32> to vector<32x1xf32>
    %cst_38 = arith.constant 3.200000e+01 : f32
    %69 = vector.broadcast %cst_38 : f32 to vector<32x1xf32>
    %70 = arith.divf %68, %69 : vector<32x1xf32>
    %71 = vector.broadcast %70 : vector<32x1xf32> to vector<32x32xf32>
    %72 = arith.subf %66, %71 : vector<32x32xf32>
    %73 = arith.mulf %72, %72 : vector<32x32xf32>
    %cst_39 = arith.constant dense<0.000000e+00> : vector<32xf32>
    %74 = vector.multi_reduction <add>, %73, %cst_39 [1] : vector<32x32xf32> to vector<32xf32>
    %75 = vector.shape_cast %74 : vector<32xf32> to vector<32x1xf32>
    %cst_40 = arith.constant 3.200000e+01 : f32
    %76 = vector.broadcast %cst_40 : f32 to vector<32x1xf32>
    %77 = arith.divf %75, %76 : vector<32x1xf32>
    %78 = vector.broadcast %70 : vector<32x1xf32> to vector<32x32xf32>
    %79 = arith.subf %66, %78 : vector<32x32xf32>
    %cst_41 = arith.constant 9.99999996E-13 : f32
    %80 = vector.broadcast %cst_41 : f32 to vector<32x1xf32>
    %81 = arith.addf %77, %80 : vector<32x1xf32>
    %82 = math.rsqrt %81 : vector<32x1xf32>
    %83 = vector.broadcast %82 : vector<32x1xf32> to vector<32x32xf32>
    %84 = arith.mulf %79, %83 : vector<32x32xf32>
    %c0_42 = arith.constant 0 : index
    %c0_43 = arith.constant 0 : index
    %85 = vector.load %arg18[%c0_42, %c0_43] : memref<1x32xf32, #tpu.memory_space<vmem>>, vector<1x32xf32>
    %86 = vector.broadcast %85 : vector<1x32xf32> to vector<32x32xf32>
    %87 = arith.mulf %84, %86 : vector<32x32xf32>
    %c0_44 = arith.constant 0 : index
    %c0_45 = arith.constant 0 : index
    %88 = vector.load %arg19[%c0_44, %c0_45] : memref<1x32xf32, #tpu.memory_space<vmem>>, vector<1x32xf32>
    %89 = vector.broadcast %88 : vector<1x32xf32> to vector<32x32xf32>
    %90 = arith.addf %87, %89 : vector<32x32xf32>
    %c0_46 = arith.constant 0 : index
    %c0_47 = arith.constant 0 : index
    %91 = vector.load %arg20[%c0_46, %c0_47] : memref<32x128xf32, #tpu.memory_space<vmem>>, vector<32x128xf32>
    %cst_48 = arith.constant dense<0.000000e+00> : vector<32x128xf32>
    %92 = tpu.matmul %90, %91, %cst_48 {dimension_numbers = #tpu.dot_dimension_numbers<[1], [0], [0], [1], [0, 0, 1, 1], [], []>} : vector<32x32xf32>, vector<32x128xf32>, vector<32x128xf32> -> vector<32x128xf32>
    %c0_49 = arith.constant 0 : index
    %c0_50 = arith.constant 0 : index
    %93 = vector.load %arg21[%c0_49, %c0_50] : memref<1x128xf32, #tpu.memory_space<vmem>>, vector<1x128xf32>
    %94 = vector.broadcast %93 : vector<1x128xf32> to vector<32x128xf32>
    %95 = arith.addf %92, %94 : vector<32x128xf32>
    %cst_51 = arith.constant 5.000000e-01 : f32
    %96 = vector.broadcast %cst_51 : f32 to vector<32x128xf32>
    %97 = arith.mulf %96, %95 : vector<32x128xf32>
    %cst_52 = arith.constant 4.471500e-02 : f32
    %98 = vector.broadcast %cst_52 : f32 to vector<32x128xf32>
    %99 = arith.mulf %98, %95 : vector<32x128xf32>
    %100 = arith.mulf %99, %95 : vector<32x128xf32>
    %101 = arith.mulf %100, %95 : vector<32x128xf32>
    %102 = arith.addf %95, %101 : vector<32x128xf32>
    %cst_53 = arith.constant 0.797884583 : f32
    %103 = vector.broadcast %cst_53 : f32 to vector<32x128xf32>
    %104 = arith.mulf %103, %102 : vector<32x128xf32>
    %105 = math.tanh %104 : vector<32x128xf32>
    %cst_54 = arith.constant 1.000000e+00 : f32
    %106 = vector.broadcast %cst_54 : f32 to vector<32x128xf32>
    %107 = arith.addf %106, %105 : vector<32x128xf32>
    %108 = arith.mulf %97, %107 : vector<32x128xf32>
    %c0_55 = arith.constant 0 : index
    %c0_56 = arith.constant 0 : index
    %109 = vector.load %arg22[%c0_55, %c0_56] : memref<128x32xf32, #tpu.memory_space<vmem>>, vector<128x32xf32>
    %cst_57 = arith.constant dense<0.000000e+00> : vector<32x32xf32>
    %110 = tpu.matmul %108, %109, %cst_57 {dimension_numbers = #tpu.dot_dimension_numbers<[1], [0], [0], [1], [0, 0, 1, 1], [], []>} : vector<32x128xf32>, vector<128x32xf32>, vector<32x32xf32> -> vector<32x32xf32>
    %111 = arith.addf %66, %110 : vector<32x32xf32>
    %c0_58 = arith.constant 0 : index
    %c0_59 = arith.constant 0 : index
    %112 = vector.load %arg23[%c0_58, %c0_59] : memref<1x32xf32, #tpu.memory_space<vmem>>, vector<1x32xf32>
    %113 = vector.broadcast %112 : vector<1x32xf32> to vector<32x32xf32>
    %114 = arith.addf %111, %113 : vector<32x32xf32>
    %cst_60 = arith.constant dense<0.000000e+00> : vector<32xf32>
    %115 = vector.multi_reduction <add>, %114, %cst_60 [1] : vector<32x32xf32> to vector<32xf32>
    %116 = vector.shape_cast %115 : vector<32xf32> to vector<32x1xf32>
    %cst_61 = arith.constant 3.200000e+01 : f32
    %117 = vector.broadcast %cst_61 : f32 to vector<32x1xf32>
    %118 = arith.divf %116, %117 : vector<32x1xf32>
    %119 = vector.broadcast %118 : vector<32x1xf32> to vector<32x32xf32>
    %120 = arith.subf %114, %119 : vector<32x32xf32>
    %121 = arith.mulf %120, %120 : vector<32x32xf32>
    %cst_62 = arith.constant dense<0.000000e+00> : vector<32xf32>
    %122 = vector.multi_reduction <add>, %121, %cst_62 [1] : vector<32x32xf32> to vector<32xf32>
    %123 = vector.shape_cast %122 : vector<32xf32> to vector<32x1xf32>
    %cst_63 = arith.constant 3.200000e+01 : f32
    %124 = vector.broadcast %cst_63 : f32 to vector<32x1xf32>
    %125 = arith.divf %123, %124 : vector<32x1xf32>
    %126 = vector.broadcast %118 : vector<32x1xf32> to vector<32x32xf32>
    %127 = arith.subf %114, %126 : vector<32x32xf32>
    %cst_64 = arith.constant 9.99999996E-13 : f32
    %128 = vector.broadcast %cst_64 : f32 to vector<32x1xf32>
    %129 = arith.addf %125, %128 : vector<32x1xf32>
    %130 = math.rsqrt %129 : vector<32x1xf32>
    %131 = vector.broadcast %130 : vector<32x1xf32> to vector<32x32xf32>
    %132 = arith.mulf %127, %131 : vector<32x32xf32>
    %c0_65 = arith.constant 0 : index
    %c0_66 = arith.constant 0 : index
    %133 = vector.load %arg24[%c0_65, %c0_66] : memref<1x32xf32, #tpu.memory_space<vmem>>, vector<1x32xf32>
    %134 = vector.broadcast %133 : vector<1x32xf32> to vector<32x32xf32>
    %135 = arith.mulf %132, %134 : vector<32x32xf32>
    %c0_67 = arith.constant 0 : index
    %c0_68 = arith.constant 0 : index
    %136 = vector.load %arg25[%c0_67, %c0_68] : memref<1x32xf32, #tpu.memory_space<vmem>>, vector<1x32xf32>
    %137 = vector.broadcast %136 : vector<1x32xf32> to vector<32x32xf32>
    %138 = arith.addf %135, %137 : vector<32x32xf32>
    %c0_69 = arith.constant 0 : index
    %c0_70 = arith.constant 0 : index
    %139 = vector.load %arg26[%c0_69, %c0_70] : memref<32x96xf32, #tpu.memory_space<vmem>>, vector<32x96xf32>
    %cst_71 = arith.constant dense<0.000000e+00> : vector<32x96xf32>
    %140 = tpu.matmul %138, %139, %cst_71 {dimension_numbers = #tpu.dot_dimension_numbers<[1], [0], [0], [1], [0, 0, 1, 1], [], []>} : vector<32x32xf32>, vector<32x96xf32>, vector<32x96xf32> -> vector<32x96xf32>
    %c0_72 = arith.constant 0 : index
    %c0_73 = arith.constant 0 : index
    %141 = vector.load %arg27[%c0_72, %c0_73] : memref<1x96xf32, #tpu.memory_space<vmem>>, vector<1x96xf32>
    %142 = vector.broadcast %141 : vector<1x96xf32> to vector<32x96xf32>
    %143 = arith.addf %140, %142 : vector<32x96xf32>
    %144 = vector.extract_strided_slice %143 {offsets = [0, 0], sizes = [32, 32], strides = [1, 1]} : vector<32x96xf32> to vector<32x32xf32>
    %145 = vector.extract_strided_slice %143 {offsets = [0, 32], sizes = [32, 32], strides = [1, 1]} : vector<32x96xf32> to vector<32x32xf32>
    %146 = vector.extract_strided_slice %143 {offsets = [0, 64], sizes = [32, 32], strides = [1, 1]} : vector<32x96xf32> to vector<32x32xf32>
    %147 = tpu.concatenate %145, %145, %145, %145 in 0 : vector<32x32xf32>, vector<32x32xf32>, vector<32x32xf32>, vector<32x32xf32> -> vector<128x32xf32>
    %148 = arith.mulf %147, %8 : vector<128x32xf32>
    %149 = tpu.concatenate %146, %146, %146, %146 in 0 : vector<32x32xf32>, vector<32x32xf32>, vector<32x32xf32>, vector<32x32xf32> -> vector<128x32xf32>
    %150 = arith.mulf %149, %8 : vector<128x32xf32>
    %cst_74 = arith.constant dense<0.000000e+00> : vector<32x128xf32>
    %151 = tpu.matmul %144, %148, %cst_74 {dimension_numbers = #tpu.dot_dimension_numbers<[1], [1], [0], [0], [0, 0, 1, 0], [], []>} : vector<32x32xf32>, vector<128x32xf32>, vector<32x128xf32> -> vector<32x128xf32>
    %cst_75 = arith.constant 0.353553385 : f32
    %152 = vector.broadcast %cst_75 : f32 to vector<32x128xf32>
    %153 = arith.mulf %151, %152 : vector<32x128xf32>
    %154 = vector.broadcast %10 : vector<1x128xf32> to vector<32x128xf32>
    %155 = arith.addf %153, %154 : vector<32x128xf32>
    %cst_76 = arith.constant dense<0xFF800000> : vector<32xf32>
    %156 = vector.multi_reduction <maximumf>, %155, %cst_76 [1] : vector<32x128xf32> to vector<32xf32>
    %157 = vector.shape_cast %156 : vector<32xf32> to vector<32x1xf32>
    %158 = vector.broadcast %157 : vector<32x1xf32> to vector<32x128xf32>
    %159 = arith.subf %155, %158 : vector<32x128xf32>
    %160 = math.exp %159 : vector<32x128xf32>
    %cst_77 = arith.constant dense<0.000000e+00> : vector<32x128xf32>
    %161 = tpu.matmul %160, %9, %cst_77 {dimension_numbers = #tpu.dot_dimension_numbers<[1], [0], [0], [1], [0, 0, 1, 1], [], []>} : vector<32x128xf32>, vector<128x128xf32>, vector<32x128xf32> -> vector<32x128xf32>
    %162 = tpu.reciprocal %161 {approx = true} : vector<32x128xf32> -> vector<32x128xf32>
    %163 = arith.mulf %160, %162 : vector<32x128xf32>
    %cst_78 = arith.constant dense<0.000000e+00> : vector<32x32xf32>
    %164 = tpu.matmul %163, %150, %cst_78 {dimension_numbers = #tpu.dot_dimension_numbers<[1], [0], [0], [1], [0, 0, 1, 1], [], []>} : vector<32x128xf32>, vector<128x32xf32>, vector<32x32xf32> -> vector<32x32xf32>
    %c0_79 = arith.constant 0 : index
    %c0_80 = arith.constant 0 : index
    %165 = vector.load %arg28[%c0_79, %c0_80] : memref<32x32xf32, #tpu.memory_space<vmem>>, vector<32x32xf32>
    %cst_81 = arith.constant dense<0.000000e+00> : vector<32x32xf32>
    %166 = tpu.matmul %164, %165, %cst_81 {dimension_numbers = #tpu.dot_dimension_numbers<[1], [0], [0], [1], [0, 0, 1, 1], [], []>} : vector<32x32xf32>, vector<32x32xf32>, vector<32x32xf32> -> vector<32x32xf32>
    %167 = arith.addf %114, %166 : vector<32x32xf32>
    %c0_82 = arith.constant 0 : index
    %c0_83 = arith.constant 0 : index
    %168 = vector.load %arg29[%c0_82, %c0_83] : memref<1x32xf32, #tpu.memory_space<vmem>>, vector<1x32xf32>
    %169 = vector.broadcast %168 : vector<1x32xf32> to vector<32x32xf32>
    %170 = arith.addf %167, %169 : vector<32x32xf32>
    %cst_84 = arith.constant dense<0.000000e+00> : vector<32xf32>
    %171 = vector.multi_reduction <add>, %170, %cst_84 [1] : vector<32x32xf32> to vector<32xf32>
    %172 = vector.shape_cast %171 : vector<32xf32> to vector<32x1xf32>
    %cst_85 = arith.constant 3.200000e+01 : f32
    %173 = vector.broadcast %cst_85 : f32 to vector<32x1xf32>
    %174 = arith.divf %172, %173 : vector<32x1xf32>
    %175 = vector.broadcast %174 : vector<32x1xf32> to vector<32x32xf32>
    %176 = arith.subf %170, %175 : vector<32x32xf32>
    %177 = arith.mulf %176, %176 : vector<32x32xf32>
    %cst_86 = arith.constant dense<0.000000e+00> : vector<32xf32>
    %178 = vector.multi_reduction <add>, %177, %cst_86 [1] : vector<32x32xf32> to vector<32xf32>
    %179 = vector.shape_cast %178 : vector<32xf32> to vector<32x1xf32>
    %cst_87 = arith.constant 3.200000e+01 : f32
    %180 = vector.broadcast %cst_87 : f32 to vector<32x1xf32>
    %181 = arith.divf %179, %180 : vector<32x1xf32>
    %182 = vector.broadcast %174 : vector<32x1xf32> to vector<32x32xf32>
    %183 = arith.subf %170, %182 : vector<32x32xf32>
    %cst_88 = arith.constant 9.99999996E-13 : f32
    %184 = vector.broadcast %cst_88 : f32 to vector<32x1xf32>
    %185 = arith.addf %181, %184 : vector<32x1xf32>
    %186 = math.rsqrt %185 : vector<32x1xf32>
    %187 = vector.broadcast %186 : vector<32x1xf32> to vector<32x32xf32>
    %188 = arith.mulf %183, %187 : vector<32x32xf32>
    %c0_89 = arith.constant 0 : index
    %c0_90 = arith.constant 0 : index
    %189 = vector.load %arg30[%c0_89, %c0_90] : memref<1x32xf32, #tpu.memory_space<vmem>>, vector<1x32xf32>
    %190 = vector.broadcast %189 : vector<1x32xf32> to vector<32x32xf32>
    %191 = arith.mulf %188, %190 : vector<32x32xf32>
    %c0_91 = arith.constant 0 : index
    %c0_92 = arith.constant 0 : index
    %192 = vector.load %arg31[%c0_91, %c0_92] : memref<1x32xf32, #tpu.memory_space<vmem>>, vector<1x32xf32>
    %193 = vector.broadcast %192 : vector<1x32xf32> to vector<32x32xf32>
    %194 = arith.addf %191, %193 : vector<32x32xf32>
    %c0_93 = arith.constant 0 : index
    %c0_94 = arith.constant 0 : index
    %195 = vector.load %arg32[%c0_93, %c0_94] : memref<32x128xf32, #tpu.memory_space<vmem>>, vector<32x128xf32>
    %cst_95 = arith.constant dense<0.000000e+00> : vector<32x128xf32>
    %196 = tpu.matmul %194, %195, %cst_95 {dimension_numbers = #tpu.dot_dimension_numbers<[1], [0], [0], [1], [0, 0, 1, 1], [], []>} : vector<32x32xf32>, vector<32x128xf32>, vector<32x128xf32> -> vector<32x128xf32>
    %c0_96 = arith.constant 0 : index
    %c0_97 = arith.constant 0 : index
    %197 = vector.load %arg33[%c0_96, %c0_97] : memref<1x128xf32, #tpu.memory_space<vmem>>, vector<1x128xf32>
    %198 = vector.broadcast %197 : vector<1x128xf32> to vector<32x128xf32>
    %199 = arith.addf %196, %198 : vector<32x128xf32>
    %cst_98 = arith.constant 5.000000e-01 : f32
    %200 = vector.broadcast %cst_98 : f32 to vector<32x128xf32>
    %201 = arith.mulf %200, %199 : vector<32x128xf32>
    %cst_99 = arith.constant 4.471500e-02 : f32
    %202 = vector.broadcast %cst_99 : f32 to vector<32x128xf32>
    %203 = arith.mulf %202, %199 : vector<32x128xf32>
    %204 = arith.mulf %203, %199 : vector<32x128xf32>
    %205 = arith.mulf %204, %199 : vector<32x128xf32>
    %206 = arith.addf %199, %205 : vector<32x128xf32>
    %cst_100 = arith.constant 0.797884583 : f32
    %207 = vector.broadcast %cst_100 : f32 to vector<32x128xf32>
    %208 = arith.mulf %207, %206 : vector<32x128xf32>
    %209 = math.tanh %208 : vector<32x128xf32>
    %cst_101 = arith.constant 1.000000e+00 : f32
    %210 = vector.broadcast %cst_101 : f32 to vector<32x128xf32>
    %211 = arith.addf %210, %209 : vector<32x128xf32>
    %212 = arith.mulf %201, %211 : vector<32x128xf32>
    %c0_102 = arith.constant 0 : index
    %c0_103 = arith.constant 0 : index
    %213 = vector.load %arg34[%c0_102, %c0_103] : memref<128x32xf32, #tpu.memory_space<vmem>>, vector<128x32xf32>
    %cst_104 = arith.constant dense<0.000000e+00> : vector<32x32xf32>
    %214 = tpu.matmul %212, %213, %cst_104 {dimension_numbers = #tpu.dot_dimension_numbers<[1], [0], [0], [1], [0, 0, 1, 1], [], []>} : vector<32x128xf32>, vector<128x32xf32>, vector<32x32xf32> -> vector<32x32xf32>
    %215 = arith.addf %170, %214 : vector<32x32xf32>
    %c0_105 = arith.constant 0 : index
    %c0_106 = arith.constant 0 : index
    %216 = vector.load %arg35[%c0_105, %c0_106] : memref<1x32xf32, #tpu.memory_space<vmem>>, vector<1x32xf32>
    %217 = vector.broadcast %216 : vector<1x32xf32> to vector<32x32xf32>
    %218 = arith.addf %215, %217 : vector<32x32xf32>
    %cst_107 = arith.constant dense<0.000000e+00> : vector<32xf32>
    %219 = vector.multi_reduction <add>, %218, %cst_107 [1] : vector<32x32xf32> to vector<32xf32>
    %220 = vector.shape_cast %219 : vector<32xf32> to vector<32x1xf32>
    %cst_108 = arith.constant 3.200000e+01 : f32
    %221 = vector.broadcast %cst_108 : f32 to vector<32x1xf32>
    %222 = arith.divf %220, %221 : vector<32x1xf32>
    %223 = vector.broadcast %222 : vector<32x1xf32> to vector<32x32xf32>
    %224 = arith.subf %218, %223 : vector<32x32xf32>
    %225 = arith.mulf %224, %224 : vector<32x32xf32>
    %cst_109 = arith.constant dense<0.000000e+00> : vector<32xf32>
    %226 = vector.multi_reduction <add>, %225, %cst_109 [1] : vector<32x32xf32> to vector<32xf32>
    %227 = vector.shape_cast %226 : vector<32xf32> to vector<32x1xf32>
    %cst_110 = arith.constant 3.200000e+01 : f32
    %228 = vector.broadcast %cst_110 : f32 to vector<32x1xf32>
    %229 = arith.divf %227, %228 : vector<32x1xf32>
    %230 = vector.broadcast %222 : vector<32x1xf32> to vector<32x32xf32>
    %231 = arith.subf %218, %230 : vector<32x32xf32>
    %cst_111 = arith.constant 9.99999996E-13 : f32
    %232 = vector.broadcast %cst_111 : f32 to vector<32x1xf32>
    %233 = arith.addf %229, %232 : vector<32x1xf32>
    %234 = math.rsqrt %233 : vector<32x1xf32>
    %235 = vector.broadcast %234 : vector<32x1xf32> to vector<32x32xf32>
    %236 = arith.mulf %231, %235 : vector<32x32xf32>
    %c0_112 = arith.constant 0 : index
    %c0_113 = arith.constant 0 : index
    %237 = vector.load %arg7[%c0_112, %c0_113] : memref<1x32xf32, #tpu.memory_space<vmem>>, vector<1x32xf32>
    %238 = vector.broadcast %237 : vector<1x32xf32> to vector<32x32xf32>
    %239 = arith.mulf %236, %238 : vector<32x32xf32>
    %c0_114 = arith.constant 0 : index
    %c0_115 = arith.constant 0 : index
    %240 = vector.load %arg8[%c0_114, %c0_115] : memref<1x32xf32, #tpu.memory_space<vmem>>, vector<1x32xf32>
    %241 = vector.broadcast %240 : vector<1x32xf32> to vector<32x32xf32>
    %242 = arith.addf %239, %241 : vector<32x32xf32>
    %243 = vector.extract_strided_slice %242 {offsets = [0, 0], sizes = [16, 32], strides = [1, 1]} : vector<32x32xf32> to vector<16x32xf32>
    %c0_116 = arith.constant 0 : index
    %c0_117 = arith.constant 0 : index
    %244 = vector.load %arg9[%c0_116, %c0_117] : memref<4x32xf32, #tpu.memory_space<vmem>>, vector<4x32xf32>
    %cst_118 = arith.constant dense<0.000000e+00> : vector<4x16xf32>
    %245 = tpu.matmul %244, %243, %cst_118 {dimension_numbers = #tpu.dot_dimension_numbers<[1], [1], [0], [0], [0, 0, 1, 0], [], []>} : vector<4x32xf32>, vector<16x32xf32>, vector<4x16xf32> -> vector<4x16xf32>
    %c0_119 = arith.constant 0 : index
    %c0_120 = arith.constant 0 : index
    %246 = vector.load %arg10[%c0_119, %c0_120] : memref<4x1xf32, #tpu.memory_space<vmem>>, vector<4x1xf32>
    %247 = vector.broadcast %246 : vector<4x1xf32> to vector<4x16xf32>
    %248 = arith.addf %245, %247 : vector<4x16xf32>
    %c0_121 = arith.constant 0 : index
    %c0_122 = arith.constant 0 : index
    %249 = vector.load %arg11[%c0_121, %c0_122] : memref<16x384xf32, #tpu.memory_space<vmem>>, vector<16x384xf32>
    %cst_123 = arith.constant dense<0.000000e+00> : vector<4x384xf32>
    %250 = tpu.matmul %248, %249, %cst_123 {dimension_numbers = #tpu.dot_dimension_numbers<[1], [0], [0], [1], [0, 0, 1, 1], [], []>} : vector<4x16xf32>, vector<16x384xf32>, vector<4x384xf32> -> vector<4x384xf32>
    %c0_124 = arith.constant 0 : index
    %c0_125 = arith.constant 0 : index
    %c0_126 = arith.constant 0 : index
    %251 = vector.load %arg36[%c0_124, %c0_125, %c0_126] : memref<1x4x384xf32, #tpu.memory_space<vmem>>, vector<1x4x384xf32>
    %252 = vector.shape_cast %251 : vector<1x4x384xf32> to vector<4x384xf32>
    %253 = vector.shape_cast %250 : vector<4x384xf32> to vector<1x4x384xf32>
    tpu.vector_store %arg36[%c0_124, %c0_125, %c0_126], %253 {strides = array<i32>} : memref<1x4x384xf32, #tpu.memory_space<vmem>>, vector<1x4x384xf32>,
    return
  }
  func.func @transform_0(%arg0: i32) -> (i32, i32, i32) {
    %c0_i32 = arith.constant 0 : i32
    %c0_i32_0 = arith.constant 0 : i32
    %c0_i32_1 = arith.constant 0 : i32
    return %arg0, %c0_i32, %c0_i32_0 : i32, i32, i32
  }
  func.func @transform_1(%arg0: i32) -> (i32, i32) {
    %c0_i32 = arith.constant 0 : i32
    %c0_i32_0 = arith.constant 0 : i32
    %c0_i32_1 = arith.constant 0 : i32
    return %c0_i32, %c0_i32_0 : i32, i32
  }
  func.func @transform_2(%arg0: i32) -> (i32, i32) {
    %c0_i32 = arith.constant 0 : i32
    %c0_i32_0 = arith.constant 0 : i32
    %c0_i32_1 = arith.constant 0 : i32
    return %c0_i32, %c0_i32_0 : i32, i32
  }
  func.func @transform_3(%arg0: i32) -> (i32, i32) {
    %c0_i32 = arith.constant 0 : i32
    %c0_i32_0 = arith.constant 0 : i32
    %c0_i32_1 = arith.constant 0 : i32
    return %c0_i32, %c0_i32_0 : i32, i32
  }
  func.func @transform_4(%arg0: i32) -> (i32, i32) {
    %c0_i32 = arith.constant 0 : i32
    %c0_i32_0 = arith.constant 0 : i32
    %c0_i32_1 = arith.constant 0 : i32
    return %c0_i32, %c0_i32_0 : i32, i32
  }
  func.func @transform_5(%arg0: i32) -> (i32, i32) {
    %c0_i32 = arith.constant 0 : i32
    %c0_i32_0 = arith.constant 0 : i32
    %c0_i32_1 = arith.constant 0 : i32
    return %c0_i32, %c0_i32_0 : i32, i32
  }
  func.func @transform_6(%arg0: i32) -> (i32, i32) {
    %c0_i32 = arith.constant 0 : i32
    %c0_i32_0 = arith.constant 0 : i32
    %c0_i32_1 = arith.constant 0 : i32
    return %c0_i32, %c0_i32_0 : i32, i32
  }
  func.func @transform_7(%arg0: i32) -> (i32, i32) {
    %c0_i32 = arith.constant 0 : i32
    %c0_i32_0 = arith.constant 0 : i32
    %c0_i32_1 = arith.constant 0 : i32
    return %c0_i32, %c0_i32_0 : i32, i32
  }
  func.func @transform_8(%arg0: i32) -> (i32, i32) {
    %c0_i32 = arith.constant 0 : i32
    %c0_i32_0 = arith.constant 0 : i32
    %c0_i32_1 = arith.constant 0 : i32
    return %c0_i32, %c0_i32_0 : i32, i32
  }
  func.func @transform_9(%arg0: i32) -> (i32, i32) {
    %c0_i32 = arith.constant 0 : i32
    %c0_i32_0 = arith.constant 0 : i32
    %c0_i32_1 = arith.constant 0 : i32
    return %c0_i32, %c0_i32_0 : i32, i32
  }
  func.func @transform_10(%arg0: i32) -> (i32, i32) {
    %c0_i32 = arith.constant 0 : i32
    %c0_i32_0 = arith.constant 0 : i32
    %c0_i32_1 = arith.constant 0 : i32
    return %c0_i32, %c0_i32_0 : i32, i32
  }
  func.func @transform_11(%arg0: i32) -> (i32, i32) {
    %c0_i32 = arith.constant 0 : i32
    %c0_i32_0 = arith.constant 0 : i32
    %c0_i32_1 = arith.constant 0 : i32
    return %c0_i32, %c0_i32_0 : i32, i32
  }
  func.func @transform_12(%arg0: i32) -> (i32, i32) {
    %c0_i32 = arith.constant 0 : i32
    %c0_i32_0 = arith.constant 0 : i32
    %c0_i32_1 = arith.constant 0 : i32
    return %c0_i32, %c0_i32_0 : i32, i32
  }
  func.func @transform_13(%arg0: i32) -> (i32, i32) {
    %c0_i32 = arith.constant 0 : i32
    %c0_i32_0 = arith.constant 0 : i32
    %c0_i32_1 = arith.constant 0 : i32
    return %c0_i32, %c0_i32_0 : i32, i32
  }
  func.func @transform_14(%arg0: i32) -> (i32, i32) {
    %c0_i32 = arith.constant 0 : i32
    %c0_i32_0 = arith.constant 0 : i32
    %c0_i32_1 = arith.constant 0 : i32
    return %c0_i32, %c0_i32_0 : i32, i32
  }
  func.func @transform_15(%arg0: i32) -> (i32, i32) {
    %c0_i32 = arith.constant 0 : i32
    %c0_i32_0 = arith.constant 0 : i32
    %c0_i32_1 = arith.constant 0 : i32
    return %c0_i32, %c0_i32_0 : i32, i32
  }
  func.func @transform_16(%arg0: i32) -> (i32, i32) {
    %c0_i32 = arith.constant 0 : i32
    %c0_i32_0 = arith.constant 0 : i32
    %c0_i32_1 = arith.constant 0 : i32
    return %c0_i32, %c0_i32_0 : i32, i32
  }
  func.func @transform_17(%arg0: i32) -> (i32, i32) {
    %c0_i32 = arith.constant 0 : i32
    %c0_i32_0 = arith.constant 0 : i32
    %c0_i32_1 = arith.constant 0 : i32
    return %c0_i32, %c0_i32_0 : i32, i32
  }
  func.func @transform_18(%arg0: i32) -> (i32, i32) {
    %c0_i32 = arith.constant 0 : i32
    %c0_i32_0 = arith.constant 0 : i32
    %c0_i32_1 = arith.constant 0 : i32
    return %c0_i32, %c0_i32_0 : i32, i32
  }
  func.func @transform_19(%arg0: i32) -> (i32, i32) {
    %c0_i32 = arith.constant 0 : i32
    %c0_i32_0 = arith.constant 0 : i32
    %c0_i32_1 = arith.constant 0 : i32
    return %c0_i32, %c0_i32_0 : i32, i32
  }
  func.func @transform_20(%arg0: i32) -> (i32, i32) {
    %c0_i32 = arith.constant 0 : i32
    %c0_i32_0 = arith.constant 0 : i32
    %c0_i32_1 = arith.constant 0 : i32
    return %c0_i32, %c0_i32_0 : i32, i32
  }
  func.func @transform_21(%arg0: i32) -> (i32, i32) {
    %c0_i32 = arith.constant 0 : i32
    %c0_i32_0 = arith.constant 0 : i32
    %c0_i32_1 = arith.constant 0 : i32
    return %c0_i32, %c0_i32_0 : i32, i32
  }
  func.func @transform_22(%arg0: i32) -> (i32, i32) {
    %c0_i32 = arith.constant 0 : i32
    %c0_i32_0 = arith.constant 0 : i32
    %c0_i32_1 = arith.constant 0 : i32
    return %c0_i32, %c0_i32_0 : i32, i32
  }
  func.func @transform_23(%arg0: i32) -> (i32, i32) {
    %c0_i32 = arith.constant 0 : i32
    %c0_i32_0 = arith.constant 0 : i32
    %c0_i32_1 = arith.constant 0 : i32
    return %c0_i32, %c0_i32_0 : i32, i32
  }
  func.func @transform_24(%arg0: i32) -> (i32, i32) {
    %c0_i32 = arith.constant 0 : i32
    %c0_i32_0 = arith.constant 0 : i32
    %c0_i32_1 = arith.constant 0 : i32
    return %c0_i32, %c0_i32_0 : i32, i32
  }
  func.func @transform_25(%arg0: i32) -> (i32, i32) {
    %c0_i32 = arith.constant 0 : i32
    %c0_i32_0 = arith.constant 0 : i32
    %c0_i32_1 = arith.constant 0 : i32
    return %c0_i32, %c0_i32_0 : i32, i32
  }
  func.func @transform_26(%arg0: i32) -> (i32, i32) {
    %c0_i32 = arith.constant 0 : i32
    %c0_i32_0 = arith.constant 0 : i32
    %c0_i32_1 = arith.constant 0 : i32
    return %c0_i32, %c0_i32_0 : i32, i32
  }
  func.func @transform_27(%arg0: i32) -> (i32, i32) {
    %c0_i32 = arith.constant 0 : i32
    %c0_i32_0 = arith.constant 0 : i32
    %c0_i32_1 = arith.constant 0 : i32
    return %c0_i32, %c0_i32_0 : i32, i32
  }
  func.func @transform_28(%arg0: i32) -> (i32, i32) {
    %c0_i32 = arith.constant 0 : i32
    %c0_i32_0 = arith.constant 0 : i32
    %c0_i32_1 = arith.constant 0 : i32
    return %c0_i32, %c0_i32_0 : i32, i32
  }
  func.func @transform_29(%arg0: i32) -> (i32, i32) {
    %c0_i32 = arith.constant 0 : i32
    %c0_i32_0 = arith.constant 0 : i32
    %c0_i32_1 = arith.constant 0 : i32
    return %c0_i32, %c0_i32_0 : i32, i32
  }
  func.func @transform_30(%arg0: i32) -> (i32, i32) {
    %c0_i32 = arith.constant 0 : i32
    %c0_i32_0 = arith.constant 0 : i32
    %c0_i32_1 = arith.constant 0 : i32
    return %c0_i32, %c0_i32_0 : i32, i32
  }
  func.func @transform_31(%arg0: i32) -> (i32, i32) {
    %c0_i32 = arith.constant 0 : i32
    %c0_i32_0 = arith.constant 0 : i32
    %c0_i32_1 = arith.constant 0 : i32
    return %c0_i32, %c0_i32_0 : i32, i32
  }
  func.func @transform_32(%arg0: i32) -> (i32, i32) {
    %c0_i32 = arith.constant 0 : i32
    %c0_i32_0 = arith.constant 0 : i32
    %c0_i32_1 = arith.constant 0 : i32
    return %c0_i32, %c0_i32_0 : i32, i32
  }
  func.func @transform_33(%arg0: i32) -> (i32, i32) {
    %c0_i32 = arith.constant 0 : i32
    %c0_i32_0 = arith.constant 0 : i32
    %c0_i32_1 = arith.constant 0 : i32
    return %c0_i32, %c0_i32_0 : i32, i32
  }
  func.func @transform_34(%arg0: i32) -> (i32, i32) {
    %c0_i32 = arith.constant 0 : i32
    %c0_i32_0 = arith.constant 0 : i32
    %c0_i32_1 = arith.constant 0 : i32
    return %c0_i32, %c0_i32_0 : i32, i32
  }
  func.func @transform_35(%arg0: i32) -> (i32, i32, i32) {
    %c0_i32 = arith.constant 0 : i32
    %c0_i32_0 = arith.constant 0 : i32
    %c0_i32_1 = arith.constant 0 : i32
    return %arg0, %c0_i32, %c0_i32_0 : i32, i32, i32
  }
}

</mosaic_0001>

<llo_original>
// kernel: vision_transformer_forward.2
$region0: #{vision_transformer_forward.2}
  #allocation0 [shape = 'u32[]', space=smem, size = 0x4, offset = 0x4, fixed_abs, tag = 'smem constant byte address 0x4 - core index']
  #allocation1 [shape = 'u32[72,128]{1,0:T(1,128)}', space=vmem, size = 0x9000, scoped, tag = 'internal scratch']
  %s0 = inlined_call_operand.vmem [shape: f32[2,108,256], index: 0, kind: input, shape index: {}]
  %s1 = inlined_call_operand.vmem [shape: f32[2,12,256], index: 1, kind: input, shape index: {}]
  %s2 = inlined_call_operand.vmem [shape: f32[12,108], index: 2, kind: input, shape index: {}]
  %s3 = inlined_call_operand.vmem [shape: f32[12,1], index: 3, kind: input, shape index: {}]
  %s4 = inlined_call_operand.vmem [shape: bf16[256,1024], index: 4, kind: input, shape index: {}]
  %s5 = inlined_call_operand.vmem [shape: f32[2,12,1024], index: 5, kind: output, shape index: {}]
  %s6 = sld [smem:[#allocation0]]
  $region53: #{vision_transformer_forward.2} parent=0
    _
  %s8 = ssub.s32 1, %s6
  %s9 = scalar_select 0, %s8, %s6
  loop: start=0, step=1, limit=4
  $region2: #{vision_transformer_forward.2} parent=0 // loop_pre_header
    _
  $region3: #{vision_transformer_forward.2} parent=0 // loop_header
    %s11 = sphi 0, %s15
    %p12 = scmp.ge.s32.totalorder %s11, 4
    %s21 = sphi 0, %s23
    %s24 = sphi 0, %s21
    %s25 = sphi 0, %s24
    %s41 = sphi 0, %s25
    %s47 = sphi 0, %s49
    %s50 = sphi 0, %s47
    %s51 = sphi 0, %s50
    %s67 = sphi 0, %s51
    %s71 = sphi 0, %s71
    %s73 = sphi 0, %s71
    %s74 = sphi 0, %s73
    %s88 = sphi 0, %s74
    %s92 = sphi 0, %s92
    %s94 = sphi 0, %s92
    %s95 = sphi 0, %s94
    %s109 = sphi 0, %s95
    %s113 = sphi 0, %s113
    %s115 = sphi 0, %s113
    %s116 = sphi 0, %s115
    %s130 = sphi 0, %s116
    %s136 = sphi 0, %s138
    %s139 = sphi 0, %s136
    %s140 = sphi 0, %s139
    %s156 = sphi 0, %s140
  $region4: #{vision_transformer_forward.2} parent=0 // loop_header_branch
    %14 = sbr.rel (%p12) target = $region8
  $region5: #{vision_transformer_forward.2} parent=0 // loop_body
    %s16 = ssub.s32 %s11, 1
    %s17 = ssub.s32 %s11, 2
    %s18 = sadd.s32 %s11, 1
    %s19 = ssub.s32 %s11, %s18
    %p20 = scmp.eq.s32.totalorder %s19, 0
    %s22 = sadd.s32 %s21, 1
    %s23 = scalar_select %p20, %s21, %s22
    %p26 = pneg %p20
    %p27 = scmp.eq.s32.totalorder %s11, 1
    %p28 = por %p26, %p27
    %p29 = scmp.ne.s32.totalorder %s21, %s24
    %p30 = scmp.eq.s32.totalorder %s11, 0
    %p31 = por %p29, %p30
    %p32 = scmp.ne.s32.totalorder %s21, %s24
    %p33 = scmp.eq.s32.totalorder %s16, 1
    %p34 = por %p32, %p33
    %p35 = scmp.ne.s32.totalorder %s24, %s25
    %p36 = scmp.eq.s32.totalorder %s16, 0
    %p37 = por %p35, %p36
    %p38 = scmp.ne.s32.totalorder %s24, %s25
    %p39 = scmp.eq.s32.totalorder %s17, 1
    %p40 = por %p38, %p39
    %p42 = scmp.ne.s32.totalorder %s25, %s41
    %p43 = scmp.eq.s32.totalorder %s17, 0
    %p44 = por %p42, %p43
    %s45 = ssub.s32 %s11, %s18
    %p46 = scmp.eq.s32.totalorder %s45, 0
    %s48 = sadd.s32 %s47, 1
    %s49 = scalar_select %p46, %s47, %s48
    %p52 = pneg %p46
    %p53 = scmp.eq.s32.totalorder %s11, 1
    %p54 = por %p52, %p53
    %p55 = scmp.ne.s32.totalorder %s47, %s50
    %p56 = scmp.eq.s32.totalorder %s11, 0
    %p57 = por %p55, %p56
    %p58 = scmp.ne.s32.totalorder %s47, %s50
    %p59 = scmp.eq.s32.totalorder %s16, 1
    %p60 = por %p58, %p59
    %p61 = scmp.ne.s32.totalorder %s50, %s51
    %p62 = scmp.eq.s32.totalorder %s16, 0
    %p63 = por %p61, %p62
    %p64 = scmp.ne.s32.totalorder %s50, %s51
    %p65 = scmp.eq.s32.totalorder %s17, 1
    %p66 = por %p64, %p65
    %p68 = scmp.ne.s32.totalorder %s51, %s67
    %p69 = scmp.eq.s32.totalorder %s17, 0
    %p70 = por %p68, %p69
    %s72 = sadd.s32 %s71, 1
    %p75 = scmp.eq.s32.totalorder %s11, 1
    %p76 = scmp.ne.s32.totalorder %s71, %s73
    %p77 = scmp.eq.s32.totalorder %s11, 0
    %p78 = por %p76, %p77
    %p79 = scmp.ne.s32.totalorder %s71, %s73
    %p80 = scmp.eq.s32.totalorder %s16, 1
    %p81 = por %p79, %p80
    %p82 = scmp.ne.s32.totalorder %s73, %s74
    %p83 = scmp.eq.s32.totalorder %s16, 0
    %p84 = por %p82, %p83
    %p85 = scmp.ne.s32.totalorder %s73, %s74
    %p86 = scmp.eq.s32.totalorder %s17, 1
    %p87 = por %p85, %p86
    %p89 = scmp.ne.s32.totalorder %s74, %s88
    %p90 = scmp.eq.s32.totalorder %s17, 0
    %p91 = por %p89, %p90
    %s93 = sadd.s32 %s92, 1
    %p96 = scmp.eq.s32.totalorder %s11, 1
    %p97 = scmp.ne.s32.totalorder %s92, %s94
    %p98 = scmp.eq.s32.totalorder %s11, 0
    %p99 = por %p97, %p98
    %p100 = scmp.ne.s32.totalorder %s92, %s94
    %p101 = scmp.eq.s32.totalorder %s16, 1
    %p102 = por %p100, %p101
    %p103 = scmp.ne.s32.totalorder %s94, %s95
    %p104 = scmp.eq.s32.totalorder %s16, 0
    %p105 = por %p103, %p104
    %p106 = scmp.ne.s32.totalorder %s94, %s95
    %p107 = scmp.eq.s32.totalorder %s17, 1
    %p108 = por %p106, %p107
    %p110 = scmp.ne.s32.totalorder %s95, %s109
    %p111 = scmp.eq.s32.totalorder %s17, 0
    %p112 = por %p110, %p111
    %s114 = sadd.s32 %s113, 1
    %p117 = scmp.eq.s32.totalorder %s11, 1
    %p118 = scmp.ne.s32.totalorder %s113, %s115
    %p119 = scmp.eq.s32.totalorder %s11, 0
    %p120 = por %p118, %p119
    %p121 = scmp.ne.s32.totalorder %s113, %s115
    %p122 = scmp.eq.s32.totalorder %s16, 1
    %p123 = por %p121, %p122
    %p124 = scmp.ne.s32.totalorder %s115, %s116
    %p125 = scmp.eq.s32.totalorder %s16, 0
    %p126 = por %p124, %p125
    %p127 = scmp.ne.s32.totalorder %s115, %s116
    %p128 = scmp.eq.s32.totalorder %s17, 1
    %p129 = por %p127, %p128
    %p131 = scmp.ne.s32.totalorder %s116, %s130
    %p132 = scmp.eq.s32.totalorder %s17, 0
    %p133 = por %p131, %p132
    %s134 = ssub.s32 %s11, %s18
    %p135 = scmp.eq.s32.totalorder %s134, 0
    %s137 = sadd.s32 %s136, 1
    %s138 = scalar_select %p135, %s136, %s137
    %p141 = pneg %p135
    %p142 = scmp.eq.s32.totalorder %s11, 1
    %p143 = por %p141, %p142
    %p144 = scmp.ne.s32.totalorder %s136, %s139
    %p145 = scmp.eq.s32.totalorder %s11, 0
    %p146 = por %p144, %p145
    %p147 = scmp.ne.s32.totalorder %s136, %s139
    %p148 = scmp.eq.s32.totalorder %s16, 1
    %p149 = por %p147, %p148
    %p150 = scmp.ne.s32.totalorder %s139, %s140
    %p151 = scmp.eq.s32.totalorder %s16, 0
    %p152 = por %p150, %p151
    %p153 = scmp.ne.s32.totalorder %s139, %s140
    %p154 = scmp.eq.s32.totalorder %s17, 1
    %p155 = por %p153, %p154
    %p157 = scmp.ne.s32.totalorder %s140, %s156
    %p158 = scmp.eq.s32.totalorder %s17, 0
    %p159 = por %p157, %p158
    %p160 = scmp.le.s32.totalorder 1, %s11
    %p161 = scmp.lt.s32.totalorder %s11, 3
    %p162 = pnand %p160, %p161
    %p163 = pneg %p162
    // Predicated region
    $region9: #{vision_transformer_forward.2} parent=5 // pred_check
      _
    $region10: #{vision_transformer_forward.2} parent=5 // pred_check_branch
      %165 = sbr.rel (%p162) target = $region12
    $region11: #{vision_transformer_forward.2} parent=5 // pred_region
      %s166 = ssub.s32 %s11, 1
      // Predicated region
      $region13: #{vision_transformer_forward.2} parent=11 // pred_check
        %p167 = pneg %p84
      $region14: #{vision_transformer_forward.2} parent=11 // pred_check_branch
        %169 = sbr.rel (%p167) target = $region16
      $region15: #{vision_transformer_forward.2} parent=11 // pred_region
        _
      $region16: #{vision_transformer_forward.2} parent=11 // pred_fallthru
        _
      // Predicated region
      $region17: #{vision_transformer_forward.2} parent=11 // pred_check
        %p170 = pneg %p105
      $region18: #{vision_transformer_forward.2} parent=11 // pred_check_branch
        %172 = sbr.rel (%p170) target = $region20
      $region19: #{vision_transformer_forward.2} parent=11 // pred_region
        _
      $region20: #{vision_transformer_forward.2} parent=11 // pred_fallthru
        _
      // Predicated region
      $region21: #{vision_transformer_forward.2} parent=11 // pred_check
        %p173 = pneg %p126
      $region22: #{vision_transformer_forward.2} parent=11 // pred_check_branch
        %175 = sbr.rel (%p173) target = $region24
      $region23: #{vision_transformer_forward.2} parent=11 // pred_region
        _
      $region24: #{vision_transformer_forward.2} parent=11 // pred_fallthru
        _
    $region12: #{vision_transformer_forward.2} parent=5 // pred_fallthru
      _
    %p176 = scmp.lt.s32.totalorder %s11, 2
    // Predicated region
    $region25: #{vision_transformer_forward.2} parent=5 // pred_check
      %p177 = pneg %p176
    $region26: #{vision_transformer_forward.2} parent=5 // pred_check_branch
      %179 = sbr.rel (%p177) target = $region28
    $region27: #{vision_transformer_forward.2} parent=5 // pred_region
      // Predicated region
      $region29: #{vision_transformer_forward.2} parent=27 // pred_check
        %p180 = pneg %p31
      $region30: #{vision_transformer_forward.2} parent=27 // pred_check_branch
        %182 = sbr.rel (%p180) target = $region32
      $region31: #{vision_transformer_forward.2} parent=27 // pred_region
        %p183 = scmp.lt.s32.totalorder %s11, 1
        %s184 = scalar_select %p183, %s11, 1
        %s185 = smul.addr %s184, 28
        %s186 = smul.addr %s185, 8
        %s187 = scalar_lea.vmem %s0, %s186
      $region32: #{vision_transformer_forward.2} parent=27 // pred_fallthru
        _
      // Predicated region
      $region33: #{vision_transformer_forward.2} parent=27 // pred_check
        %p188 = pneg %p57
      $region34: #{vision_transformer_forward.2} parent=27 // pred_check_branch
        %190 = sbr.rel (%p188) target = $region36
      $region35: #{vision_transformer_forward.2} parent=27 // pred_region
        %p191 = scmp.lt.s32.totalorder %s11, 1
        %s192 = scalar_select %p191, %s11, 1
        %s193 = smul.addr %s192, 4
        %s194 = smul.addr %s193, 8
        %s195 = scalar_lea.vmem %s1, %s194
      $region36: #{vision_transformer_forward.2} parent=27 // pred_fallthru
        _
    $region28: #{vision_transformer_forward.2} parent=5 // pred_fallthru
      _
    %p196 = scmp.le.s32.totalorder 1, %s11
    %p197 = scmp.lt.s32.totalorder %s11, 3
    %p198 = pnand %p196, %p197
    %p199 = pneg %p198
    // Predicated region
    $region37: #{vision_transformer_forward.2} parent=5 // pred_check
      _
    $region38: #{vision_transformer_forward.2} parent=5 // pred_check_branch
      %201 = sbr.rel (%p198) target = $region40
    $region39: #{vision_transformer_forward.2} parent=5 // pred_region
      %s202 = ssub.s32 %s11, 1
      %p203 = scmp.lt.s32.totalorder %s16, 1
      %s204 = scalar_select %p203, %s16, 1
      %s205 = smul.addr %s204, 28
      %s206 = smul.addr %s205, 8
      %s207 = scalar_lea.vmem %s0, %s206
      %p208 = pneg %p37
      %p209 = pneg %p34
      %p210 = scmp.lt.s32.totalorder %s16, 1
      %s211 = scalar_select %p210, %s16, 1
      %s212 = smul.addr %s211, 4
      %s213 = smul.addr %s212, 8
      %s214 = scalar_lea.vmem %s1, %s213
      %p215 = pneg %p63
      %p216 = pneg %p60
      %p217 = pneg %p84
      %p218 = pneg %p81
      %p219 = pneg %p105
      %p220 = pneg %p102
      %p221 = pneg %p126
      %p222 = pneg %p123
      %p223 = pneg %p152
      %p224 = pneg %p149
      %p225 = scmp.lt.s32.totalorder %s16, 1
      %s226 = scalar_select %p225, %s16, 1
      %s227 = smul.addr %s226, 16
      %s228 = smul.addr %s227, 8
      %s229 = scalar_lea.vmem %s5, %s228
      %p230 = scmp.lt.s32.totalorder %s16, 1
      %s231 = scalar_select %p230, %s16, 1
      %s232 = smul.addr %s231, 28
      %s233 = smul.addr %s232, 8
      %s234 = scalar_lea.vmem %s0, %s233
      %p235 = scmp.lt.s32.totalorder %s16, 1
      %s236 = scalar_select %p235, %s16, 1
      %s237 = smul.addr %s236, 4
      %s238 = smul.addr %s237, 8
      %s239 = scalar_lea.vmem %s1, %s238
      %p240 = scmp.lt.s32.totalorder %s16, 1
      %s241 = scalar_select %p240, %s16, 1
      %s242 = smul.addr %s241, 16
      %s243 = smul.addr %s242, 8
      %s244 = scalar_lea.vmem %s5, %s243
      %v245 = vld [vmem:[%s2] sm:$0xff]
      %v246 = vld [vmem:[%s2 + $0x8] sm:$0xf]
      %v247 = vld [vmem:[%s234] sm:$0xff]
      %v248 = vld [vmem:[%s234 + $0x8] sm:$0xff]
      %v249 = vld [vmem:[%s234 + $0x10] sm:$0xff]
      %v250 = vld [vmem:[%s234 + $0x18] sm:$0xff]
      %v251 = vld [vmem:[%s234 + $0x20] sm:$0xff]
      %v252 = vld [vmem:[%s234 + $0x28] sm:$0xff]
      %v253 = vld [vmem:[%s234 + $0x30] sm:$0xff]
      %v254 = vld [vmem:[%s234 + $0x38] sm:$0xff]
      %v255 = vld [vmem:[%s234 + $0x40] sm:$0xff]
      %v256 = vld [vmem:[%s234 + $0x48] sm:$0xff]
      %v257 = vld [vmem:[%s234 + $0x50] sm:$0xff]
      %v258 = vld [vmem:[%s234 + $0x58] sm:$0xff]
      %v259 = vld [vmem:[%s234 + $0x60] sm:$0xff]
      %v260 = vld [vmem:[%s234 + $0x68] sm:$0xff]
      %v261 = vld [vmem:[%s234 + $0x70] sm:$0xff]
      %v262 = vld [vmem:[%s234 + $0x78] sm:$0xff]
      %v263 = vld [vmem:[%s234 + $0x80] sm:$0xff]
      %v264 = vld [vmem:[%s234 + $0x88] sm:$0xff]
      %v265 = vld [vmem:[%s234 + $0x90] sm:$0xff]
      %v266 = vld [vmem:[%s234 + $0x98] sm:$0xff]
      %v267 = vld [vmem:[%s234 + $0xa0] sm:$0xff]
      %v268 = vld [vmem:[%s234 + $0xa8] sm:$0xff]
      %v269 = vld [vmem:[%s234 + $0xb0] sm:$0xff]
      %v270 = vld [vmem:[%s234 + $0xb8] sm:$0xff]
      %v271 = vld [vmem:[%s234 + $0xc0] sm:$0xff]
      %v272 = vld [vmem:[%s234 + $0xc8] sm:$0xff]
      %v273 = vld [vmem:[%s234 + $0xd0] sm:$0xf]
      %v274 = vld [vmem:[%s234 + $0xd8] sm:$0xf]
      %v275 = vld [vmem:[%s239] sm:$0xff]
      %v276 = vld [vmem:[%s239 + $0x8] sm:$0xff]
      %v277 = vld [vmem:[%s239 + $0x10] sm:$0xf]
      %v278 = vld [vmem:[%s239 + $0x18] sm:$0xf]
      %v279 = vld [vmem:[%s3] sm:$0xff]
      %v280 = vld [vmem:[%s3 + $0x8] sm:$0xf]
      %282 = vset.pattern.permute.xlu0 0
      %283 = vperm.xlu0 %282, %v279
      %v284 = vpop.permute.xlu0 %283
      %287 = vset.pattern.permute.xlu0 0
      %288 = vperm.xlu0 %287, %v280
      %v289 = vpop.permute.xlu0 %288
      %vm291 = vcmask 883712
      %v293 = vsel %vm291, %v245, 0
      %v296 = vsel %vm291, %v246, 0
      %vm298 = vcmask 1043456
      %v300 = vsel %vm298, %v273, 0
      %v303 = vsel %vm298, %v274, 0
      %305 = vmatpush.msra.mxu0 0.0
      %306 = vmatpush.msra.mxu0 0.0
      %307 = vmatpush.msra.mxu0 %v300
      %308 = vmatpush.msra.mxu0 %v271
      %309 = vmatpush.msra.mxu0 %v269
      %310 = vmatpush.msra.mxu0 %v267
      %311 = vmatpush.msra.mxu0 %v265
      %312 = vmatpush.msra.mxu0 %v263
      %313 = vmatpush.msra.mxu0 %v261
      %314 = vmatpush.msra.mxu0 %v259
      %315 = vmatpush.msra.mxu0 %v257
      %316 = vmatpush.msra.mxu0 %v255
      %317 = vmatpush.msra.mxu0 %v253
      %318 = vmatpush.msra.mxu0 %v251
      %319 = vmatpush.msra.mxu0 %v249
      %320 = vmatpush.msra.mxu0 %v247
      %321 = vmatmul.f32.gmra.mxu0 %v293
      %v322 = vpop.f32.mrf.mxu0
      %v323 = vadd.f32 %v284, %v322
      %324 = vmatmul.f32.gmra.mxu0 %v296
      %v325 = vpop.f32.mrf.mxu0
      %v326 = vadd.f32 %v289, %v325
      %327 = vdwg.mxu0
      %328 = vmatpush.msra.mxu0 0.0
      %329 = vmatpush.msra.mxu0 0.0
      %330 = vmatpush.msra.mxu0 %v303
      %331 = vmatpush.msra.mxu0 %v272
      %332 = vmatpush.msra.mxu0 %v270
      %333 = vmatpush.msra.mxu0 %v268
      %334 = vmatpush.msra.mxu0 %v266
      %335 = vmatpush.msra.mxu0 %v264
      %336 = vmatpush.msra.mxu0 %v262
      %337 = vmatpush.msra.mxu0 %v260
      %338 = vmatpush.msra.mxu0 %v258
      %339 = vmatpush.msra.mxu0 %v256
      %340 = vmatpush.msra.mxu0 %v254
      %341 = vmatpush.msra.mxu0 %v252
      %342 = vmatpush.msra.mxu0 %v250
      %343 = vmatpush.msra.mxu0 %v248
      %344 = vmatmul.f32.gmra.mxu0 %v293
      %v345 = vpop.f32.mrf.mxu0
      %v346 = vadd.f32 %v284, %v345
      %347 = vmatmul.f32.gmra.mxu0 %v296
      %v348 = vpop.f32.mrf.mxu0
      %v349 = vadd.f32 %v289, %v348
      %350 = vdwg.mxu0
      %v351 = vtanh.pop %v323
      %v352 = vtanh.pop %v346
      %v353 = vtanh.pop %v326
      %v354 = vtanh.pop %v349
      %v355 = vmul.f32 %v351, 0.33333334
      %v356 = vmul.f32 %v352, 0.33333334
      %v357 = vmul.f32 %v353, 0.33333334
      %v358 = vmul.f32 %v354, 0.33333334
      %v359 = vadd.f32 %v275, %v355
      %v360 = vadd.f32 %v276, %v356
      %v361 = vadd.f32 %v277, %v357
      %v362 = vadd.f32 %v278, %v358
      %v363 = vpack.c.bf16 %v361, %v359
      %v364 = vpack.c.bf16 %v362, %v360
      %v365 = vld [vmem:[%s4] sm:$0xff]
      %v366 = vld [vmem:[%s4 + $0x8] sm:$0xff]
      %v367 = vld [vmem:[%s4 + $0x10] sm:$0xff]
      %v368 = vld [vmem:[%s4 + $0x18] sm:$0xff]
      %v369 = vld [vmem:[%s4 + $0x20] sm:$0xff]
      %v370 = vld [vmem:[%s4 + $0x28] sm:$0xff]
      %v371 = vld [vmem:[%s4 + $0x30] sm:$0xff]
      %v372 = vld [vmem:[%s4 + $0x38] sm:$0xff]
      %v373 = vld [vmem:[%s4 + $0x40] sm:$0xff]
      %v374 = vld [vmem:[%s4 + $0x48] sm:$0xff]
      %v375 = vld [vmem:[%s4 + $0x50] sm:$0xff]
      %v376 = vld [vmem:[%s4 + $0x58] sm:$0xff]
      %v377 = vld [vmem:[%s4 + $0x60] sm:$0xff]
      %v378 = vld [vmem:[%s4 + $0x68] sm:$0xff]
      %v379 = vld [vmem:[%s4 + $0x70] sm:$0xff]
      %v380 = vld [vmem:[%s4 + $0x78] sm:$0xff]
      %v381 = vld [vmem:[%s4 + $0x80] sm:$0xff]
      %v382 = vld [vmem:[%s4 + $0x88] sm:$0xff]
      %v383 = vld [vmem:[%s4 + $0x90] sm:$0xff]
      %v384 = vld [vmem:[%s4 + $0x98] sm:$0xff]
      %v385 = vld [vmem:[%s4 + $0xa0] sm:$0xff]
      %v386 = vld [vmem:[%s4 + $0xa8] sm:$0xff]
      %v387 = vld [vmem:[%s4 + $0xb0] sm:$0xff]
      %v388 = vld [vmem:[%s4 + $0xb8] sm:$0xff]
      %v389 = vld [vmem:[%s4 + $0xc0] sm:$0xff]
      %v390 = vld [vmem:[%s4 + $0xc8] sm:$0xff]
      %v391 = vld [vmem:[%s4 + $0xd0] sm:$0xff]
      %v392 = vld [vmem:[%s4 + $0xd8] sm:$0xff]
      %v393 = vld [vmem:[%s4 + $0xe0] sm:$0xff]
      %v394 = vld [vmem:[%s4 + $0xe8] sm:$0xff]
      %v395 = vld [vmem:[%s4 + $0xf0] sm:$0xff]
      %v396 = vld [vmem:[%s4 + $0xf8] sm:$0xff]
      %v397 = vld [vmem:[%s4 + $0x100] sm:$0xff]
      %v398 = vld [vmem:[%s4 + $0x108] sm:$0xff]
      %v399 = vld [vmem:[%s4 + $0x110] sm:$0xff]
      %v400 = vld [vmem:[%s4 + $0x118] sm:$0xff]
      %v401 = vld [vmem:[%s4 + $0x120] sm:$0xff]
      %v402 = vld [vmem:[%s4 + $0x128] sm:$0xff]
      %v403 = vld [vmem:[%s4 + $0x130] sm:$0xff]
      %v404 = vld [vmem:[%s4 + $0x138] sm:$0xff]
      %v405 = vld [vmem:[%s4 + $0x140] sm:$0xff]
      %v406 = vld [vmem:[%s4 + $0x148] sm:$0xff]
      %v407 = vld [vmem:[%s4 + $0x150] sm:$0xff]
      %v408 = vld [vmem:[%s4 + $0x158] sm:$0xff]
      %v409 = vld [vmem:[%s4 + $0x160] sm:$0xff]
      %v410 = vld [vmem:[%s4 + $0x168] sm:$0xff]
      %v411 = vld [vmem:[%s4 + $0x170] sm:$0xff]
      %v412 = vld [vmem:[%s4 + $0x178] sm:$0xff]
      %v413 = vld [vmem:[%s4 + $0x180] sm:$0xff]
      %v414 = vld [vmem:[%s4 + $0x188] sm:$0xff]
      %v415 = vld [vmem:[%s4 + $0x190] sm:$0xff]
      %v416 = vld [vmem:[%s4 + $0x198] sm:$0xff]
      %v417 = vld [vmem:[%s4 + $0x1a0] sm:$0xff]
      %v418 = vld [vmem:[%s4 + $0x1a8] sm:$0xff]
      %v419 = vld [vmem:[%s4 + $0x1b0] sm:$0xff]
      %v420 = vld [vmem:[%s4 + $0x1b8] sm:$0xff]
      %v421 = vld [vmem:[%s4 + $0x1c0] sm:$0xff]
      %v422 = vld [vmem:[%s4 + $0x1c8] sm:$0xff]
      %v423 = vld [vmem:[%s4 + $0x1d0] sm:$0xff]
      %v424 = vld [vmem:[%s4 + $0x1d8] sm:$0xff]
      %v425 = vld [vmem:[%s4 + $0x1e0] sm:$0xff]
      %v426 = vld [vmem:[%s4 + $0x1e8] sm:$0xff]
      %v427 = vld [vmem:[%s4 + $0x1f0] sm:$0xff]
      %v428 = vld [vmem:[%s4 + $0x1f8] sm:$0xff]
      %v429 = vld [vmem:[%s4 + $0x200] sm:$0xff]
      %v430 = vld [vmem:[%s4 + $0x208] sm:$0xff]
      %v431 = vld [vmem:[%s4 + $0x210] sm:$0xff]
      %v432 = vld [vmem:[%s4 + $0x218] sm:$0xff]
      %v433 = vld [vmem:[%s4 + $0x220] sm:$0xff]
      %v434 = vld [vmem:[%s4 + $0x228] sm:$0xff]
      %v435 = vld [vmem:[%s4 + $0x230] sm:$0xff]
      %v436 = vld [vmem:[%s4 + $0x238] sm:$0xff]
      %v437 = vld [vmem:[%s4 + $0x240] sm:$0xff]
      %v438 = vld [vmem:[%s4 + $0x248] sm:$0xff]
      %v439 = vld [vmem:[%s4 + $0x250] sm:$0xff]
      %v440 = vld [vmem:[%s4 + $0x258] sm:$0xff]
      %v441 = vld [vmem:[%s4 + $0x260] sm:$0xff]
      %v442 = vld [vmem:[%s4 + $0x268] sm:$0xff]
      %v443 = vld [vmem:[%s4 + $0x270] sm:$0xff]
      %v444 = vld [vmem:[%s4 + $0x278] sm:$0xff]
      %v445 = vld [vmem:[%s4 + $0x280] sm:$0xff]
      %v446 = vld [vmem:[%s4 + $0x288] sm:$0xff]
      %v447 = vld [vmem:[%s4 + $0x290] sm:$0xff]
      %v448 = vld [vmem:[%s4 + $0x298] sm:$0xff]
      %v449 = vld [vmem:[%s4 + $0x2a0] sm:$0xff]
      %v450 = vld [vmem:[%s4 + $0x2a8] sm:$0xff]
      %v451 = vld [vmem:[%s4 + $0x2b0] sm:$0xff]
      %v452 = vld [vmem:[%s4 + $0x2b8] sm:$0xff]
      %v453 = vld [vmem:[%s4 + $0x2c0] sm:$0xff]
      %v454 = vld [vmem:[%s4 + $0x2c8] sm:$0xff]
      %v455 = vld [vmem:[%s4 + $0x2d0] sm:$0xff]
      %v456 = vld [vmem:[%s4 + $0x2d8] sm:$0xff]
      %v457 = vld [vmem:[%s4 + $0x2e0] sm:$0xff]
      %v458 = vld [vmem:[%s4 + $0x2e8] sm:$0xff]
      %v459 = vld [vmem:[%s4 + $0x2f0] sm:$0xff]
      %v460 = vld [vmem:[%s4 + $0x2f8] sm:$0xff]
      %v461 = vld [vmem:[%s4 + $0x300] sm:$0xff]
      %v462 = vld [vmem:[%s4 + $0x308] sm:$0xff]
      %v463 = vld [vmem:[%s4 + $0x310] sm:$0xff]
      %v464 = vld [vmem:[%s4 + $0x318] sm:$0xff]
      %v465 = vld [vmem:[%s4 + $0x320] sm:$0xff]
      %v466 = vld [vmem:[%s4 + $0x328] sm:$0xff]
      %v467 = vld [vmem:[%s4 + $0x330] sm:$0xff]
      %v468 = vld [vmem:[%s4 + $0x338] sm:$0xff]
      %v469 = vld [vmem:[%s4 + $0x340] sm:$0xff]
      %v470 = vld [vmem:[%s4 + $0x348] sm:$0xff]
      %v471 = vld [vmem:[%s4 + $0x350] sm:$0xff]
      %v472 = vld [vmem:[%s4 + $0x358] sm:$0xff]
      %v473 = vld [vmem:[%s4 + $0x360] sm:$0xff]
      %v474 = vld [vmem:[%s4 + $0x368] sm:$0xff]
      %v475 = vld [vmem:[%s4 + $0x370] sm:$0xff]
      %v476 = vld [vmem:[%s4 + $0x378] sm:$0xff]
      %v477 = vld [vmem:[%s4 + $0x380] sm:$0xff]
      %v478 = vld [vmem:[%s4 + $0x388] sm:$0xff]
      %v479 = vld [vmem:[%s4 + $0x390] sm:$0xff]
      %v480 = vld [vmem:[%s4 + $0x398] sm:$0xff]
      %v481 = vld [vmem:[%s4 + $0x3a0] sm:$0xff]
      %v482 = vld [vmem:[%s4 + $0x3a8] sm:$0xff]
      %v483 = vld [vmem:[%s4 + $0x3b0] sm:$0xff]
      %v484 = vld [vmem:[%s4 + $0x3b8] sm:$0xff]
      %v485 = vld [vmem:[%s4 + $0x3c0] sm:$0xff]
      %v486 = vld [vmem:[%s4 + $0x3c8] sm:$0xff]
      %v487 = vld [vmem:[%s4 + $0x3d0] sm:$0xff]
      %v488 = vld [vmem:[%s4 + $0x3d8] sm:$0xff]
      %v489 = vld [vmem:[%s4 + $0x3e0] sm:$0xff]
      %v490 = vld [vmem:[%s4 + $0x3e8] sm:$0xff]
      %v491 = vld [vmem:[%s4 + $0x3f0] sm:$0xff]
      %v492 = vld [vmem:[%s4 + $0x3f8] sm:$0xff]
      %v621 = vunpack.c.l.b16 %v365
      %v622 = vunpack.c.h.b16 %v365
      %v623 = vunpack.c.l.b16 %v366
      %v624 = vunpack.c.h.b16 %v366
      %v625 = vunpack.c.l.b16 %v367
      %v626 = vunpack.c.h.b16 %v367
      %v627 = vunpack.c.l.b16 %v368
      %v628 = vunpack.c.h.b16 %v368
      %v629 = vunpack.c.l.b16 %v369
      %v630 = vunpack.c.h.b16 %v369
      %v631 = vunpack.c.l.b16 %v370
      %v632 = vunpack.c.h.b16 %v370
      %v633 = vunpack.c.l.b16 %v371
      %v634 = vunpack.c.h.b16 %v371
      %v635 = vunpack.c.l.b16 %v372
      %v636 = vunpack.c.h.b16 %v372
      %v637 = vunpack.c.l.b16 %v373
      %v638 = vunpack.c.h.b16 %v373
      %v639 = vunpack.c.l.b16 %v374
      %v640 = vunpack.c.h.b16 %v374
      %v641 = vunpack.c.l.b16 %v375
      %v642 = vunpack.c.h.b16 %v375
      %v643 = vunpack.c.l.b16 %v376
      %v644 = vunpack.c.h.b16 %v376
      %v645 = vunpack.c.l.b16 %v377
      %v646 = vunpack.c.h.b16 %v377
      %v647 = vunpack.c.l.b16 %v378
      %v648 = vunpack.c.h.b16 %v378
      %v649 = vunpack.c.l.b16 %v379
      %v650 = vunpack.c.h.b16 %v379
      %v651 = vunpack.c.l.b16 %v380
      %v652 = vunpack.c.h.b16 %v380
      %v653 = vunpack.c.l.b16 %v381
      %v654 = vunpack.c.h.b16 %v381
      %v655 = vunpack.c.l.b16 %v382
      %v656 = vunpack.c.h.b16 %v382
      %v657 = vunpack.c.l.b16 %v383
      %v658 = vunpack.c.h.b16 %v383
      %v659 = vunpack.c.l.b16 %v384
      %v660 = vunpack.c.h.b16 %v384
      %v661 = vunpack.c.l.b16 %v385
      %v662 = vunpack.c.h.b16 %v385
      %v663 = vunpack.c.l.b16 %v386
      %v664 = vunpack.c.h.b16 %v386
      %v665 = vunpack.c.l.b16 %v387
      %v666 = vunpack.c.h.b16 %v387
      %v667 = vunpack.c.l.b16 %v388
      %v668 = vunpack.c.h.b16 %v388
      %v669 = vunpack.c.l.b16 %v389
      %v670 = vunpack.c.h.b16 %v389
      %v671 = vunpack.c.l.b16 %v390
      %v672 = vunpack.c.h.b16 %v390
      %v673 = vunpack.c.l.b16 %v391
      %v674 = vunpack.c.h.b16 %v391
      %v675 = vunpack.c.l.b16 %v392
      %v676 = vunpack.c.h.b16 %v392
      %v677 = vunpack.c.l.b16 %v393
      %v678 = vunpack.c.h.b16 %v393
      %v679 = vunpack.c.l.b16 %v394
      %v680 = vunpack.c.h.b16 %v394
      %v681 = vunpack.c.l.b16 %v395
      %v682 = vunpack.c.h.b16 %v395
      %v683 = vunpack.c.l.b16 %v396
      %v684 = vunpack.c.h.b16 %v396
      %v685 = vunpack.c.l.b16 %v397
      %v686 = vunpack.c.h.b16 %v397
      %v687 = vunpack.c.l.b16 %v398
      %v688 = vunpack.c.h.b16 %v398
      %v689 = vunpack.c.l.b16 %v399
      %v690 = vunpack.c.h.b16 %v399
      %v691 = vunpack.c.l.b16 %v400
      %v692 = vunpack.c.h.b16 %v400
      %v693 = vunpack.c.l.b16 %v401
      %v694 = vunpack.c.h.b16 %v401
      %v695 = vunpack.c.l.b16 %v402
      %v696 = vunpack.c.h.b16 %v402
      %v697 = vunpack.c.l.b16 %v403
      %v698 = vunpack.c.h.b16 %v403
      %v699 = vunpack.c.l.b16 %v404
      %v700 = vunpack.c.h.b16 %v404
      %v701 = vunpack.c.l.b16 %v405
      %v702 = vunpack.c.h.b16 %v405
      %v703 = vunpack.c.l.b16 %v406
      %v704 = vunpack.c.h.b16 %v406
      %v705 = vunpack.c.l.b16 %v407
      %v706 = vunpack.c.h.b16 %v407
      %v707 = vunpack.c.l.b16 %v408
      %v708 = vunpack.c.h.b16 %v408
      %v709 = vunpack.c.l.b16 %v409
      %v710 = vunpack.c.h.b16 %v409
      %v711 = vunpack.c.l.b16 %v410
      %v712 = vunpack.c.h.b16 %v410
      %v713 = vunpack.c.l.b16 %v411
      %v714 = vunpack.c.h.b16 %v411
      %v715 = vunpack.c.l.b16 %v412
      %v716 = vunpack.c.h.b16 %v412
      %v717 = vunpack.c.l.b16 %v413
      %v718 = vunpack.c.h.b16 %v413
      %v719 = vunpack.c.l.b16 %v414
      %v720 = vunpack.c.h.b16 %v414
      %v721 = vunpack.c.l.b16 %v415
      %v722 = vunpack.c.h.b16 %v415
      %v723 = vunpack.c.l.b16 %v416
      %v724 = vunpack.c.h.b16 %v416
      %v725 = vunpack.c.l.b16 %v417
      %v726 = vunpack.c.h.b16 %v417
      %v727 = vunpack.c.l.b16 %v418
      %v728 = vunpack.c.h.b16 %v418
      %v729 = vunpack.c.l.b16 %v419
      %v730 = vunpack.c.h.b16 %v419
      %v731 = vunpack.c.l.b16 %v420
      %v732 = vunpack.c.h.b16 %v420
      %v733 = vunpack.c.l.b16 %v421
      %v734 = vunpack.c.h.b16 %v421
      %v735 = vunpack.c.l.b16 %v422
      %v736 = vunpack.c.h.b16 %v422
      %v737 = vunpack.c.l.b16 %v423
      %v738 = vunpack.c.h.b16 %v423
      %v739 = vunpack.c.l.b16 %v424
      %v740 = vunpack.c.h.b16 %v424
      %v741 = vunpack.c.l.b16 %v425
      %v742 = vunpack.c.h.b16 %v425
      %v743 = vunpack.c.l.b16 %v426
      %v744 = vunpack.c.h.b16 %v426
      %v745 = vunpack.c.l.b16 %v427
      %v746 = vunpack.c.h.b16 %v427
      %v747 = vunpack.c.l.b16 %v428
      %v748 = vunpack.c.h.b16 %v428
      %v749 = vunpack.c.l.b16 %v429
      %v750 = vunpack.c.h.b16 %v429
      %v751 = vunpack.c.l.b16 %v430
      %v752 = vunpack.c.h.b16 %v430
      %v753 = vunpack.c.l.b16 %v431
      %v754 = vunpack.c.h.b16 %v431
      %v755 = vunpack.c.l.b16 %v432
      %v756 = vunpack.c.h.b16 %v432
      %v757 = vunpack.c.l.b16 %v433
      %v758 = vunpack.c.h.b16 %v433
      %v759 = vunpack.c.l.b16 %v434
      %v760 = vunpack.c.h.b16 %v434
      %v761 = vunpack.c.l.b16 %v435
      %v762 = vunpack.c.h.b16 %v435
      %v763 = vunpack.c.l.b16 %v436
      %v764 = vunpack.c.h.b16 %v436
      %v765 = vunpack.c.l.b16 %v437
      %v766 = vunpack.c.h.b16 %v437
      %v767 = vunpack.c.l.b16 %v438
      %v768 = vunpack.c.h.b16 %v438
      %v769 = vunpack.c.l.b16 %v439
      %v770 = vunpack.c.h.b16 %v439
      %v771 = vunpack.c.l.b16 %v440
      %v772 = vunpack.c.h.b16 %v440
      %v773 = vunpack.c.l.b16 %v441
      %v774 = vunpack.c.h.b16 %v441
      %v775 = vunpack.c.l.b16 %v442
      %v776 = vunpack.c.h.b16 %v442
      %v777 = vunpack.c.l.b16 %v443
      %v778 = vunpack.c.h.b16 %v443
      %v779 = vunpack.c.l.b16 %v444
      %v780 = vunpack.c.h.b16 %v444
      %v781 = vunpack.c.l.b16 %v445
      %v782 = vunpack.c.h.b16 %v445
      %v783 = vunpack.c.l.b16 %v446
      %v784 = vunpack.c.h.b16 %v446
      %v785 = vunpack.c.l.b16 %v447
      %v786 = vunpack.c.h.b16 %v447
      %v787 = vunpack.c.l.b16 %v448
      %v788 = vunpack.c.h.b16 %v448
      %v789 = vunpack.c.l.b16 %v449
      %v790 = vunpack.c.h.b16 %v449
      %v791 = vunpack.c.l.b16 %v450
      %v792 = vunpack.c.h.b16 %v450
      %v793 = vunpack.c.l.b16 %v451
      %v794 = vunpack.c.h.b16 %v451
      %v795 = vunpack.c.l.b16 %v452
      %v796 = vunpack.c.h.b16 %v452
      %v797 = vunpack.c.l.b16 %v453
      %v798 = vunpack.c.h.b16 %v453
      %v799 = vunpack.c.l.b16 %v454
      %v800 = vunpack.c.h.b16 %v454
      %v801 = vunpack.c.l.b16 %v455
      %v802 = vunpack.c.h.b16 %v455
      %v803 = vunpack.c.l.b16 %v456
      %v804 = vunpack.c.h.b16 %v456
      %v805 = vunpack.c.l.b16 %v457
      %v806 = vunpack.c.h.b16 %v457
      %v807 = vunpack.c.l.b16 %v458
      %v808 = vunpack.c.h.b16 %v458
      %v809 = vunpack.c.l.b16 %v459
      %v810 = vunpack.c.h.b16 %v459
      %v811 = vunpack.c.l.b16 %v460
      %v812 = vunpack.c.h.b16 %v460
      %v813 = vunpack.c.l.b16 %v461
      %v814 = vunpack.c.h.b16 %v461
      %v815 = vunpack.c.l.b16 %v462
      %v816 = vunpack.c.h.b16 %v462
      %v817 = vunpack.c.l.b16 %v463
      %v818 = vunpack.c.h.b16 %v463
      %v819 = vunpack.c.l.b16 %v464
      %v820 = vunpack.c.h.b16 %v464
      %v821 = vunpack.c.l.b16 %v465
      %v822 = vunpack.c.h.b16 %v465
      %v823 = vunpack.c.l.b16 %v466
      %v824 = vunpack.c.h.b16 %v466
      %v825 = vunpack.c.l.b16 %v467
      %v826 = vunpack.c.h.b16 %v467
      %v827 = vunpack.c.l.b16 %v468
      %v828 = vunpack.c.h.b16 %v468
      %v829 = vunpack.c.l.b16 %v469
      %v830 = vunpack.c.h.b16 %v469
      %v831 = vunpack.c.l.b16 %v470
      %v832 = vunpack.c.h.b16 %v470
      %v833 = vunpack.c.l.b16 %v471
      %v834 = vunpack.c.h.b16 %v471
      %v835 = vunpack.c.l.b16 %v472
      %v836 = vunpack.c.h.b16 %v472
      %v837 = vunpack.c.l.b16 %v473
      %v838 = vunpack.c.h.b16 %v473
      %v839 = vunpack.c.l.b16 %v474
      %v840 = vunpack.c.h.b16 %v474
      %v841 = vunpack.c.l.b16 %v475
      %v842 = vunpack.c.h.b16 %v475
      %v843 = vunpack.c.l.b16 %v476
      %v844 = vunpack.c.h.b16 %v476
      %v845 = vunpack.c.l.b16 %v477
      %v846 = vunpack.c.h.b16 %v477
      %v847 = vunpack.c.l.b16 %v478
      %v848 = vunpack.c.h.b16 %v478
      %v849 = vunpack.c.l.b16 %v479
      %v850 = vunpack.c.h.b16 %v479
      %v851 = vunpack.c.l.b16 %v480
      %v852 = vunpack.c.h.b16 %v480
      %v853 = vunpack.c.l.b16 %v481
      %v854 = vunpack.c.h.b16 %v481
      %v855 = vunpack.c.l.b16 %v482
      %v856 = vunpack.c.h.b16 %v482
      %v857 = vunpack.c.l.b16 %v483
      %v858 = vunpack.c.h.b16 %v483
      %v859 = vunpack.c.l.b16 %v484
      %v860 = vunpack.c.h.b16 %v484
      %v861 = vunpack.c.l.b16 %v485
      %v862 = vunpack.c.h.b16 %v485
      %v863 = vunpack.c.l.b16 %v486
      %v864 = vunpack.c.h.b16 %v486
      %v865 = vunpack.c.l.b16 %v487
      %v866 = vunpack.c.h.b16 %v487
      %v867 = vunpack.c.l.b16 %v488
      %v868 = vunpack.c.h.b16 %v488
      %v869 = vunpack.c.l.b16 %v489
      %v870 = vunpack.c.h.b16 %v489
      %v871 = vunpack.c.l.b16 %v490
      %v872 = vunpack.c.h.b16 %v490
      %v873 = vunpack.c.l.b16 %v491
      %v874 = vunpack.c.h.b16 %v491
      %v875 = vunpack.c.l.b16 %v492
      %v876 = vunpack.c.h.b16 %v492
      %v877 = vpack.c.b16 %v629, %v621
      %v878 = vpack.c.b16 %v630, %v622
      %v879 = vpack.c.b16 %v631, %v623
      %v880 = vpack.c.b16 %v632, %v624
      %v881 = vpack.c.b16 %v633, %v625
      %v882 = vpack.c.b16 %v634, %v626
      %v883 = vpack.c.b16 %v635, %v627
      %v884 = vpack.c.b16 %v636, %v628
      %v885 = vpack.c.b16 %v645, %v637
      %v886 = vpack.c.b16 %v646, %v638
      %v887 = vpack.c.b16 %v647, %v639
      %v888 = vpack.c.b16 %v648, %v640
      %v889 = vpack.c.b16 %v649, %v641
      %v890 = vpack.c.b16 %v650, %v642
      %v891 = vpack.c.b16 %v651, %v643
      %v892 = vpack.c.b16 %v652, %v644
      %v893 = vpack.c.b16 %v661, %v653
      %v894 = vpack.c.b16 %v662, %v654
      %v895 = vpack.c.b16 %v663, %v655
      %v896 = vpack.c.b16 %v664, %v656
      %v897 = vpack.c.b16 %v665, %v657
      %v898 = vpack.c.b16 %v666, %v658
      %v899 = vpack.c.b16 %v667, %v659
      %v900 = vpack.c.b16 %v668, %v660
      %v901 = vpack.c.b16 %v677, %v669
      %v902 = vpack.c.b16 %v678, %v670
      %v903 = vpack.c.b16 %v679, %v671
      %v904 = vpack.c.b16 %v680, %v672
      %v905 = vpack.c.b16 %v681, %v673
      %v906 = vpack.c.b16 %v682, %v674
      %v907 = vpack.c.b16 %v683, %v675
      %v908 = vpack.c.b16 %v684, %v676
      %v909 = vpack.c.b16 %v693, %v685
      %v910 = vpack.c.b16 %v694, %v686
      %v911 = vpack.c.b16 %v695, %v687
      %v912 = vpack.c.b16 %v696, %v688
      %v913 = vpack.c.b16 %v697, %v689
      %v914 = vpack.c.b16 %v698, %v690
      %v915 = vpack.c.b16 %v699, %v691
      %v916 = vpack.c.b16 %v700, %v692
      %v917 = vpack.c.b16 %v709, %v701
      %v918 = vpack.c.b16 %v710, %v702
      %v919 = vpack.c.b16 %v711, %v703
      %v920 = vpack.c.b16 %v712, %v704
      %v921 = vpack.c.b16 %v713, %v705
      %v922 = vpack.c.b16 %v714, %v706
      %v923 = vpack.c.b16 %v715, %v707
      %v924 = vpack.c.b16 %v716, %v708
      %v925 = vpack.c.b16 %v725, %v717
      %v926 = vpack.c.b16 %v726, %v718
      %v927 = vpack.c.b16 %v727, %v719
      %v928 = vpack.c.b16 %v728, %v720
      %v929 = vpack.c.b16 %v729, %v721
      %v930 = vpack.c.b16 %v730, %v722
      %v931 = vpack.c.b16 %v731, %v723
      %v932 = vpack.c.b16 %v732, %v724
      %v933 = vpack.c.b16 %v741, %v733
      %v934 = vpack.c.b16 %v742, %v734
      %v935 = vpack.c.b16 %v743, %v735
      %v936 = vpack.c.b16 %v744, %v736
      %v937 = vpack.c.b16 %v745, %v737
      %v938 = vpack.c.b16 %v746, %v738
      %v939 = vpack.c.b16 %v747, %v739
      %v940 = vpack.c.b16 %v748, %v740
      %v941 = vpack.c.b16 %v757, %v749
      %v942 = vpack.c.b16 %v758, %v750
      %v943 = vpack.c.b16 %v759, %v751
      %v944 = vpack.c.b16 %v760, %v752
      %v945 = vpack.c.b16 %v761, %v753
      %v946 = vpack.c.b16 %v762, %v754
      %v947 = vpack.c.b16 %v763, %v755
      %v948 = vpack.c.b16 %v764, %v756
      %v949 = vpack.c.b16 %v773, %v765
      %v950 = vpack.c.b16 %v774, %v766
      %v951 = vpack.c.b16 %v775, %v767
      %v952 = vpack.c.b16 %v776, %v768
      %v953 = vpack.c.b16 %v777, %v769
      %v954 = vpack.c.b16 %v778, %v770
      %v955 = vpack.c.b16 %v779, %v771
      %v956 = vpack.c.b16 %v780, %v772
      %v957 = vpack.c.b16 %v789, %v781
      %v958 = vpack.c.b16 %v790, %v782
      %v959 = vpack.c.b16 %v791, %v783
      %v960 = vpack.c.b16 %v792, %v784
      %v961 = vpack.c.b16 %v793, %v785
      %v962 = vpack.c.b16 %v794, %v786
      %v963 = vpack.c.b16 %v795, %v787
      %v964 = vpack.c.b16 %v796, %v788
      %v965 = vpack.c.b16 %v805, %v797
      %v966 = vpack.c.b16 %v806, %v798
      %v967 = vpack.c.b16 %v807, %v799
      %v968 = vpack.c.b16 %v808, %v800
      %v969 = vpack.c.b16 %v809, %v801
      %v970 = vpack.c.b16 %v810, %v802
      %v971 = vpack.c.b16 %v811, %v803
      %v972 = vpack.c.b16 %v812, %v804
      %v973 = vpack.c.b16 %v821, %v813
      %v974 = vpack.c.b16 %v822, %v814
      %v975 = vpack.c.b16 %v823, %v815
      %v976 = vpack.c.b16 %v824, %v816
      %v977 = vpack.c.b16 %v825, %v817
      %v978 = vpack.c.b16 %v826, %v818
      %v979 = vpack.c.b16 %v827, %v819
      %v980 = vpack.c.b16 %v828, %v820
      %v981 = vpack.c.b16 %v837, %v829
      %v982 = vpack.c.b16 %v838, %v830
      %v983 = vpack.c.b16 %v839, %v831
      %v984 = vpack.c.b16 %v840, %v832
      %v985 = vpack.c.b16 %v841, %v833
      %v986 = vpack.c.b16 %v842, %v834
      %v987 = vpack.c.b16 %v843, %v835
      %v988 = vpack.c.b16 %v844, %v836
      %v989 = vpack.c.b16 %v853, %v845
      %v990 = vpack.c.b16 %v854, %v846
      %v991 = vpack.c.b16 %v855, %v847
      %v992 = vpack.c.b16 %v856, %v848
      %v993 = vpack.c.b16 %v857, %v849
      %v994 = vpack.c.b16 %v858, %v850
      %v995 = vpack.c.b16 %v859, %v851
      %v996 = vpack.c.b16 %v860, %v852
      %v997 = vpack.c.b16 %v869, %v861
      %v998 = vpack.c.b16 %v870, %v862
      %v999 = vpack.c.b16 %v871, %v863
      %v1000 = vpack.c.b16 %v872, %v864
      %v1001 = vpack.c.b16 %v873, %v865
      %v1002 = vpack.c.b16 %v874, %v866
      %v1003 = vpack.c.b16 %v875, %v867
      %v1004 = vpack.c.b16 %v876, %v868
      %1133 = vmatpush.bf16.msra.mxu0 %v933
      %1134 = vmatpush.bf16.msra.mxu0 %v925
      %1135 = vmatpush.bf16.msra.mxu0 %v917
      %1136 = vmatpush.bf16.msra.mxu0 %v909
      %1137 = vmatpush.bf16.msra.mxu0 %v901
      %1138 = vmatpush.bf16.msra.mxu0 %v893
      %1139 = vmatpush.bf16.msra.mxu0 %v885
      %1140 = vmatpush.bf16.msra.mxu0 %v877
      %1141 = vmatmul.bf16.gmra.mxu0 %v363
      %v1142 = vpop.f32.mrf.mxu0
      %v1143 = vadd.f32 0.0, %v1142
      %v1144 = vpop.f32.mrf.mxu0
      %v1145 = vadd.f32 0.0, %v1144
      %1146 = vdwg.mxu0
      %1147 = vmatpush.bf16.msra.mxu0 %v997
      %1148 = vmatpush.bf16.msra.mxu0 %v989
      %1149 = vmatpush.bf16.msra.mxu0 %v981
      %1150 = vmatpush.bf16.msra.mxu0 %v973
      %1151 = vmatpush.bf16.msra.mxu0 %v965
      %1152 = vmatpush.bf16.msra.mxu0 %v957
      %1153 = vmatpush.bf16.msra.mxu0 %v949
      %1154 = vmatpush.bf16.msra.mxu0 %v941
      %1155 = vmatmul.bf16.gmra.mxu0 %v364
      %v1156 = vpop.f32.mrf.mxu0
      %v1157 = vadd.f32 %v1143, %v1156
      %v1158 = vpop.f32.mrf.mxu0
      %v1159 = vadd.f32 %v1145, %v1158
      %1160 = vdwg.mxu0
      %1161 = vmatpush.bf16.msra.mxu0 %v934
      %1162 = vmatpush.bf16.msra.mxu0 %v926
      %1163 = vmatpush.bf16.msra.mxu0 %v918
      %1164 = vmatpush.bf16.msra.mxu0 %v910
      %1165 = vmatpush.bf16.msra.mxu0 %v902
      %1166 = vmatpush.bf16.msra.mxu0 %v894
      %1167 = vmatpush.bf16.msra.mxu0 %v886
      %1168 = vmatpush.bf16.msra.mxu0 %v878
      %1169 = vmatmul.bf16.gmra.mxu0 %v363
      %v1170 = vpop.f32.mrf.mxu0
      %v1171 = vadd.f32 0.0, %v1170
      %v1172 = vpop.f32.mrf.mxu0
      %v1173 = vadd.f32 0.0, %v1172
      %1174 = vdwg.mxu0
      %1175 = vmatpush.bf16.msra.mxu0 %v998
      %1176 = vmatpush.bf16.msra.mxu0 %v990
      %1177 = vmatpush.bf16.msra.mxu0 %v982
      %1178 = vmatpush.bf16.msra.mxu0 %v974
      %1179 = vmatpush.bf16.msra.mxu0 %v966
      %1180 = vmatpush.bf16.msra.mxu0 %v958
      %1181 = vmatpush.bf16.msra.mxu0 %v950
      %1182 = vmatpush.bf16.msra.mxu0 %v942
      %1183 = vmatmul.bf16.gmra.mxu0 %v364
      %v1184 = vpop.f32.mrf.mxu0
      %v1185 = vadd.f32 %v1171, %v1184
      %v1186 = vpop.f32.mrf.mxu0
      %v1187 = vadd.f32 %v1173, %v1186
      %1188 = vdwg.mxu0
      %1189 = vmatpush.bf16.msra.mxu0 %v935
      %1190 = vmatpush.bf16.msra.mxu0 %v927
      %1191 = vmatpush.bf16.msra.mxu0 %v919
      %1192 = vmatpush.bf16.msra.mxu0 %v911
      %1193 = vmatpush.bf16.msra.mxu0 %v903
      %1194 = vmatpush.bf16.msra.mxu0 %v895
      %1195 = vmatpush.bf16.msra.mxu0 %v887
      %1196 = vmatpush.bf16.msra.mxu0 %v879
      %1197 = vmatmul.bf16.gmra.mxu0 %v363
      %v1198 = vpop.f32.mrf.mxu0
      %v1199 = vadd.f32 0.0, %v1198
      %v1200 = vpop.f32.mrf.mxu0
      %v1201 = vadd.f32 0.0, %v1200
      %1202 = vdwg.mxu0
      %1203 = vmatpush.bf16.msra.mxu0 %v999
      %1204 = vmatpush.bf16.msra.mxu0 %v991
      %1205 = vmatpush.bf16.msra.mxu0 %v983
      %1206 = vmatpush.bf16.msra.mxu0 %v975
      %1207 = vmatpush.bf16.msra.mxu0 %v967
      %1208 = vmatpush.bf16.msra.mxu0 %v959
      %1209 = vmatpush.bf16.msra.mxu0 %v951
      %1210 = vmatpush.bf16.msra.mxu0 %v943
      %1211 = vmatmul.bf16.gmra.mxu0 %v364
      %v1212 = vpop.f32.mrf.mxu0
      %v1213 = vadd.f32 %v1199, %v1212
      %v1214 = vpop.f32.mrf.mxu0
      %v1215 = vadd.f32 %v1201, %v1214
      %1216 = vdwg.mxu0
      %1217 = vmatpush.bf16.msra.mxu0 %v936
      %1218 = vmatpush.bf16.msra.mxu0 %v928
      %1219 = vmatpush.bf16.msra.mxu0 %v920
      %1220 = vmatpush.bf16.msra.mxu0 %v912
      %1221 = vmatpush.bf16.msra.mxu0 %v904
      %1222 = vmatpush.bf16.msra.mxu0 %v896
      %1223 = vmatpush.bf16.msra.mxu0 %v888
      %1224 = vmatpush.bf16.msra.mxu0 %v880
      %1225 = vmatmul.bf16.gmra.mxu0 %v363
      %v1226 = vpop.f32.mrf.mxu0
      %v1227 = vadd.f32 0.0, %v1226
      %v1228 = vpop.f32.mrf.mxu0
      %v1229 = vadd.f32 0.0, %v1228
      %1230 = vdwg.mxu0
      %1231 = vmatpush.bf16.msra.mxu0 %v1000
      %1232 = vmatpush.bf16.msra.mxu0 %v992
      %1233 = vmatpush.bf16.msra.mxu0 %v984
      %1234 = vmatpush.bf16.msra.mxu0 %v976
      %1235 = vmatpush.bf16.msra.mxu0 %v968
      %1236 = vmatpush.bf16.msra.mxu0 %v960
      %1237 = vmatpush.bf16.msra.mxu0 %v952
      %1238 = vmatpush.bf16.msra.mxu0 %v944
      %1239 = vmatmul.bf16.gmra.mxu0 %v364
      %v1240 = vpop.f32.mrf.mxu0
      %v1241 = vadd.f32 %v1227, %v1240
      %v1242 = vpop.f32.mrf.mxu0
      %v1243 = vadd.f32 %v1229, %v1242
      %1244 = vdwg.mxu0
      %1245 = vmatpush.bf16.msra.mxu0 %v937
      %1246 = vmatpush.bf16.msra.mxu0 %v929
      %1247 = vmatpush.bf16.msra.mxu0 %v921
      %1248 = vmatpush.bf16.msra.mxu0 %v913
      %1249 = vmatpush.bf16.msra.mxu0 %v905
      %1250 = vmatpush.bf16.msra.mxu0 %v897
      %1251 = vmatpush.bf16.msra.mxu0 %v889
      %1252 = vmatpush.bf16.msra.mxu0 %v881
      %1253 = vmatmul.bf16.gmra.mxu0 %v363
      %v1254 = vpop.f32.mrf.mxu0
      %v1255 = vadd.f32 0.0, %v1254
      %v1256 = vpop.f32.mrf.mxu0
      %v1257 = vadd.f32 0.0, %v1256
      %1258 = vdwg.mxu0
      %1259 = vmatpush.bf16.msra.mxu0 %v1001
      %1260 = vmatpush.bf16.msra.mxu0 %v993
      %1261 = vmatpush.bf16.msra.mxu0 %v985
      %1262 = vmatpush.bf16.msra.mxu0 %v977
      %1263 = vmatpush.bf16.msra.mxu0 %v969
      %1264 = vmatpush.bf16.msra.mxu0 %v961
      %1265 = vmatpush.bf16.msra.mxu0 %v953
      %1266 = vmatpush.bf16.msra.mxu0 %v945
      %1267 = vmatmul.bf16.gmra.mxu0 %v364
      %v1268 = vpop.f32.mrf.mxu0
      %v1269 = vadd.f32 %v1255, %v1268
      %v1270 = vpop.f32.mrf.mxu0
      %v1271 = vadd.f32 %v1257, %v1270
      %1272 = vdwg.mxu0
      %1273 = vmatpush.bf16.msra.mxu0 %v938
      %1274 = vmatpush.bf16.msra.mxu0 %v930
      %1275 = vmatpush.bf16.msra.mxu0 %v922
      %1276 = vmatpush.bf16.msra.mxu0 %v914
      %1277 = vmatpush.bf16.msra.mxu0 %v906
      %1278 = vmatpush.bf16.msra.mxu0 %v898
      %1279 = vmatpush.bf16.msra.mxu0 %v890
      %1280 = vmatpush.bf16.msra.mxu0 %v882
      %1281 = vmatmul.bf16.gmra.mxu0 %v363
      %v1282 = vpop.f32.mrf.mxu0
      %v1283 = vadd.f32 0.0, %v1282
      %v1284 = vpop.f32.mrf.mxu0
      %v1285 = vadd.f32 0.0, %v1284
      %1286 = vdwg.mxu0
      %1287 = vmatpush.bf16.msra.mxu0 %v1002
      %1288 = vmatpush.bf16.msra.mxu0 %v994
      %1289 = vmatpush.bf16.msra.mxu0 %v986
      %1290 = vmatpush.bf16.msra.mxu0 %v978
      %1291 = vmatpush.bf16.msra.mxu0 %v970
      %1292 = vmatpush.bf16.msra.mxu0 %v962
      %1293 = vmatpush.bf16.msra.mxu0 %v954
      %1294 = vmatpush.bf16.msra.mxu0 %v946
      %1295 = vmatmul.bf16.gmra.mxu0 %v364
      %v1296 = vpop.f32.mrf.mxu0
      %v1297 = vadd.f32 %v1283, %v1296
      %v1298 = vpop.f32.mrf.mxu0
      %v1299 = vadd.f32 %v1285, %v1298
      %1300 = vdwg.mxu0
      %1301 = vmatpush.bf16.msra.mxu0 %v939
      %1302 = vmatpush.bf16.msra.mxu0 %v931
      %1303 = vmatpush.bf16.msra.mxu0 %v923
      %1304 = vmatpush.bf16.msra.mxu0 %v915
      %1305 = vmatpush.bf16.msra.mxu0 %v907
      %1306 = vmatpush.bf16.msra.mxu0 %v899
      %1307 = vmatpush.bf16.msra.mxu0 %v891
      %1308 = vmatpush.bf16.msra.mxu0 %v883
      %1309 = vmatmul.bf16.gmra.mxu0 %v363
      %v1310 = vpop.f32.mrf.mxu0
      %v1311 = vadd.f32 0.0, %v1310
      %v1312 = vpop.f32.mrf.mxu0
      %v1313 = vadd.f32 0.0, %v1312
      %1314 = vdwg.mxu0
      %1315 = vmatpush.bf16.msra.mxu0 %v1003
      %1316 = vmatpush.bf16.msra.mxu0 %v995
      %1317 = vmatpush.bf16.msra.mxu0 %v987
      %1318 = vmatpush.bf16.msra.mxu0 %v979
      %1319 = vmatpush.bf16.msra.mxu0 %v971
      %1320 = vmatpush.bf16.msra.mxu0 %v963
      %1321 = vmatpush.bf16.msra.mxu0 %v955
      %1322 = vmatpush.bf16.msra.mxu0 %v947
      %1323 = vmatmul.bf16.gmra.mxu0 %v364
      %v1324 = vpop.f32.mrf.mxu0
      %v1325 = vadd.f32 %v1311, %v1324
      %v1326 = vpop.f32.mrf.mxu0
      %v1327 = vadd.f32 %v1313, %v1326
      %1328 = vdwg.mxu0
      %1329 = vmatpush.bf16.msra.mxu0 %v940
      %1330 = vmatpush.bf16.msra.mxu0 %v932
      %1331 = vmatpush.bf16.msra.mxu0 %v924
      %1332 = vmatpush.bf16.msra.mxu0 %v916
      %1333 = vmatpush.bf16.msra.mxu0 %v908
      %1334 = vmatpush.bf16.msra.mxu0 %v900
      %1335 = vmatpush.bf16.msra.mxu0 %v892
      %1336 = vmatpush.bf16.msra.mxu0 %v884
      %1337 = vmatmul.bf16.gmra.mxu0 %v363
      %v1338 = vpop.f32.mrf.mxu0
      %v1339 = vadd.f32 0.0, %v1338
      %v1340 = vpop.f32.mrf.mxu0
      %v1341 = vadd.f32 0.0, %v1340
      %1342 = vdwg.mxu0
      %1343 = vmatpush.bf16.msra.mxu0 %v1004
      %1344 = vmatpush.bf16.msra.mxu0 %v996
      %1345 = vmatpush.bf16.msra.mxu0 %v988
      %1346 = vmatpush.bf16.msra.mxu0 %v980
      %1347 = vmatpush.bf16.msra.mxu0 %v972
      %1348 = vmatpush.bf16.msra.mxu0 %v964
      %1349 = vmatpush.bf16.msra.mxu0 %v956
      %1350 = vmatpush.bf16.msra.mxu0 %v948
      %1351 = vmatmul.bf16.gmra.mxu0 %v364
      %v1352 = vpop.f32.mrf.mxu0
      %v1353 = vadd.f32 %v1339, %v1352
      %v1354 = vpop.f32.mrf.mxu0
      %v1355 = vadd.f32 %v1341, %v1354
      %1356 = vdwg.mxu0
      %1357 = vst [vmem:[%s244] sm:$0xff] %v1157
      %1358 = vst [vmem:[%s244 + $0x8] sm:$0xff] %v1185
      %1359 = vst [vmem:[%s244 + $0x10] sm:$0xff] %v1213
      %1360 = vst [vmem:[%s244 + $0x18] sm:$0xff] %v1241
      %1361 = vst [vmem:[%s244 + $0x20] sm:$0xff] %v1269
      %1362 = vst [vmem:[%s244 + $0x28] sm:$0xff] %v1297
      %1363 = vst [vmem:[%s244 + $0x30] sm:$0xff] %v1325
      %1364 = vst [vmem:[%s244 + $0x38] sm:$0xff] %v1353
      %1365 = vst [vmem:[%s244 + $0x40] sm:$0xf] %v1159
      %1366 = vst [vmem:[%s244 + $0x48] sm:$0xf] %v1187
      %1367 = vst [vmem:[%s244 + $0x50] sm:$0xf] %v1215
      %1368 = vst [vmem:[%s244 + $0x58] sm:$0xf] %v1243
      %1369 = vst [vmem:[%s244 + $0x60] sm:$0xf] %v1271
      %1370 = vst [vmem:[%s244 + $0x68] sm:$0xf] %v1299
      %1371 = vst [vmem:[%s244 + $0x70] sm:$0xf] %v1327
      %1372 = vst [vmem:[%s244 + $0x78] sm:$0xf] %v1355
      %p1373 = scmp.lt.s32.totalorder %s16, 1
      %s1374 = scalar_select %p1373, %s16, 1
      %s1375 = smul.addr %s1374, 16
      %s1376 = smul.addr %s1375, 8
      %s1377 = scalar_lea.vmem %s5, %s1376
      // Predicated region
      $region41: #{vision_transformer_forward.2} parent=39 // pred_check
        %p1378 = pneg %p149
      $region42: #{vision_transformer_forward.2} parent=39 // pred_check_branch
        %1380 = sbr.rel (%p1378) target = $region44
      $region43: #{vision_transformer_forward.2} parent=39 // pred_region
        _
      $region44: #{vision_transformer_forward.2} parent=39 // pred_fallthru
        _
    $region40: #{vision_transformer_forward.2} parent=5 // pred_fallthru
      _
    %p1381 = scmp.le.s32.totalorder 2, %s11
    // Predicated region
    $region45: #{vision_transformer_forward.2} parent=5 // pred_check
      %p1382 = pneg %p1381
    $region46: #{vision_transformer_forward.2} parent=5 // pred_check_branch
      %1384 = sbr.rel (%p1382) target = $region48
    $region47: #{vision_transformer_forward.2} parent=5 // pred_region
      %s1385 = ssub.s32 %s11, 2
      // Predicated region
      $region49: #{vision_transformer_forward.2} parent=47 // pred_check
        %p1386 = pneg %p155
      $region50: #{vision_transformer_forward.2} parent=47 // pred_check_branch
        %1388 = sbr.rel (%p1386) target = $region52
      $region51: #{vision_transformer_forward.2} parent=47 // pred_region
        %p1389 = scmp.lt.s32.totalorder %s17, 1
        %s1390 = scalar_select %p1389, %s17, 1
        %s1391 = smul.addr %s1390, 16
        %s1392 = smul.addr %s1391, 8
        %s1393 = scalar_lea.vmem %s5, %s1392
      $region52: #{vision_transformer_forward.2} parent=47 // pred_fallthru
        _
    $region48: #{vision_transformer_forward.2} parent=5 // pred_fallthru
      _
  $region6: #{vision_transformer_forward.2} parent=0 // loop_footer
    %s15 = sadd.s32 1, %s11
  $region7: #{vision_transformer_forward.2} parent=0 // loop_footer_branch
    %10 = sbr.rel target = $region3
  $region8: #{vision_transformer_forward.2} parent=0 // loop_exit
    _

// kernel: vision_transformer_forward.3
$region0: #{vision_transformer_forward.3}
  #allocation0 [shape = 'u32[]', space=smem, size = 0x4, offset = 0x4, fixed_abs, tag = 'smem constant byte address 0x4 - core index']
  #allocation1 [shape = 'u32[72,128]{1,0:T(1,128)}', space=vmem, size = 0x9000, scoped, tag = 'internal scratch']
  %s0 = inlined_call_operand.smem [shape: u32[36], index: -1, kind: input, shape index: {}]
  %s1 = sld [smem:[%s0]]
  %s2 = scalar_lea.smem %s0, 1
  %s3 = sld [smem:[%s2]]
  %s4 = scalar_lea.smem %s0, 2
  %s5 = sld [smem:[%s4]]
  %s6 = scalar_lea.smem %s0, 3
  %s7 = sld [smem:[%s6]]
  %s8 = scalar_lea.smem %s0, 4
  %s9 = sld [smem:[%s8]]
  %s10 = scalar_lea.smem %s0, 5
  %s11 = sld [smem:[%s10]]
  %s12 = scalar_lea.smem %s0, 6
  %s13 = sld [smem:[%s12]]
  %s14 = scalar_lea.smem %s0, 7
  %s15 = sld [smem:[%s14]]
  %s16 = scalar_lea.smem %s0, 8
  %s17 = sld [smem:[%s16]]
  %s18 = scalar_lea.smem %s0, 9
  %s19 = sld [smem:[%s18]]
  %s20 = scalar_lea.smem %s0, 10
  %s21 = sld [smem:[%s20]]
  %s22 = scalar_lea.smem %s0, 11
  %s23 = sld [smem:[%s22]]
  %s24 = scalar_lea.smem %s0, 12
  %s25 = sld [smem:[%s24]]
  %s26 = scalar_lea.smem %s0, 13
  %s27 = sld [smem:[%s26]]
  %s28 = scalar_lea.smem %s0, 14
  %s29 = sld [smem:[%s28]]
  %s30 = scalar_lea.smem %s0, 15
  %s31 = sld [smem:[%s30]]
  %s32 = scalar_lea.smem %s0, 16
  %s33 = sld [smem:[%s32]]
  %s34 = scalar_lea.smem %s0, 17
  %s35 = sld [smem:[%s34]]
  %s36 = scalar_lea.smem %s0, 18
  %s37 = sld [smem:[%s36]]
  %s38 = scalar_lea.smem %s0, 19
  %s39 = sld [smem:[%s38]]
  %s40 = scalar_lea.smem %s0, 20
  %s41 = sld [smem:[%s40]]
  %s42 = scalar_lea.smem %s0, 21
  %s43 = sld [smem:[%s42]]
  %s44 = scalar_lea.smem %s0, 22
  %s45 = sld [smem:[%s44]]
  %s46 = scalar_lea.smem %s0, 23
  %s47 = sld [smem:[%s46]]
  %s48 = scalar_lea.smem %s0, 24
  %s49 = sld [smem:[%s48]]
  %s50 = scalar_lea.smem %s0, 25
  %s51 = sld [smem:[%s50]]
  %s52 = scalar_lea.smem %s0, 26
  %s53 = sld [smem:[%s52]]
  %s54 = scalar_lea.smem %s0, 27
  %s55 = sld [smem:[%s54]]
  %s56 = scalar_lea.smem %s0, 28
  %s57 = sld [smem:[%s56]]
  %s58 = scalar_lea.smem %s0, 29
  %s59 = sld [smem:[%s58]]
  %s60 = scalar_lea.smem %s0, 30
  %s61 = sld [smem:[%s60]]
  %s62 = scalar_lea.smem %s0, 31
  %s63 = sld [smem:[%s62]]
  %s64 = scalar_lea.smem %s0, 32
  %s65 = sld [smem:[%s64]]
  %s66 = scalar_lea.smem %s0, 33
  %s67 = sld [smem:[%s66]]
  %s68 = scalar_lea.smem %s0, 34
  %s69 = sld [smem:[%s68]]
  %s70 = scalar_lea.smem %s0, 35
  %s71 = sld [smem:[%s70]]
  %s72 = sld [smem:[#allocation0]]
  $region173: #{vision_transformer_forward.3} parent=0
    _
  %s74 = ssub.s32 1, %s72
  %s75 = scalar_select 0, %s74, %s72
  loop: start=0, step=1, limit=4
  $region2: #{vision_transformer_forward.3} parent=0 // loop_pre_header
    _
  $region3: #{vision_transformer_forward.3} parent=0 // loop_header
    %s77 = sphi 0, %s81
    %p78 = scmp.ge.s32.totalorder %s77, 4
    %s87 = sphi 0, %s89
    %s90 = sphi 0, %s87
    %s91 = sphi 0, %s90
    %s107 = sphi 0, %s91
    %s111 = sphi 0, %s111
    %s113 = sphi 0, %s111
    %s114 = sphi 0, %s113
    %s128 = sphi 0, %s114
    %s132 = sphi 0, %s132
    %s134 = sphi 0, %s132
    %s135 = sphi 0, %s134
    %s149 = sphi 0, %s135
    %s153 = sphi 0, %s153
    %s155 = sphi 0, %s153
    %s156 = sphi 0, %s155
    %s170 = sphi 0, %s156
    %s174 = sphi 0, %s174
    %s176 = sphi 0, %s174
    %s177 = sphi 0, %s176
    %s191 = sphi 0, %s177
    %s195 = sphi 0, %s195
    %s197 = sphi 0, %s195
    %s198 = sphi 0, %s197
    %s212 = sphi 0, %s198
    %s216 = sphi 0, %s216
    %s218 = sphi 0, %s216
    %s219 = sphi 0, %s218
    %s233 = sphi 0, %s219
    %s237 = sphi 0, %s237
    %s239 = sphi 0, %s237
    %s240 = sphi 0, %s239
    %s254 = sphi 0, %s240
    %s258 = sphi 0, %s258
    %s260 = sphi 0, %s258
    %s261 = sphi 0, %s260
    %s275 = sphi 0, %s261
    %s279 = sphi 0, %s279
    %s281 = sphi 0, %s279
    %s282 = sphi 0, %s281
    %s296 = sphi 0, %s282
    %s300 = sphi 0, %s300
    %s302 = sphi 0, %s300
    %s303 = sphi 0, %s302
    %s317 = sphi 0, %s303
    %s321 = sphi 0, %s321
    %s323 = sphi 0, %s321
    %s324 = sphi 0, %s323
    %s338 = sphi 0, %s324
    %s342 = sphi 0, %s342
    %s344 = sphi 0, %s342
    %s345 = sphi 0, %s344
    %s359 = sphi 0, %s345
    %s363 = sphi 0, %s363
    %s365 = sphi 0, %s363
    %s366 = sphi 0, %s365
    %s380 = sphi 0, %s366
    %s384 = sphi 0, %s384
    %s386 = sphi 0, %s384
    %s387 = sphi 0, %s386
    %s401 = sphi 0, %s387
    %s405 = sphi 0, %s405
    %s407 = sphi 0, %s405
    %s408 = sphi 0, %s407
    %s422 = sphi 0, %s408
    %s426 = sphi 0, %s426
    %s428 = sphi 0, %s426
    %s429 = sphi 0, %s428
    %s443 = sphi 0, %s429
    %s447 = sphi 0, %s447
    %s449 = sphi 0, %s447
    %s450 = sphi 0, %s449
    %s464 = sphi 0, %s450
    %s468 = sphi 0, %s468
    %s470 = sphi 0, %s468
    %s471 = sphi 0, %s470
    %s485 = sphi 0, %s471
    %s489 = sphi 0, %s489
    %s491 = sphi 0, %s489
    %s492 = sphi 0, %s491
    %s506 = sphi 0, %s492
    %s510 = sphi 0, %s510
    %s512 = sphi 0, %s510
    %s513 = sphi 0, %s512
    %s527 = sphi 0, %s513
    %s531 = sphi 0, %s531
    %s533 = sphi 0, %s531
    %s534 = sphi 0, %s533
    %s548 = sphi 0, %s534
    %s552 = sphi 0, %s552
    %s554 = sphi 0, %s552
    %s555 = sphi 0, %s554
    %s569 = sphi 0, %s555
    %s573 = sphi 0, %s573
    %s575 = sphi 0, %s573
    %s576 = sphi 0, %s575
    %s590 = sphi 0, %s576
    %s594 = sphi 0, %s594
    %s596 = sphi 0, %s594
    %s597 = sphi 0, %s596
    %s611 = sphi 0, %s597
    %s615 = sphi 0, %s615
    %s617 = sphi 0, %s615
    %s618 = sphi 0, %s617
    %s632 = sphi 0, %s618
    %s636 = sphi 0, %s636
    %s638 = sphi 0, %s636
    %s639 = sphi 0, %s638
    %s653 = sphi 0, %s639
    %s657 = sphi 0, %s657
    %s659 = sphi 0, %s657
    %s660 = sphi 0, %s659
    %s674 = sphi 0, %s660
    %s678 = sphi 0, %s678
    %s680 = sphi 0, %s678
    %s681 = sphi 0, %s680
    %s695 = sphi 0, %s681
    %s699 = sphi 0, %s699
    %s701 = sphi 0, %s699
    %s702 = sphi 0, %s701
    %s716 = sphi 0, %s702
    %s720 = sphi 0, %s720
    %s722 = sphi 0, %s720
    %s723 = sphi 0, %s722
    %s737 = sphi 0, %s723
    %s741 = sphi 0, %s741
    %s743 = sphi 0, %s741
    %s744 = sphi 0, %s743
    %s758 = sphi 0, %s744
    %s762 = sphi 0, %s762
    %s764 = sphi 0, %s762
    %s765 = sphi 0, %s764
    %s779 = sphi 0, %s765
    %s783 = sphi 0, %s783
    %s785 = sphi 0, %s783
    %s786 = sphi 0, %s785
    %s800 = sphi 0, %s786
    %s804 = sphi 0, %s804
    %s806 = sphi 0, %s804
    %s807 = sphi 0, %s806
    %s821 = sphi 0, %s807
    %s827 = sphi 0, %s829
    %s830 = sphi 0, %s827
    %s831 = sphi 0, %s830
    %s847 = sphi 0, %s831
  $region4: #{vision_transformer_forward.3} parent=0 // loop_header_branch
    %80 = sbr.rel (%p78) target = $region8
  $region5: #{vision_transformer_forward.3} parent=0 // loop_body
    %s82 = ssub.s32 %s77, 1
    %s83 = ssub.s32 %s77, 2
    %s84 = sadd.s32 %s77, 1
    %s85 = ssub.s32 %s77, %s84
    %p86 = scmp.eq.s32.totalorder %s85, 0
    %s88 = sadd.s32 %s87, 1
    %s89 = scalar_select %p86, %s87, %s88
    %p92 = pneg %p86
    %p93 = scmp.eq.s32.totalorder %s77, 1
    %p94 = por %p92, %p93
    %p95 = scmp.ne.s32.totalorder %s87, %s90
    %p96 = scmp.eq.s32.totalorder %s77, 0
    %p97 = por %p95, %p96
    %p98 = scmp.ne.s32.totalorder %s87, %s90
    %p99 = scmp.eq.s32.totalorder %s82, 1
    %p100 = por %p98, %p99
    %p101 = scmp.ne.s32.totalorder %s90, %s91
    %p102 = scmp.eq.s32.totalorder %s82, 0
    %p103 = por %p101, %p102
    %p104 = scmp.ne.s32.totalorder %s90, %s91
    %p105 = scmp.eq.s32.totalorder %s83, 1
    %p106 = por %p104, %p105
    %p108 = scmp.ne.s32.totalorder %s91, %s107
    %p109 = scmp.eq.s32.totalorder %s83, 0
    %p110 = por %p108, %p109
    %s112 = sadd.s32 %s111, 1
    %p115 = scmp.eq.s32.totalorder %s77, 1
    %p116 = scmp.ne.s32.totalorder %s111, %s113
    %p117 = scmp.eq.s32.totalorder %s77, 0
    %p118 = por %p116, %p117
    %p119 = scmp.ne.s32.totalorder %s111, %s113
    %p120 = scmp.eq.s32.totalorder %s82, 1
    %p121 = por %p119, %p120
    %p122 = scmp.ne.s32.totalorder %s113, %s114
    %p123 = scmp.eq.s32.totalorder %s82, 0
    %p124 = por %p122, %p123
    %p125 = scmp.ne.s32.totalorder %s113, %s114
    %p126 = scmp.eq.s32.totalorder %s83, 1
    %p127 = por %p125, %p126
    %p129 = scmp.ne.s32.totalorder %s114, %s128
    %p130 = scmp.eq.s32.totalorder %s83, 0
    %p131 = por %p129, %p130
    %s133 = sadd.s32 %s132, 1
    %p136 = scmp.eq.s32.totalorder %s77, 1
    %p137 = scmp.ne.s32.totalorder %s132, %s134
    %p138 = scmp.eq.s32.totalorder %s77, 0
    %p139 = por %p137, %p138
    %p140 = scmp.ne.s32.totalorder %s132, %s134
    %p141 = scmp.eq.s32.totalorder %s82, 1
    %p142 = por %p140, %p141
    %p143 = scmp.ne.s32.totalorder %s134, %s135
    %p144 = scmp.eq.s32.totalorder %s82, 0
    %p145 = por %p143, %p144
    %p146 = scmp.ne.s32.totalorder %s134, %s135
    %p147 = scmp.eq.s32.totalorder %s83, 1
    %p148 = por %p146, %p147
    %p150 = scmp.ne.s32.totalorder %s135, %s149
    %p151 = scmp.eq.s32.totalorder %s83, 0
    %p152 = por %p150, %p151
    %s154 = sadd.s32 %s153, 1
    %p157 = scmp.eq.s32.totalorder %s77, 1
    %p158 = scmp.ne.s32.totalorder %s153, %s155
    %p159 = scmp.eq.s32.totalorder %s77, 0
    %p160 = por %p158, %p159
    %p161 = scmp.ne.s32.totalorder %s153, %s155
    %p162 = scmp.eq.s32.totalorder %s82, 1
    %p163 = por %p161, %p162
    %p164 = scmp.ne.s32.totalorder %s155, %s156
    %p165 = scmp.eq.s32.totalorder %s82, 0
    %p166 = por %p164, %p165
    %p167 = scmp.ne.s32.totalorder %s155, %s156
    %p168 = scmp.eq.s32.totalorder %s83, 1
    %p169 = por %p167, %p168
    %p171 = scmp.ne.s32.totalorder %s156, %s170
    %p172 = scmp.eq.s32.totalorder %s83, 0
    %p173 = por %p171, %p172
    %s175 = sadd.s32 %s174, 1
    %p178 = scmp.eq.s32.totalorder %s77, 1
    %p179 = scmp.ne.s32.totalorder %s174, %s176
    %p180 = scmp.eq.s32.totalorder %s77, 0
    %p181 = por %p179, %p180
    %p182 = scmp.ne.s32.totalorder %s174, %s176
    %p183 = scmp.eq.s32.totalorder %s82, 1
    %p184 = por %p182, %p183
    %p185 = scmp.ne.s32.totalorder %s176, %s177
    %p186 = scmp.eq.s32.totalorder %s82, 0
    %p187 = por %p185, %p186
    %p188 = scmp.ne.s32.totalorder %s176, %s177
    %p189 = scmp.eq.s32.totalorder %s83, 1
    %p190 = por %p188, %p189
    %p192 = scmp.ne.s32.totalorder %s177, %s191
    %p193 = scmp.eq.s32.totalorder %s83, 0
    %p194 = por %p192, %p193
    %s196 = sadd.s32 %s195, 1
    %p199 = scmp.eq.s32.totalorder %s77, 1
    %p200 = scmp.ne.s32.totalorder %s195, %s197
    %p201 = scmp.eq.s32.totalorder %s77, 0
    %p202 = por %p200, %p201
    %p203 = scmp.ne.s32.totalorder %s195, %s197
    %p204 = scmp.eq.s32.totalorder %s82, 1
    %p205 = por %p203, %p204
    %p206 = scmp.ne.s32.totalorder %s197, %s198
    %p207 = scmp.eq.s32.totalorder %s82, 0
    %p208 = por %p206, %p207
    %p209 = scmp.ne.s32.totalorder %s197, %s198
    %p210 = scmp.eq.s32.totalorder %s83, 1
    %p211 = por %p209, %p210
    %p213 = scmp.ne.s32.totalorder %s198, %s212
    %p214 = scmp.eq.s32.totalorder %s83, 0
    %p215 = por %p213, %p214
    %s217 = sadd.s32 %s216, 1
    %p220 = scmp.eq.s32.totalorder %s77, 1
    %p221 = scmp.ne.s32.totalorder %s216, %s218
    %p222 = scmp.eq.s32.totalorder %s77, 0
    %p223 = por %p221, %p222
    %p224 = scmp.ne.s32.totalorder %s216, %s218
    %p225 = scmp.eq.s32.totalorder %s82, 1
    %p226 = por %p224, %p225
    %p227 = scmp.ne.s32.totalorder %s218, %s219
    %p228 = scmp.eq.s32.totalorder %s82, 0
    %p229 = por %p227, %p228
    %p230 = scmp.ne.s32.totalorder %s218, %s219
    %p231 = scmp.eq.s32.totalorder %s83, 1
    %p232 = por %p230, %p231
    %p234 = scmp.ne.s32.totalorder %s219, %s233
    %p235 = scmp.eq.s32.totalorder %s83, 0
    %p236 = por %p234, %p235
    %s238 = sadd.s32 %s237, 1
    %p241 = scmp.eq.s32.totalorder %s77, 1
    %p242 = scmp.ne.s32.totalorder %s237, %s239
    %p243 = scmp.eq.s32.totalorder %s77, 0
    %p244 = por %p242, %p243
    %p245 = scmp.ne.s32.totalorder %s237, %s239
    %p246 = scmp.eq.s32.totalorder %s82, 1
    %p247 = por %p245, %p246
    %p248 = scmp.ne.s32.totalorder %s239, %s240
    %p249 = scmp.eq.s32.totalorder %s82, 0
    %p250 = por %p248, %p249
    %p251 = scmp.ne.s32.totalorder %s239, %s240
    %p252 = scmp.eq.s32.totalorder %s83, 1
    %p253 = por %p251, %p252
    %p255 = scmp.ne.s32.totalorder %s240, %s254
    %p256 = scmp.eq.s32.totalorder %s83, 0
    %p257 = por %p255, %p256
    %s259 = sadd.s32 %s258, 1
    %p262 = scmp.eq.s32.totalorder %s77, 1
    %p263 = scmp.ne.s32.totalorder %s258, %s260
    %p264 = scmp.eq.s32.totalorder %s77, 0
    %p265 = por %p263, %p264
    %p266 = scmp.ne.s32.totalorder %s258, %s260
    %p267 = scmp.eq.s32.totalorder %s82, 1
    %p268 = por %p266, %p267
    %p269 = scmp.ne.s32.totalorder %s260, %s261
    %p270 = scmp.eq.s32.totalorder %s82, 0
    %p271 = por %p269, %p270
    %p272 = scmp.ne.s32.totalorder %s260, %s261
    %p273 = scmp.eq.s32.totalorder %s83, 1
    %p274 = por %p272, %p273
    %p276 = scmp.ne.s32.totalorder %s261, %s275
    %p277 = scmp.eq.s32.totalorder %s83, 0
    %p278 = por %p276, %p277
    %s280 = sadd.s32 %s279, 1
    %p283 = scmp.eq.s32.totalorder %s77, 1
    %p284 = scmp.ne.s32.totalorder %s279, %s281
    %p285 = scmp.eq.s32.totalorder %s77, 0
    %p286 = por %p284, %p285
    %p287 = scmp.ne.s32.totalorder %s279, %s281
    %p288 = scmp.eq.s32.totalorder %s82, 1
    %p289 = por %p287, %p288
    %p290 = scmp.ne.s32.totalorder %s281, %s282
    %p291 = scmp.eq.s32.totalorder %s82, 0
    %p292 = por %p290, %p291
    %p293 = scmp.ne.s32.totalorder %s281, %s282
    %p294 = scmp.eq.s32.totalorder %s83, 1
    %p295 = por %p293, %p294
    %p297 = scmp.ne.s32.totalorder %s282, %s296
    %p298 = scmp.eq.s32.totalorder %s83, 0
    %p299 = por %p297, %p298
    %s301 = sadd.s32 %s300, 1
    %p304 = scmp.eq.s32.totalorder %s77, 1
    %p305 = scmp.ne.s32.totalorder %s300, %s302
    %p306 = scmp.eq.s32.totalorder %s77, 0
    %p307 = por %p305, %p306
    %p308 = scmp.ne.s32.totalorder %s300, %s302
    %p309 = scmp.eq.s32.totalorder %s82, 1
    %p310 = por %p308, %p309
    %p311 = scmp.ne.s32.totalorder %s302, %s303
    %p312 = scmp.eq.s32.totalorder %s82, 0
    %p313 = por %p311, %p312
    %p314 = scmp.ne.s32.totalorder %s302, %s303
    %p315 = scmp.eq.s32.totalorder %s83, 1
    %p316 = por %p314, %p315
    %p318 = scmp.ne.s32.totalorder %s303, %s317
    %p319 = scmp.eq.s32.totalorder %s83, 0
    %p320 = por %p318, %p319
    %s322 = sadd.s32 %s321, 1
    %p325 = scmp.eq.s32.totalorder %s77, 1
    %p326 = scmp.ne.s32.totalorder %s321, %s323
    %p327 = scmp.eq.s32.totalorder %s77, 0
    %p328 = por %p326, %p327
    %p329 = scmp.ne.s32.totalorder %s321, %s323
    %p330 = scmp.eq.s32.totalorder %s82, 1
    %p331 = por %p329, %p330
    %p332 = scmp.ne.s32.totalorder %s323, %s324
    %p333 = scmp.eq.s32.totalorder %s82, 0
    %p334 = por %p332, %p333
    %p335 = scmp.ne.s32.totalorder %s323, %s324
    %p336 = scmp.eq.s32.totalorder %s83, 1
    %p337 = por %p335, %p336
    %p339 = scmp.ne.s32.totalorder %s324, %s338
    %p340 = scmp.eq.s32.totalorder %s83, 0
    %p341 = por %p339, %p340
    %s343 = sadd.s32 %s342, 1
    %p346 = scmp.eq.s32.totalorder %s77, 1
    %p347 = scmp.ne.s32.totalorder %s342, %s344
    %p348 = scmp.eq.s32.totalorder %s77, 0
    %p349 = por %p347, %p348
    %p350 = scmp.ne.s32.totalorder %s342, %s344
    %p351 = scmp.eq.s32.totalorder %s82, 1
    %p352 = por %p350, %p351
    %p353 = scmp.ne.s32.totalorder %s344, %s345
    %p354 = scmp.eq.s32.totalorder %s82, 0
    %p355 = por %p353, %p354
    %p356 = scmp.ne.s32.totalorder %s344, %s345
    %p357 = scmp.eq.s32.totalorder %s83, 1
    %p358 = por %p356, %p357
    %p360 = scmp.ne.s32.totalorder %s345, %s359
    %p361 = scmp.eq.s32.totalorder %s83, 0
    %p362 = por %p360, %p361
    %s364 = sadd.s32 %s363, 1
    %p367 = scmp.eq.s32.totalorder %s77, 1
    %p368 = scmp.ne.s32.totalorder %s363, %s365
    %p369 = scmp.eq.s32.totalorder %s77, 0
    %p370 = por %p368, %p369
    %p371 = scmp.ne.s32.totalorder %s363, %s365
    %p372 = scmp.eq.s32.totalorder %s82, 1
    %p373 = por %p371, %p372
    %p374 = scmp.ne.s32.totalorder %s365, %s366
    %p375 = scmp.eq.s32.totalorder %s82, 0
    %p376 = por %p374, %p375
    %p377 = scmp.ne.s32.totalorder %s365, %s366
    %p378 = scmp.eq.s32.totalorder %s83, 1
    %p379 = por %p377, %p378
    %p381 = scmp.ne.s32.totalorder %s366, %s380
    %p382 = scmp.eq.s32.totalorder %s83, 0
    %p383 = por %p381, %p382
    %s385 = sadd.s32 %s384, 1
    %p388 = scmp.eq.s32.totalorder %s77, 1
    %p389 = scmp.ne.s32.totalorder %s384, %s386
    %p390 = scmp.eq.s32.totalorder %s77, 0
    %p391 = por %p389, %p390
    %p392 = scmp.ne.s32.totalorder %s384, %s386
    %p393 = scmp.eq.s32.totalorder %s82, 1
    %p394 = por %p392, %p393
    %p395 = scmp.ne.s32.totalorder %s386, %s387
    %p396 = scmp.eq.s32.totalorder %s82, 0
    %p397 = por %p395, %p396
    %p398 = scmp.ne.s32.totalorder %s386, %s387
    %p399 = scmp.eq.s32.totalorder %s83, 1
    %p400 = por %p398, %p399
    %p402 = scmp.ne.s32.totalorder %s387, %s401
    %p403 = scmp.eq.s32.totalorder %s83, 0
    %p404 = por %p402, %p403
    %s406 = sadd.s32 %s405, 1
    %p409 = scmp.eq.s32.totalorder %s77, 1
    %p410 = scmp.ne.s32.totalorder %s405, %s407
    %p411 = scmp.eq.s32.totalorder %s77, 0
    %p412 = por %p410, %p411
    %p413 = scmp.ne.s32.totalorder %s405, %s407
    %p414 = scmp.eq.s32.totalorder %s82, 1
    %p415 = por %p413, %p414
    %p416 = scmp.ne.s32.totalorder %s407, %s408
    %p417 = scmp.eq.s32.totalorder %s82, 0
    %p418 = por %p416, %p417
    %p419 = scmp.ne.s32.totalorder %s407, %s408
    %p420 = scmp.eq.s32.totalorder %s83, 1
    %p421 = por %p419, %p420
    %p423 = scmp.ne.s32.totalorder %s408, %s422
    %p424 = scmp.eq.s32.totalorder %s83, 0
    %p425 = por %p423, %p424
    %s427 = sadd.s32 %s426, 1
    %p430 = scmp.eq.s32.totalorder %s77, 1
    %p431 = scmp.ne.s32.totalorder %s426, %s428
    %p432 = scmp.eq.s32.totalorder %s77, 0
    %p433 = por %p431, %p432
    %p434 = scmp.ne.s32.totalorder %s426, %s428
    %p435 = scmp.eq.s32.totalorder %s82, 1
    %p436 = por %p434, %p435
    %p437 = scmp.ne.s32.totalorder %s428, %s429
    %p438 = scmp.eq.s32.totalorder %s82, 0
    %p439 = por %p437, %p438
    %p440 = scmp.ne.s32.totalorder %s428, %s429
    %p441 = scmp.eq.s32.totalorder %s83, 1
    %p442 = por %p440, %p441
    %p444 = scmp.ne.s32.totalorder %s429, %s443
    %p445 = scmp.eq.s32.totalorder %s83, 0
    %p446 = por %p444, %p445
    %s448 = sadd.s32 %s447, 1
    %p451 = scmp.eq.s32.totalorder %s77, 1
    %p452 = scmp.ne.s32.totalorder %s447, %s449
    %p453 = scmp.eq.s32.totalorder %s77, 0
    %p454 = por %p452, %p453
    %p455 = scmp.ne.s32.totalorder %s447, %s449
    %p456 = scmp.eq.s32.totalorder %s82, 1
    %p457 = por %p455, %p456
    %p458 = scmp.ne.s32.totalorder %s449, %s450
    %p459 = scmp.eq.s32.totalorder %s82, 0
    %p460 = por %p458, %p459
    %p461 = scmp.ne.s32.totalorder %s449, %s450
    %p462 = scmp.eq.s32.totalorder %s83, 1
    %p463 = por %p461, %p462
    %p465 = scmp.ne.s32.totalorder %s450, %s464
    %p466 = scmp.eq.s32.totalorder %s83, 0
    %p467 = por %p465, %p466
    %s469 = sadd.s32 %s468, 1
    %p472 = scmp.eq.s32.totalorder %s77, 1
    %p473 = scmp.ne.s32.totalorder %s468, %s470
    %p474 = scmp.eq.s32.totalorder %s77, 0
    %p475 = por %p473, %p474
    %p476 = scmp.ne.s32.totalorder %s468, %s470
    %p477 = scmp.eq.s32.totalorder %s82, 1
    %p478 = por %p476, %p477
    %p479 = scmp.ne.s32.totalorder %s470, %s471
    %p480 = scmp.eq.s32.totalorder %s82, 0
    %p481 = por %p479, %p480
    %p482 = scmp.ne.s32.totalorder %s470, %s471
    %p483 = scmp.eq.s32.totalorder %s83, 1
    %p484 = por %p482, %p483
    %p486 = scmp.ne.s32.totalorder %s471, %s485
    %p487 = scmp.eq.s32.totalorder %s83, 0
    %p488 = por %p486, %p487
    %s490 = sadd.s32 %s489, 1
    %p493 = scmp.eq.s32.totalorder %s77, 1
    %p494 = scmp.ne.s32.totalorder %s489, %s491
    %p495 = scmp.eq.s32.totalorder %s77, 0
    %p496 = por %p494, %p495
    %p497 = scmp.ne.s32.totalorder %s489, %s491
    %p498 = scmp.eq.s32.totalorder %s82, 1
    %p499 = por %p497, %p498
    %p500 = scmp.ne.s32.totalorder %s491, %s492
    %p501 = scmp.eq.s32.totalorder %s82, 0
    %p502 = por %p500, %p501
    %p503 = scmp.ne.s32.totalorder %s491, %s492
    %p504 = scmp.eq.s32.totalorder %s83, 1
    %p505 = por %p503, %p504
    %p507 = scmp.ne.s32.totalorder %s492, %s506
    %p508 = scmp.eq.s32.totalorder %s83, 0
    %p509 = por %p507, %p508
    %s511 = sadd.s32 %s510, 1
    %p514 = scmp.eq.s32.totalorder %s77, 1
    %p515 = scmp.ne.s32.totalorder %s510, %s512
    %p516 = scmp.eq.s32.totalorder %s77, 0
    %p517 = por %p515, %p516
    %p518 = scmp.ne.s32.totalorder %s510, %s512
    %p519 = scmp.eq.s32.totalorder %s82, 1
    %p520 = por %p518, %p519
    %p521 = scmp.ne.s32.totalorder %s512, %s513
    %p522 = scmp.eq.s32.totalorder %s82, 0
    %p523 = por %p521, %p522
    %p524 = scmp.ne.s32.totalorder %s512, %s513
    %p525 = scmp.eq.s32.totalorder %s83, 1
    %p526 = por %p524, %p525
    %p528 = scmp.ne.s32.totalorder %s513, %s527
    %p529 = scmp.eq.s32.totalorder %s83, 0
    %p530 = por %p528, %p529
    %s532 = sadd.s32 %s531, 1
    %p535 = scmp.eq.s32.totalorder %s77, 1
    %p536 = scmp.ne.s32.totalorder %s531, %s533
    %p537 = scmp.eq.s32.totalorder %s77, 0
    %p538 = por %p536, %p537
    %p539 = scmp.ne.s32.totalorder %s531, %s533
    %p540 = scmp.eq.s32.totalorder %s82, 1
    %p541 = por %p539, %p540
    %p542 = scmp.ne.s32.totalorder %s533, %s534
    %p543 = scmp.eq.s32.totalorder %s82, 0
    %p544 = por %p542, %p543
    %p545 = scmp.ne.s32.totalorder %s533, %s534
    %p546 = scmp.eq.s32.totalorder %s83, 1
    %p547 = por %p545, %p546
    %p549 = scmp.ne.s32.totalorder %s534, %s548
    %p550 = scmp.eq.s32.totalorder %s83, 0
    %p551 = por %p549, %p550
    %s553 = sadd.s32 %s552, 1
    %p556 = scmp.eq.s32.totalorder %s77, 1
    %p557 = scmp.ne.s32.totalorder %s552, %s554
    %p558 = scmp.eq.s32.totalorder %s77, 0
    %p559 = por %p557, %p558
    %p560 = scmp.ne.s32.totalorder %s552, %s554
    %p561 = scmp.eq.s32.totalorder %s82, 1
    %p562 = por %p560, %p561
    %p563 = scmp.ne.s32.totalorder %s554, %s555
    %p564 = scmp.eq.s32.totalorder %s82, 0
    %p565 = por %p563, %p564
    %p566 = scmp.ne.s32.totalorder %s554, %s555
    %p567 = scmp.eq.s32.totalorder %s83, 1
    %p568 = por %p566, %p567
    %p570 = scmp.ne.s32.totalorder %s555, %s569
    %p571 = scmp.eq.s32.totalorder %s83, 0
    %p572 = por %p570, %p571
    %s574 = sadd.s32 %s573, 1
    %p577 = scmp.eq.s32.totalorder %s77, 1
    %p578 = scmp.ne.s32.totalorder %s573, %s575
    %p579 = scmp.eq.s32.totalorder %s77, 0
    %p580 = por %p578, %p579
    %p581 = scmp.ne.s32.totalorder %s573, %s575
    %p582 = scmp.eq.s32.totalorder %s82, 1
    %p583 = por %p581, %p582
    %p584 = scmp.ne.s32.totalorder %s575, %s576
    %p585 = scmp.eq.s32.totalorder %s82, 0
    %p586 = por %p584, %p585
    %p587 = scmp.ne.s32.totalorder %s575, %s576
    %p588 = scmp.eq.s32.totalorder %s83, 1
    %p589 = por %p587, %p588
    %p591 = scmp.ne.s32.totalorder %s576, %s590
    %p592 = scmp.eq.s32.totalorder %s83, 0
    %p593 = por %p591, %p592
    %s595 = sadd.s32 %s594, 1
    %p598 = scmp.eq.s32.totalorder %s77, 1
    %p599 = scmp.ne.s32.totalorder %s594, %s596
    %p600 = scmp.eq.s32.totalorder %s77, 0
    %p601 = por %p599, %p600
    %p602 = scmp.ne.s32.totalorder %s594, %s596
    %p603 = scmp.eq.s32.totalorder %s82, 1
    %p604 = por %p602, %p603
    %p605 = scmp.ne.s32.totalorder %s596, %s597
    %p606 = scmp.eq.s32.totalorder %s82, 0
    %p607 = por %p605, %p606
    %p608 = scmp.ne.s32.totalorder %s596, %s597
    %p609 = scmp.eq.s32.totalorder %s83, 1
    %p610 = por %p608, %p609
    %p612 = scmp.ne.s32.totalorder %s597, %s611
    %p613 = scmp.eq.s32.totalorder %s83, 0
    %p614 = por %p612, %p613
    %s616 = sadd.s32 %s615, 1
    %p619 = scmp.eq.s32.totalorder %s77, 1
    %p620 = scmp.ne.s32.totalorder %s615, %s617
    %p621 = scmp.eq.s32.totalorder %s77, 0
    %p622 = por %p620, %p621
    %p623 = scmp.ne.s32.totalorder %s615, %s617
    %p624 = scmp.eq.s32.totalorder %s82, 1
    %p625 = por %p623, %p624
    %p626 = scmp.ne.s32.totalorder %s617, %s618
    %p627 = scmp.eq.s32.totalorder %s82, 0
    %p628 = por %p626, %p627
    %p629 = scmp.ne.s32.totalorder %s617, %s618
    %p630 = scmp.eq.s32.totalorder %s83, 1
    %p631 = por %p629, %p630
    %p633 = scmp.ne.s32.totalorder %s618, %s632
    %p634 = scmp.eq.s32.totalorder %s83, 0
    %p635 = por %p633, %p634
    %s637 = sadd.s32 %s636, 1
    %p640 = scmp.eq.s32.totalorder %s77, 1
    %p641 = scmp.ne.s32.totalorder %s636, %s638
    %p642 = scmp.eq.s32.totalorder %s77, 0
    %p643 = por %p641, %p642
    %p644 = scmp.ne.s32.totalorder %s636, %s638
    %p645 = scmp.eq.s32.totalorder %s82, 1
    %p646 = por %p644, %p645
    %p647 = scmp.ne.s32.totalorder %s638, %s639
    %p648 = scmp.eq.s32.totalorder %s82, 0
    %p649 = por %p647, %p648
    %p650 = scmp.ne.s32.totalorder %s638, %s639
    %p651 = scmp.eq.s32.totalorder %s83, 1
    %p652 = por %p650, %p651
    %p654 = scmp.ne.s32.totalorder %s639, %s653
    %p655 = scmp.eq.s32.totalorder %s83, 0
    %p656 = por %p654, %p655
    %s658 = sadd.s32 %s657, 1
    %p661 = scmp.eq.s32.totalorder %s77, 1
    %p662 = scmp.ne.s32.totalorder %s657, %s659
    %p663 = scmp.eq.s32.totalorder %s77, 0
    %p664 = por %p662, %p663
    %p665 = scmp.ne.s32.totalorder %s657, %s659
    %p666 = scmp.eq.s32.totalorder %s82, 1
    %p667 = por %p665, %p666
    %p668 = scmp.ne.s32.totalorder %s659, %s660
    %p669 = scmp.eq.s32.totalorder %s82, 0
    %p670 = por %p668, %p669
    %p671 = scmp.ne.s32.totalorder %s659, %s660
    %p672 = scmp.eq.s32.totalorder %s83, 1
    %p673 = por %p671, %p672
    %p675 = scmp.ne.s32.totalorder %s660, %s674
    %p676 = scmp.eq.s32.totalorder %s83, 0
    %p677 = por %p675, %p676
    %s679 = sadd.s32 %s678, 1
    %p682 = scmp.eq.s32.totalorder %s77, 1
    %p683 = scmp.ne.s32.totalorder %s678, %s680
    %p684 = scmp.eq.s32.totalorder %s77, 0
    %p685 = por %p683, %p684
    %p686 = scmp.ne.s32.totalorder %s678, %s680
    %p687 = scmp.eq.s32.totalorder %s82, 1
    %p688 = por %p686, %p687
    %p689 = scmp.ne.s32.totalorder %s680, %s681
    %p690 = scmp.eq.s32.totalorder %s82, 0
    %p691 = por %p689, %p690
    %p692 = scmp.ne.s32.totalorder %s680, %s681
    %p693 = scmp.eq.s32.totalorder %s83, 1
    %p694 = por %p692, %p693
    %p696 = scmp.ne.s32.totalorder %s681, %s695
    %p697 = scmp.eq.s32.totalorder %s83, 0
    %p698 = por %p696, %p697
    %s700 = sadd.s32 %s699, 1
    %p703 = scmp.eq.s32.totalorder %s77, 1
    %p704 = scmp.ne.s32.totalorder %s699, %s701
    %p705 = scmp.eq.s32.totalorder %s77, 0
    %p706 = por %p704, %p705
    %p707 = scmp.ne.s32.totalorder %s699, %s701
    %p708 = scmp.eq.s32.totalorder %s82, 1
    %p709 = por %p707, %p708
    %p710 = scmp.ne.s32.totalorder %s701, %s702
    %p711 = scmp.eq.s32.totalorder %s82, 0
    %p712 = por %p710, %p711
    %p713 = scmp.ne.s32.totalorder %s701, %s702
    %p714 = scmp.eq.s32.totalorder %s83, 1
    %p715 = por %p713, %p714
    %p717 = scmp.ne.s32.totalorder %s702, %s716
    %p718 = scmp.eq.s32.totalorder %s83, 0
    %p719 = por %p717, %p718
    %s721 = sadd.s32 %s720, 1
    %p724 = scmp.eq.s32.totalorder %s77, 1
    %p725 = scmp.ne.s32.totalorder %s720, %s722
    %p726 = scmp.eq.s32.totalorder %s77, 0
    %p727 = por %p725, %p726
    %p728 = scmp.ne.s32.totalorder %s720, %s722
    %p729 = scmp.eq.s32.totalorder %s82, 1
    %p730 = por %p728, %p729
    %p731 = scmp.ne.s32.totalorder %s722, %s723
    %p732 = scmp.eq.s32.totalorder %s82, 0
    %p733 = por %p731, %p732
    %p734 = scmp.ne.s32.totalorder %s722, %s723
    %p735 = scmp.eq.s32.totalorder %s83, 1
    %p736 = por %p734, %p735
    %p738 = scmp.ne.s32.totalorder %s723, %s737
    %p739 = scmp.eq.s32.totalorder %s83, 0
    %p740 = por %p738, %p739
    %s742 = sadd.s32 %s741, 1
    %p745 = scmp.eq.s32.totalorder %s77, 1
    %p746 = scmp.ne.s32.totalorder %s741, %s743
    %p747 = scmp.eq.s32.totalorder %s77, 0
    %p748 = por %p746, %p747
    %p749 = scmp.ne.s32.totalorder %s741, %s743
    %p750 = scmp.eq.s32.totalorder %s82, 1
    %p751 = por %p749, %p750
    %p752 = scmp.ne.s32.totalorder %s743, %s744
    %p753 = scmp.eq.s32.totalorder %s82, 0
    %p754 = por %p752, %p753
    %p755 = scmp.ne.s32.totalorder %s743, %s744
    %p756 = scmp.eq.s32.totalorder %s83, 1
    %p757 = por %p755, %p756
    %p759 = scmp.ne.s32.totalorder %s744, %s758
    %p760 = scmp.eq.s32.totalorder %s83, 0
    %p761 = por %p759, %p760
    %s763 = sadd.s32 %s762, 1
    %p766 = scmp.eq.s32.totalorder %s77, 1
    %p767 = scmp.ne.s32.totalorder %s762, %s764
    %p768 = scmp.eq.s32.totalorder %s77, 0
    %p769 = por %p767, %p768
    %p770 = scmp.ne.s32.totalorder %s762, %s764
    %p771 = scmp.eq.s32.totalorder %s82, 1
    %p772 = por %p770, %p771
    %p773 = scmp.ne.s32.totalorder %s764, %s765
    %p774 = scmp.eq.s32.totalorder %s82, 0
    %p775 = por %p773, %p774
    %p776 = scmp.ne.s32.totalorder %s764, %s765
    %p777 = scmp.eq.s32.totalorder %s83, 1
    %p778 = por %p776, %p777
    %p780 = scmp.ne.s32.totalorder %s765, %s779
    %p781 = scmp.eq.s32.totalorder %s83, 0
    %p782 = por %p780, %p781
    %s784 = sadd.s32 %s783, 1
    %p787 = scmp.eq.s32.totalorder %s77, 1
    %p788 = scmp.ne.s32.totalorder %s783, %s785
    %p789 = scmp.eq.s32.totalorder %s77, 0
    %p790 = por %p788, %p789
    %p791 = scmp.ne.s32.totalorder %s783, %s785
    %p792 = scmp.eq.s32.totalorder %s82, 1
    %p793 = por %p791, %p792
    %p794 = scmp.ne.s32.totalorder %s785, %s786
    %p795 = scmp.eq.s32.totalorder %s82, 0
    %p796 = por %p794, %p795
    %p797 = scmp.ne.s32.totalorder %s785, %s786
    %p798 = scmp.eq.s32.totalorder %s83, 1
    %p799 = por %p797, %p798
    %p801 = scmp.ne.s32.totalorder %s786, %s800
    %p802 = scmp.eq.s32.totalorder %s83, 0
    %p803 = por %p801, %p802
    %s805 = sadd.s32 %s804, 1
    %p808 = scmp.eq.s32.totalorder %s77, 1
    %p809 = scmp.ne.s32.totalorder %s804, %s806
    %p810 = scmp.eq.s32.totalorder %s77, 0
    %p811 = por %p809, %p810
    %p812 = scmp.ne.s32.totalorder %s804, %s806
    %p813 = scmp.eq.s32.totalorder %s82, 1
    %p814 = por %p812, %p813
    %p815 = scmp.ne.s32.totalorder %s806, %s807
    %p816 = scmp.eq.s32.totalorder %s82, 0
    %p817 = por %p815, %p816
    %p818 = scmp.ne.s32.totalorder %s806, %s807
    %p819 = scmp.eq.s32.totalorder %s83, 1
    %p820 = por %p818, %p819
    %p822 = scmp.ne.s32.totalorder %s807, %s821
    %p823 = scmp.eq.s32.totalorder %s83, 0
    %p824 = por %p822, %p823
    %s825 = ssub.s32 %s77, %s84
    %p826 = scmp.eq.s32.totalorder %s825, 0
    %s828 = sadd.s32 %s827, 1
    %s829 = scalar_select %p826, %s827, %s828
    %p832 = pneg %p826
    %p833 = scmp.eq.s32.totalorder %s77, 1
    %p834 = por %p832, %p833
    %p835 = scmp.ne.s32.totalorder %s827, %s830
    %p836 = scmp.eq.s32.totalorder %s77, 0
    %p837 = por %p835, %p836
    %p838 = scmp.ne.s32.totalorder %s827, %s830
    %p839 = scmp.eq.s32.totalorder %s82, 1
    %p840 = por %p838, %p839
    %p841 = scmp.ne.s32.totalorder %s830, %s831
    %p842 = scmp.eq.s32.totalorder %s82, 0
    %p843 = por %p841, %p842
    %p844 = scmp.ne.s32.totalorder %s830, %s831
    %p845 = scmp.eq.s32.totalorder %s83, 1
    %p846 = por %p844, %p845
    %p848 = scmp.ne.s32.totalorder %s831, %s847
    %p849 = scmp.eq.s32.totalorder %s83, 0
    %p850 = por %p848, %p849
    %p851 = scmp.le.s32.totalorder 1, %s77
    %p852 = scmp.lt.s32.totalorder %s77, 3
    %p853 = pnand %p851, %p852
    %p854 = pneg %p853
    // Predicated region
    $region9: #{vision_transformer_forward.3} parent=5 // pred_check
      _
    $region10: #{vision_transformer_forward.3} parent=5 // pred_check_branch
      %856 = sbr.rel (%p853) target = $region12
    $region11: #{vision_transformer_forward.3} parent=5 // pred_region
      %s857 = ssub.s32 %s77, 1
      // Predicated region
      $region13: #{vision_transformer_forward.3} parent=11 // pred_check
        %p858 = pneg %p124
      $region14: #{vision_transformer_forward.3} parent=11 // pred_check_branch
        %860 = sbr.rel (%p858) target = $region16
      $region15: #{vision_transformer_forward.3} parent=11 // pred_region
        _
      $region16: #{vision_transformer_forward.3} parent=11 // pred_fallthru
        _
      // Predicated region
      $region17: #{vision_transformer_forward.3} parent=11 // pred_check
        %p861 = pneg %p145
      $region18: #{vision_transformer_forward.3} parent=11 // pred_check_branch
        %863 = sbr.rel (%p861) target = $region20
      $region19: #{vision_transformer_forward.3} parent=11 // pred_region
        _
      $region20: #{vision_transformer_forward.3} parent=11 // pred_fallthru
        _
      // Predicated region
      $region21: #{vision_transformer_forward.3} parent=11 // pred_check
        %p864 = pneg %p166
      $region22: #{vision_transformer_forward.3} parent=11 // pred_check_branch
        %866 = sbr.rel (%p864) target = $region24
      $region23: #{vision_transformer_forward.3} parent=11 // pred_region
        _
      $region24: #{vision_transformer_forward.3} parent=11 // pred_fallthru
        _
      // Predicated region
      $region25: #{vision_transformer_forward.3} parent=11 // pred_check
        %p867 = pneg %p187
      $region26: #{vision_transformer_forward.3} parent=11 // pred_check_branch
        %869 = sbr.rel (%p867) target = $region28
      $region27: #{vision_transformer_forward.3} parent=11 // pred_region
        _
      $region28: #{vision_transformer_forward.3} parent=11 // pred_fallthru
        _
      // Predicated region
      $region29: #{vision_transformer_forward.3} parent=11 // pred_check
        %p870 = pneg %p208
      $region30: #{vision_transformer_forward.3} parent=11 // pred_check_branch
        %872 = sbr.rel (%p870) target = $region32
      $region31: #{vision_transformer_forward.3} parent=11 // pred_region
        _
      $region32: #{vision_transformer_forward.3} parent=11 // pred_fallthru
        _
      // Predicated region
      $region33: #{vision_transformer_forward.3} parent=11 // pred_check
        %p873 = pneg %p229
      $region34: #{vision_transformer_forward.3} parent=11 // pred_check_branch
        %875 = sbr.rel (%p873) target = $region36
      $region35: #{vision_transformer_forward.3} parent=11 // pred_region
        _
      $region36: #{vision_transformer_forward.3} parent=11 // pred_fallthru
        _
      // Predicated region
      $region37: #{vision_transformer_forward.3} parent=11 // pred_check
        %p876 = pneg %p250
      $region38: #{vision_transformer_forward.3} parent=11 // pred_check_branch
        %878 = sbr.rel (%p876) target = $region40
      $region39: #{vision_transformer_forward.3} parent=11 // pred_region
        _
      $region40: #{vision_transformer_forward.3} parent=11 // pred_fallthru
        _
      // Predicated region
      $region41: #{vision_transformer_forward.3} parent=11 // pred_check
        %p879 = pneg %p271
      $region42: #{vision_transformer_forward.3} parent=11 // pred_check_branch
        %881 = sbr.rel (%p879) target = $region44
      $region43: #{vision_transformer_forward.3} parent=11 // pred_region
        _
      $region44: #{vision_transformer_forward.3} parent=11 // pred_fallthru
        _
      // Predicated region
      $region45: #{vision_transformer_forward.3} parent=11 // pred_check
        %p882 = pneg %p292
      $region46: #{vision_transformer_forward.3} parent=11 // pred_check_branch
        %884 = sbr.rel (%p882) target = $region48
      $region47: #{vision_transformer_forward.3} parent=11 // pred_region
        _
      $region48: #{vision_transformer_forward.3} parent=11 // pred_fallthru
        _
      // Predicated region
      $region49: #{vision_transformer_forward.3} parent=11 // pred_check
        %p885 = pneg %p313
      $region50: #{vision_transformer_forward.3} parent=11 // pred_check_branch
        %887 = sbr.rel (%p885) target = $region52
      $region51: #{vision_transformer_forward.3} parent=11 // pred_region
        _
      $region52: #{vision_transformer_forward.3} parent=11 // pred_fallthru
        _
      // Predicated region
      $region53: #{vision_transformer_forward.3} parent=11 // pred_check
        %p888 = pneg %p334
      $region54: #{vision_transformer_forward.3} parent=11 // pred_check_branch
        %890 = sbr.rel (%p888) target = $region56
      $region55: #{vision_transformer_forward.3} parent=11 // pred_region
        _
      $region56: #{vision_transformer_forward.3} parent=11 // pred_fallthru
        _
      // Predicated region
      $region57: #{vision_transformer_forward.3} parent=11 // pred_check
        %p891 = pneg %p355
      $region58: #{vision_transformer_forward.3} parent=11 // pred_check_branch
        %893 = sbr.rel (%p891) target = $region60
      $region59: #{vision_transformer_forward.3} parent=11 // pred_region
        _
      $region60: #{vision_transformer_forward.3} parent=11 // pred_fallthru
        _
      // Predicated region
      $region61: #{vision_transformer_forward.3} parent=11 // pred_check
        %p894 = pneg %p376
      $region62: #{vision_transformer_forward.3} parent=11 // pred_check_branch
        %896 = sbr.rel (%p894) target = $region64
      $region63: #{vision_transformer_forward.3} parent=11 // pred_region
        _
      $region64: #{vision_transformer_forward.3} parent=11 // pred_fallthru
        _
      // Predicated region
      $region65: #{vision_transformer_forward.3} parent=11 // pred_check
        %p897 = pneg %p397
      $region66: #{vision_transformer_forward.3} parent=11 // pred_check_branch
        %899 = sbr.rel (%p897) target = $region68
      $region67: #{vision_transformer_forward.3} parent=11 // pred_region
        _
      $region68: #{vision_transformer_forward.3} parent=11 // pred_fallthru
        _
      // Predicated region
      $region69: #{vision_transformer_forward.3} parent=11 // pred_check
        %p900 = pneg %p418
      $region70: #{vision_transformer_forward.3} parent=11 // pred_check_branch
        %902 = sbr.rel (%p900) target = $region72
      $region71: #{vision_transformer_forward.3} parent=11 // pred_region
        _
      $region72: #{vision_transformer_forward.3} parent=11 // pred_fallthru
        _
      // Predicated region
      $region73: #{vision_transformer_forward.3} parent=11 // pred_check
        %p903 = pneg %p439
      $region74: #{vision_transformer_forward.3} parent=11 // pred_check_branch
        %905 = sbr.rel (%p903) target = $region76
      $region75: #{vision_transformer_forward.3} parent=11 // pred_region
        _
      $region76: #{vision_transformer_forward.3} parent=11 // pred_fallthru
        _
      // Predicated region
      $region77: #{vision_transformer_forward.3} parent=11 // pred_check
        %p906 = pneg %p460
      $region78: #{vision_transformer_forward.3} parent=11 // pred_check_branch
        %908 = sbr.rel (%p906) target = $region80
      $region79: #{vision_transformer_forward.3} parent=11 // pred_region
        _
      $region80: #{vision_transformer_forward.3} parent=11 // pred_fallthru
        _
      // Predicated region
      $region81: #{vision_transformer_forward.3} parent=11 // pred_check
        %p909 = pneg %p481
      $region82: #{vision_transformer_forward.3} parent=11 // pred_check_branch
        %911 = sbr.rel (%p909) target = $region84
      $region83: #{vision_transformer_forward.3} parent=11 // pred_region
        _
      $region84: #{vision_transformer_forward.3} parent=11 // pred_fallthru
        _
      // Predicated region
      $region85: #{vision_transformer_forward.3} parent=11 // pred_check
        %p912 = pneg %p502
      $region86: #{vision_transformer_forward.3} parent=11 // pred_check_branch
        %914 = sbr.rel (%p912) target = $region88
      $region87: #{vision_transformer_forward.3} parent=11 // pred_region
        _
      $region88: #{vision_transformer_forward.3} parent=11 // pred_fallthru
        _
      // Predicated region
      $region89: #{vision_transformer_forward.3} parent=11 // pred_check
        %p915 = pneg %p523
      $region90: #{vision_transformer_forward.3} parent=11 // pred_check_branch
        %917 = sbr.rel (%p915) target = $region92
      $region91: #{vision_transformer_forward.3} parent=11 // pred_region
        _
      $region92: #{vision_transformer_forward.3} parent=11 // pred_fallthru
        _
      // Predicated region
      $region93: #{vision_transformer_forward.3} parent=11 // pred_check
        %p918 = pneg %p544
      $region94: #{vision_transformer_forward.3} parent=11 // pred_check_branch
        %920 = sbr.rel (%p918) target = $region96
      $region95: #{vision_transformer_forward.3} parent=11 // pred_region
        _
      $region96: #{vision_transformer_forward.3} parent=11 // pred_fallthru
        _
      // Predicated region
      $region97: #{vision_transformer_forward.3} parent=11 // pred_check
        %p921 = pneg %p565
      $region98: #{vision_transformer_forward.3} parent=11 // pred_check_branch
        %923 = sbr.rel (%p921) target = $region100
      $region99: #{vision_transformer_forward.3} parent=11 // pred_region
        _
      $region100: #{vision_transformer_forward.3} parent=11 // pred_fallthru
        _
      // Predicated region
      $region101: #{vision_transformer_forward.3} parent=11 // pred_check
        %p924 = pneg %p586
      $region102: #{vision_transformer_forward.3} parent=11 // pred_check_branch
        %926 = sbr.rel (%p924) target = $region104
      $region103: #{vision_transformer_forward.3} parent=11 // pred_region
        _
      $region104: #{vision_transformer_forward.3} parent=11 // pred_fallthru
        _
      // Predicated region
      $region105: #{vision_transformer_forward.3} parent=11 // pred_check
        %p927 = pneg %p607
      $region106: #{vision_transformer_forward.3} parent=11 // pred_check_branch
        %929 = sbr.rel (%p927) target = $region108
      $region107: #{vision_transformer_forward.3} parent=11 // pred_region
        _
      $region108: #{vision_transformer_forward.3} parent=11 // pred_fallthru
        _
      // Predicated region
      $region109: #{vision_transformer_forward.3} parent=11 // pred_check
        %p930 = pneg %p628
      $region110: #{vision_transformer_forward.3} parent=11 // pred_check_branch
        %932 = sbr.rel (%p930) target = $region112
      $region111: #{vision_transformer_forward.3} parent=11 // pred_region
        _
      $region112: #{vision_transformer_forward.3} parent=11 // pred_fallthru
        _
      // Predicated region
      $region113: #{vision_transformer_forward.3} parent=11 // pred_check
        %p933 = pneg %p649
      $region114: #{vision_transformer_forward.3} parent=11 // pred_check_branch
        %935 = sbr.rel (%p933) target = $region116
      $region115: #{vision_transformer_forward.3} parent=11 // pred_region
        _
      $region116: #{vision_transformer_forward.3} parent=11 // pred_fallthru
        _
      // Predicated region
      $region117: #{vision_transformer_forward.3} parent=11 // pred_check
        %p936 = pneg %p670
      $region118: #{vision_transformer_forward.3} parent=11 // pred_check_branch
        %938 = sbr.rel (%p936) target = $region120
      $region119: #{vision_transformer_forward.3} parent=11 // pred_region
        _
      $region120: #{vision_transformer_forward.3} parent=11 // pred_fallthru
        _
      // Predicated region
      $region121: #{vision_transformer_forward.3} parent=11 // pred_check
        %p939 = pneg %p691
      $region122: #{vision_transformer_forward.3} parent=11 // pred_check_branch
        %941 = sbr.rel (%p939) target = $region124
      $region123: #{vision_transformer_forward.3} parent=11 // pred_region
        _
      $region124: #{vision_transformer_forward.3} parent=11 // pred_fallthru
        _
      // Predicated region
      $region125: #{vision_transformer_forward.3} parent=11 // pred_check
        %p942 = pneg %p712
      $region126: #{vision_transformer_forward.3} parent=11 // pred_check_branch
        %944 = sbr.rel (%p942) target = $region128
      $region127: #{vision_transformer_forward.3} parent=11 // pred_region
        _
      $region128: #{vision_transformer_forward.3} parent=11 // pred_fallthru
        _
      // Predicated region
      $region129: #{vision_transformer_forward.3} parent=11 // pred_check
        %p945 = pneg %p733
      $region130: #{vision_transformer_forward.3} parent=11 // pred_check_branch
        %947 = sbr.rel (%p945) target = $region132
      $region131: #{vision_transformer_forward.3} parent=11 // pred_region
        _
      $region132: #{vision_transformer_forward.3} parent=11 // pred_fallthru
        _
      // Predicated region
      $region133: #{vision_transformer_forward.3} parent=11 // pred_check
        %p948 = pneg %p754
      $region134: #{vision_transformer_forward.3} parent=11 // pred_check_branch
        %950 = sbr.rel (%p948) target = $region136
      $region135: #{vision_transformer_forward.3} parent=11 // pred_region
        _
      $region136: #{vision_transformer_forward.3} parent=11 // pred_fallthru
        _
      // Predicated region
      $region137: #{vision_transformer_forward.3} parent=11 // pred_check
        %p951 = pneg %p775
      $region138: #{vision_transformer_forward.3} parent=11 // pred_check_branch
        %953 = sbr.rel (%p951) target = $region140
      $region139: #{vision_transformer_forward.3} parent=11 // pred_region
        _
      $region140: #{vision_transformer_forward.3} parent=11 // pred_fallthru
        _
      // Predicated region
      $region141: #{vision_transformer_forward.3} parent=11 // pred_check
        %p954 = pneg %p796
      $region142: #{vision_transformer_forward.3} parent=11 // pred_check_branch
        %956 = sbr.rel (%p954) target = $region144
      $region143: #{vision_transformer_forward.3} parent=11 // pred_region
        _
      $region144: #{vision_transformer_forward.3} parent=11 // pred_fallthru
        _
      // Predicated region
      $region145: #{vision_transformer_forward.3} parent=11 // pred_check
        %p957 = pneg %p817
      $region146: #{vision_transformer_forward.3} parent=11 // pred_check_branch
        %959 = sbr.rel (%p957) target = $region148
      $region147: #{vision_transformer_forward.3} parent=11 // pred_region
        _
      $region148: #{vision_transformer_forward.3} parent=11 // pred_fallthru
        _
    $region12: #{vision_transformer_forward.3} parent=5 // pred_fallthru
      _
    %p960 = scmp.lt.s32.totalorder %s77, 2
    // Predicated region
    $region149: #{vision_transformer_forward.3} parent=5 // pred_check
      %p961 = pneg %p960
    $region150: #{vision_transformer_forward.3} parent=5 // pred_check_branch
      %963 = sbr.rel (%p961) target = $region152
    $region151: #{vision_transformer_forward.3} parent=5 // pred_region
      // Predicated region
      $region153: #{vision_transformer_forward.3} parent=151 // pred_check
        %p964 = pneg %p97
      $region154: #{vision_transformer_forward.3} parent=151 // pred_check_branch
        %966 = sbr.rel (%p964) target = $region156
      $region155: #{vision_transformer_forward.3} parent=151 // pred_region
        %p967 = scmp.lt.s32.totalorder %s77, 1
        %s968 = scalar_select %p967, %s77, 1
        %s969 = smul.addr %s968, 12
        %s970 = smul.addr %s969, 8
        %s971 = scalar_lea.vmem %s1, %s970
      $region156: #{vision_transformer_forward.3} parent=151 // pred_fallthru
        _
    $region152: #{vision_transformer_forward.3} parent=5 // pred_fallthru
      _
    %p972 = scmp.le.s32.totalorder 1, %s77
    %p973 = scmp.lt.s32.totalorder %s77, 3
    %p974 = pnand %p972, %p973
    %p975 = pneg %p974
    // Predicated region
    $region157: #{vision_transformer_forward.3} parent=5 // pred_check
      _
    $region158: #{vision_transformer_forward.3} parent=5 // pred_check_branch
      %977 = sbr.rel (%p974) target = $region160
    $region159: #{vision_transformer_forward.3} parent=5 // pred_region
      %s978 = ssub.s32 %s77, 1
      %p979 = scmp.lt.s32.totalorder %s82, 1
      %s980 = scalar_select %p979, %s82, 1
      %s981 = smul.addr %s980, 12
      %s982 = smul.addr %s981, 8
      %s983 = scalar_lea.vmem %s1, %s982
      %p984 = pneg %p103
      %p985 = pneg %p100
      %p986 = pneg %p124
      %p987 = pneg %p121
      %p988 = pneg %p145
      %p989 = pneg %p142
      %p990 = pneg %p166
      %p991 = pneg %p163
      %p992 = pneg %p187
      %p993 = pneg %p184
      %p994 = pneg %p208
      %p995 = pneg %p205
      %p996 = pneg %p229
      %p997 = pneg %p226
      %p998 = pneg %p250
      %p999 = pneg %p247
      %p1000 = pneg %p271
      %p1001 = pneg %p268
      %p1002 = pneg %p292
      %p1003 = pneg %p289
      %p1004 = pneg %p313
      %p1005 = pneg %p310
      %p1006 = pneg %p334
      %p1007 = pneg %p331
      %p1008 = pneg %p355
      %p1009 = pneg %p352
      %p1010 = pneg %p376
      %p1011 = pneg %p373
      %p1012 = pneg %p397
      %p1013 = pneg %p394
      %p1014 = pneg %p418
      %p1015 = pneg %p415
      %p1016 = pneg %p439
      %p1017 = pneg %p436
      %p1018 = pneg %p460
      %p1019 = pneg %p457
      %p1020 = pneg %p481
      %p1021 = pneg %p478
      %p1022 = pneg %p502
      %p1023 = pneg %p499
      %p1024 = pneg %p523
      %p1025 = pneg %p520
      %p1026 = pneg %p544
      %p1027 = pneg %p541
      %p1028 = pneg %p565
      %p1029 = pneg %p562
      %p1030 = pneg %p586
      %p1031 = pneg %p583
      %p1032 = pneg %p607
      %p1033 = pneg %p604
      %p1034 = pneg %p628
      %p1035 = pneg %p625
      %p1036 = pneg %p649
      %p1037 = pneg %p646
      %p1038 = pneg %p670
      %p1039 = pneg %p667
      %p1040 = pneg %p691
      %p1041 = pneg %p688
      %p1042 = pneg %p712
      %p1043 = pneg %p709
      %p1044 = pneg %p733
      %p1045 = pneg %p730
      %p1046 = pneg %p754
      %p1047 = pneg %p751
      %p1048 = pneg %p775
      %p1049 = pneg %p772
      %p1050 = pneg %p796
      %p1051 = pneg %p793
      %p1052 = pneg %p817
      %p1053 = pneg %p814
      %p1054 = pneg %p843
      %p1055 = pneg %p840
      %p1056 = scmp.lt.s32.totalorder %s82, 1
      %s1057 = scalar_select %p1056, %s82, 1
      %s1058 = smul.addr %s1057, 3
      %s1059 = smul.addr %s1058, 4
      %s1060 = scalar_lea.vmem %s71, %s1059
      %p1061 = scmp.lt.s32.totalorder %s82, 1
      %s1062 = scalar_select %p1061, %s82, 1
      %s1063 = smul.addr %s1062, 12
      %s1064 = smul.addr %s1063, 8
      %s1065 = scalar_lea.vmem %s1, %s1064
      %p1066 = scmp.lt.s32.totalorder %s82, 1
      %s1067 = scalar_select %p1066, %s82, 1
      %s1068 = smul.addr %s1067, 3
      %s1069 = smul.addr %s1068, 4
      %s1070 = scalar_lea.vmem %s71, %s1069
      %v1071 = vld [vmem:[%s1065] sm:$0xff]
      %v1072 = vld [vmem:[%s1065 + $0x8] sm:$0xff]
      %v1073 = vld [vmem:[%s1065 + $0x10] sm:$0xff]
      %v1074 = vld [vmem:[%s1065 + $0x18] sm:$0xff]
      %v1075 = vld [vmem:[%s1065 + $0x20] sm:$0xff]
      %v1076 = vld [vmem:[%s1065 + $0x28] sm:$0xff]
      %v1077 = vld [vmem:[%s1065 + $0x30] sm:$0xff]
      %v1078 = vld [vmem:[%s1065 + $0x38] sm:$0xff]
      %v1079 = vld [vmem:[%s1065 + $0x40] sm:$0xff]
      %v1080 = vld [vmem:[%s1065 + $0x48] sm:$0xff]
      %v1081 = vld [vmem:[%s1065 + $0x50] sm:$0xff]
      %v1082 = vld [vmem:[%s1065 + $0x58] sm:$0xff]
      %v1083 = vld [vmem:[%s3] sm:$0xff]
      %v1084 = vld [vmem:[%s3 + $0x8] sm:$0xff]
      %v1085 = vld [vmem:[%s3 + $0x10] sm:$0xff]
      %v1086 = vld [vmem:[%s3 + $0x18] sm:$0xff]
      %v1087 = vld [vmem:[%s3 + $0x20] sm:$0xff]
      %v1088 = vld [vmem:[%s3 + $0x28] sm:$0xff]
      %v1089 = vld [vmem:[%s3 + $0x30] sm:$0xff]
      %v1090 = vld [vmem:[%s3 + $0x38] sm:$0xff]
      %v1091 = vld [vmem:[%s3 + $0x40] sm:$0xff]
      %v1092 = vld [vmem:[%s3 + $0x48] sm:$0xff]
      %v1093 = vld [vmem:[%s3 + $0x50] sm:$0xff]
      %v1094 = vld [vmem:[%s3 + $0x58] sm:$0xff]
      %v1095 = vld [vmem:[%s3 + $0x60] sm:$0xff]
      %v1096 = vld [vmem:[%s3 + $0x68] sm:$0xff]
      %v1097 = vld [vmem:[%s3 + $0x70] sm:$0xff]
      %v1098 = vld [vmem:[%s3 + $0x78] sm:$0xff]
      %v1099 = vld [vmem:[%s3 + $0x80] sm:$0xff]
      %v1100 = vld [vmem:[%s3 + $0x88] sm:$0xff]
      %v1101 = vld [vmem:[%s3 + $0x90] sm:$0xff]
      %v1102 = vld [vmem:[%s3 + $0x98] sm:$0xff]
      %v1103 = vld [vmem:[%s3 + $0xa0] sm:$0xff]
      %v1104 = vld [vmem:[%s3 + $0xa8] sm:$0xff]
      %v1105 = vld [vmem:[%s3 + $0xb0] sm:$0xff]
      %v1106 = vld [vmem:[%s3 + $0xb8] sm:$0xff]
      %v1107 = vld [vmem:[%s3 + $0xc0] sm:$0xff]
      %v1108 = vld [vmem:[%s3 + $0xc8] sm:$0xff]
      %v1109 = vld [vmem:[%s3 + $0xd0] sm:$0xff]
      %v1110 = vld [vmem:[%s3 + $0xd8] sm:$0xff]
      %v1111 = vld [vmem:[%s3 + $0xe0] sm:$0xff]
      %v1112 = vld [vmem:[%s3 + $0xe8] sm:$0xff]
      %v1113 = vld [vmem:[%s3 + $0xf0] sm:$0xff]
      %v1114 = vld [vmem:[%s3 + $0xf8] sm:$0xff]
      %v1115 = vld [vmem:[%s3 + $0x100] sm:$0xff]
      %v1116 = vld [vmem:[%s3 + $0x108] sm:$0xff]
      %v1117 = vld [vmem:[%s3 + $0x110] sm:$0xff]
      %v1118 = vld [vmem:[%s3 + $0x118] sm:$0xff]
      %v1119 = vld [vmem:[%s3 + $0x120] sm:$0xff]
      %v1120 = vld [vmem:[%s3 + $0x128] sm:$0xff]
      %v1121 = vld [vmem:[%s3 + $0x130] sm:$0xff]
      %v1122 = vld [vmem:[%s3 + $0x138] sm:$0xff]
      %v1123 = vld [vmem:[%s3 + $0x140] sm:$0xff]
      %v1124 = vld [vmem:[%s3 + $0x148] sm:$0xff]
      %v1125 = vld [vmem:[%s3 + $0x150] sm:$0xff]
      %v1126 = vld [vmem:[%s3 + $0x158] sm:$0xff]
      %v1127 = vld [vmem:[%s3 + $0x160] sm:$0xff]
      %v1128 = vld [vmem:[%s3 + $0x168] sm:$0xff]
      %v1129 = vld [vmem:[%s3 + $0x170] sm:$0xff]
      %v1130 = vld [vmem:[%s3 + $0x178] sm:$0xff]
      %v1131 = vld [vmem:[%s3 + $0x180] sm:$0xff]
      %v1132 = vld [vmem:[%s3 + $0x188] sm:$0xff]
      %v1133 = vld [vmem:[%s3 + $0x190] sm:$0xff]
      %v1134 = vld [vmem:[%s3 + $0x198] sm:$0xff]
      %v1135 = vld [vmem:[%s3 + $0x1a0] sm:$0xff]
      %v1136 = vld [vmem:[%s3 + $0x1a8] sm:$0xff]
      %v1137 = vld [vmem:[%s3 + $0x1b0] sm:$0xff]
      %v1138 = vld [vmem:[%s3 + $0x1b8] sm:$0xff]
      %v1139 = vld [vmem:[%s3 + $0x1c0] sm:$0xff]
      %v1140 = vld [vmem:[%s3 + $0x1c8] sm:$0xff]
      %v1141 = vld [vmem:[%s3 + $0x1d0] sm:$0xff]
      %v1142 = vld [vmem:[%s3 + $0x1d8] sm:$0xff]
      %v1143 = vld [vmem:[%s3 + $0x1e0] sm:$0xff]
      %v1144 = vld [vmem:[%s3 + $0x1e8] sm:$0xff]
      %v1145 = vld [vmem:[%s3 + $0x1f0] sm:$0xff]
      %v1146 = vld [vmem:[%s3 + $0x1f8] sm:$0xff]
      %v1147 = vld [vmem:[%s3 + $0x200] sm:$0xff]
      %v1148 = vld [vmem:[%s3 + $0x208] sm:$0xff]
      %v1149 = vld [vmem:[%s3 + $0x210] sm:$0xff]
      %v1150 = vld [vmem:[%s3 + $0x218] sm:$0xff]
      %v1151 = vld [vmem:[%s3 + $0x220] sm:$0xff]
      %v1152 = vld [vmem:[%s3 + $0x228] sm:$0xff]
      %v1153 = vld [vmem:[%s3 + $0x230] sm:$0xff]
      %v1154 = vld [vmem:[%s3 + $0x238] sm:$0xff]
      %v1155 = vld [vmem:[%s3 + $0x240] sm:$0xff]
      %v1156 = vld [vmem:[%s3 + $0x248] sm:$0xff]
      %v1157 = vld [vmem:[%s3 + $0x250] sm:$0xff]
      %v1158 = vld [vmem:[%s3 + $0x258] sm:$0xff]
      %v1159 = vld [vmem:[%s3 + $0x260] sm:$0xff]
      %v1160 = vld [vmem:[%s3 + $0x268] sm:$0xff]
      %v1161 = vld [vmem:[%s3 + $0x270] sm:$0xff]
      %v1162 = vld [vmem:[%s3 + $0x278] sm:$0xff]
      %v1163 = vld [vmem:[%s3 + $0x280] sm:$0xff]
      %v1164 = vld [vmem:[%s3 + $0x288] sm:$0xff]
      %v1165 = vld [vmem:[%s3 + $0x290] sm:$0xff]
      %v1166 = vld [vmem:[%s3 + $0x298] sm:$0xff]
      %v1167 = vld [vmem:[%s3 + $0x2a0] sm:$0xff]
      %v1168 = vld [vmem:[%s3 + $0x2a8] sm:$0xff]
      %v1169 = vld [vmem:[%s3 + $0x2b0] sm:$0xff]
      %v1170 = vld [vmem:[%s3 + $0x2b8] sm:$0xff]
      %v1171 = vld [vmem:[%s3 + $0x2c0] sm:$0xff]
      %v1172 = vld [vmem:[%s3 + $0x2c8] sm:$0xff]
      %v1173 = vld [vmem:[%s3 + $0x2d0] sm:$0xff]
      %v1174 = vld [vmem:[%s3 + $0x2d8] sm:$0xff]
      %v1175 = vld [vmem:[%s3 + $0x2e0] sm:$0xff]
      %v1176 = vld [vmem:[%s3 + $0x2e8] sm:$0xff]
      %v1177 = vld [vmem:[%s3 + $0x2f0] sm:$0xff]
      %v1178 = vld [vmem:[%s3 + $0x2f8] sm:$0xff]
      %1179 = vmatpush.msra.mxu0 %v1098
      %1180 = vmatpush.msra.mxu0 %v1097
      %1181 = vmatpush.msra.mxu0 %v1096
      %1182 = vmatpush.msra.mxu0 %v1095
      %1183 = vmatpush.msra.mxu0 %v1094
      %1184 = vmatpush.msra.mxu0 %v1093
      %1185 = vmatpush.msra.mxu0 %v1092
      %1186 = vmatpush.msra.mxu0 %v1091
      %1187 = vmatpush.msra.mxu0 %v1090
      %1188 = vmatpush.msra.mxu0 %v1089
      %1189 = vmatpush.msra.mxu0 %v1088
      %1190 = vmatpush.msra.mxu0 %v1087
      %1191 = vmatpush.msra.mxu0 %v1086
      %1192 = vmatpush.msra.mxu0 %v1085
      %1193 = vmatpush.msra.mxu0 %v1084
      %1194 = vmatpush.msra.mxu0 %v1083
      %1195 = vmatmul.f32.gmra.mxu0 %v1071
      %v1196 = vpop.f32.mrf.mxu0
      %v1197 = vadd.f32 0.0, %v1196
      %1198 = vmatmul.f32.gmra.mxu0 %v1077
      %v1199 = vpop.f32.mrf.mxu0
      %v1200 = vadd.f32 0.0, %v1199
      %1201 = vdwg.mxu0
      %1202 = vmatpush.msra.mxu0 %v1114
      %1203 = vmatpush.msra.mxu0 %v1113
      %1204 = vmatpush.msra.mxu0 %v1112
      %1205 = vmatpush.msra.mxu0 %v1111
      %1206 = vmatpush.msra.mxu0 %v1110
      %1207 = vmatpush.msra.mxu0 %v1109
      %1208 = vmatpush.msra.mxu0 %v1108
      %1209 = vmatpush.msra.mxu0 %v1107
      %1210 = vmatpush.msra.mxu0 %v1106
      %1211 = vmatpush.msra.mxu0 %v1105
      %1212 = vmatpush.msra.mxu0 %v1104
      %1213 = vmatpush.msra.mxu0 %v1103
      %1214 = vmatpush.msra.mxu0 %v1102
      %1215 = vmatpush.msra.mxu0 %v1101
      %1216 = vmatpush.msra.mxu0 %v1100
      %1217 = vmatpush.msra.mxu0 %v1099
      %1218 = vmatmul.f32.gmra.mxu0 %v1072
      %v1219 = vpop.f32.mrf.mxu0
      %v1220 = vadd.f32 %v1197, %v1219
      %1221 = vmatmul.f32.gmra.mxu0 %v1078
      %v1222 = vpop.f32.mrf.mxu0
      %v1223 = vadd.f32 %v1200, %v1222
      %1224 = vdwg.mxu0
      %1225 = vmatpush.msra.mxu0 %v1130
      %1226 = vmatpush.msra.mxu0 %v1129
      %1227 = vmatpush.msra.mxu0 %v1128
      %1228 = vmatpush.msra.mxu0 %v1127
      %1229 = vmatpush.msra.mxu0 %v1126
      %1230 = vmatpush.msra.mxu0 %v1125
      %1231 = vmatpush.msra.mxu0 %v1124
      %1232 = vmatpush.msra.mxu0 %v1123
      %1233 = vmatpush.msra.mxu0 %v1122
      %1234 = vmatpush.msra.mxu0 %v1121
      %1235 = vmatpush.msra.mxu0 %v1120
      %1236 = vmatpush.msra.mxu0 %v1119
      %1237 = vmatpush.msra.mxu0 %v1118
      %1238 = vmatpush.msra.mxu0 %v1117
      %1239 = vmatpush.msra.mxu0 %v1116
      %1240 = vmatpush.msra.mxu0 %v1115
      %1241 = vmatmul.f32.gmra.mxu0 %v1073
      %v1242 = vpop.f32.mrf.mxu0
      %v1243 = vadd.f32 %v1220, %v1242
      %1244 = vmatmul.f32.gmra.mxu0 %v1079
      %v1245 = vpop.f32.mrf.mxu0
      %v1246 = vadd.f32 %v1223, %v1245
      %1247 = vdwg.mxu0
      %1248 = vmatpush.msra.mxu0 %v1146
      %1249 = vmatpush.msra.mxu0 %v1145
      %1250 = vmatpush.msra.mxu0 %v1144
      %1251 = vmatpush.msra.mxu0 %v1143
      %1252 = vmatpush.msra.mxu0 %v1142
      %1253 = vmatpush.msra.mxu0 %v1141
      %1254 = vmatpush.msra.mxu0 %v1140
      %1255 = vmatpush.msra.mxu0 %v1139
      %1256 = vmatpush.msra.mxu0 %v1138
      %1257 = vmatpush.msra.mxu0 %v1137
      %1258 = vmatpush.msra.mxu0 %v1136
      %1259 = vmatpush.msra.mxu0 %v1135
      %1260 = vmatpush.msra.mxu0 %v1134
      %1261 = vmatpush.msra.mxu0 %v1133
      %1262 = vmatpush.msra.mxu0 %v1132
      %1263 = vmatpush.msra.mxu0 %v1131
      %1264 = vmatmul.f32.gmra.mxu0 %v1074
      %v1265 = vpop.f32.mrf.mxu0
      %v1266 = vadd.f32 %v1243, %v1265
      %1267 = vmatmul.f32.gmra.mxu0 %v1080
      %v1268 = vpop.f32.mrf.mxu0
      %v1269 = vadd.f32 %v1246, %v1268
      %1270 = vdwg.mxu0
      %1271 = vmatpush.msra.mxu0 %v1162
      %1272 = vmatpush.msra.mxu0 %v1161
      %1273 = vmatpush.msra.mxu0 %v1160
      %1274 = vmatpush.msra.mxu0 %v1159
      %1275 = vmatpush.msra.mxu0 %v1158
      %1276 = vmatpush.msra.mxu0 %v1157
      %1277 = vmatpush.msra.mxu0 %v1156
      %1278 = vmatpush.msra.mxu0 %v1155
      %1279 = vmatpush.msra.mxu0 %v1154
      %1280 = vmatpush.msra.mxu0 %v1153
      %1281 = vmatpush.msra.mxu0 %v1152
      %1282 = vmatpush.msra.mxu0 %v1151
      %1283 = vmatpush.msra.mxu0 %v1150
      %1284 = vmatpush.msra.mxu0 %v1149
      %1285 = vmatpush.msra.mxu0 %v1148
      %1286 = vmatpush.msra.mxu0 %v1147
      %1287 = vmatmul.f32.gmra.mxu0 %v1075
      %v1288 = vpop.f32.mrf.mxu0
      %v1289 = vadd.f32 %v1266, %v1288
      %1290 = vmatmul.f32.gmra.mxu0 %v1081
      %v1291 = vpop.f32.mrf.mxu0
      %v1292 = vadd.f32 %v1269, %v1291
      %1293 = vdwg.mxu0
      %1294 = vmatpush.msra.mxu0 %v1178
      %1295 = vmatpush.msra.mxu0 %v1177
      %1296 = vmatpush.msra.mxu0 %v1176
      %1297 = vmatpush.msra.mxu0 %v1175
      %1298 = vmatpush.msra.mxu0 %v1174
      %1299 = vmatpush.msra.mxu0 %v1173
      %1300 = vmatpush.msra.mxu0 %v1172
      %1301 = vmatpush.msra.mxu0 %v1171
      %1302 = vmatpush.msra.mxu0 %v1170
      %1303 = vmatpush.msra.mxu0 %v1169
      %1304 = vmatpush.msra.mxu0 %v1168
      %1305 = vmatpush.msra.mxu0 %v1167
      %1306 = vmatpush.msra.mxu0 %v1166
      %1307 = vmatpush.msra.mxu0 %v1165
      %1308 = vmatpush.msra.mxu0 %v1164
      %1309 = vmatpush.msra.mxu0 %v1163
      %1310 = vmatmul.f32.gmra.mxu0 %v1076
      %v1311 = vpop.f32.mrf.mxu0
      %v1312 = vadd.f32 %v1289, %v1311
      %1313 = vmatmul.f32.gmra.mxu0 %v1082
      %v1314 = vpop.f32.mrf.mxu0
      %v1315 = vadd.f32 %v1292, %v1314
      %1316 = vdwg.mxu0
      %v1317 = vld [vmem:[%s5] sm:$0xff]
      %v1318 = vld [vmem:[%s5 + $0x8] sm:$0xff]
      %v1319 = vld [vmem:[%s5 + $0x10] sm:$0xff]
      %v1320 = vld [vmem:[%s5 + $0x18] sm:$0xff]
      %v1321 = vadd.f32 %v1312, %v1317
      %v1322 = vadd.f32 %v1315, %v1318
      %v1323 = vadd.f32 %v1319, 0.0
      %v1324 = vadd.f32 %v1320, 0.0
      %v1325 = vld [vmem:[%s9] sm:$0xff]
      %v1326 = vld [vmem:[%s9 + $0x8] sm:$0xff]
      %v1327 = vld [vmem:[%s9 + $0x10] sm:$0xff]
      %v1328 = vld [vmem:[%s9 + $0x18] sm:$0xff]
      %v1329 = vld [vmem:[%s9 + $0x20] sm:$0xff]
      %v1330 = vld [vmem:[%s9 + $0x28] sm:$0xff]
      %v1331 = vld [vmem:[%s9 + $0x30] sm:$0xff]
      %v1332 = vld [vmem:[%s9 + $0x38] sm:$0xff]
      %v1333 = vld [vmem:[%s9 + $0x40] sm:$0xff]
      %v1334 = vld [vmem:[%s9 + $0x48] sm:$0xff]
      %v1335 = vld [vmem:[%s9 + $0x50] sm:$0xff]
      %v1336 = vld [vmem:[%s9 + $0x58] sm:$0xff]
      %v1337 = vld [vmem:[%s9 + $0x60] sm:$0xff]
      %v1338 = vld [vmem:[%s9 + $0x68] sm:$0xff]
      %v1339 = vld [vmem:[%s9 + $0x70] sm:$0xff]
      %v1340 = vld [vmem:[%s9 + $0x78] sm:$0xff]
      %v1341 = vld [vmem:[%s11] sm:$0xff]
      %v1342 = vld [vmem:[%s11 + $0x8] sm:$0xff]
      %v1343 = vld [vmem:[%s11 + $0x10] sm:$0xff]
      %v1344 = vld [vmem:[%s11 + $0x18] sm:$0xff]
      %v1345 = vld [vmem:[%s11 + $0x20] sm:$0xff]
      %v1346 = vld [vmem:[%s11 + $0x28] sm:$0xff]
      %v1347 = vld [vmem:[%s11 + $0x30] sm:$0xff]
      %v1348 = vld [vmem:[%s11 + $0x38] sm:$0xff]
      %v1349 = vld [vmem:[%s11 + $0x40] sm:$0xff]
      %v1350 = vld [vmem:[%s11 + $0x48] sm:$0xff]
      %v1351 = vld [vmem:[%s11 + $0x50] sm:$0xff]
      %v1352 = vld [vmem:[%s11 + $0x58] sm:$0xff]
      %v1353 = vld [vmem:[%s11 + $0x60] sm:$0xff]
      %v1354 = vld [vmem:[%s11 + $0x68] sm:$0xff]
      %v1355 = vld [vmem:[%s11 + $0x70] sm:$0xff]
      %v1356 = vld [vmem:[%s11 + $0x78] sm:$0xff]
      %v1357 = vld [vmem:[%s7] sm:$0x1]
      %vm1358 = vcmask 261120
      %v1359 = vsel %vm1358, %v1321, 0.0
      %1360 = vadd.xlane.f32.xlu0 %v1359
      %v1361 = vpop.xlane.xlu0 %1360
      %v1362 = vsel %vm1358, %v1322, 0.0
      %1363 = vadd.xlane.f32.xlu0 %v1362
      %v1364 = vpop.xlane.xlu0 %1363
      %v1365 = vsel %vm1358, %v1323, 0.0
      %1366 = vadd.xlane.f32.xlu0 %v1365
      %v1367 = vpop.xlane.xlu0 %1366
      %v1368 = vsel %vm1358, %v1324, 0.0
      %1369 = vadd.xlane.f32.xlu0 %v1368
      %v1370 = vpop.xlane.xlu0 %1369
      %v1371 = vrcp.pop 32.0
      %v1372 = vmul.f32 32.0, %v1371
      %v1373 = vsub.f32 1.0, %v1372
      %v1374 = vmul.f32 %v1371, %v1373
      %v1375 = vadd.f32 %v1371, %v1374
      %vm1376 = vweird.f32 %v1371
      %v1377 = vsel %vm1376, %v1371, %v1375
      %v1378 = vmul.f32 %v1361, %v1377
      %v1379 = vmul.f32 %v1364, %v1377
      %v1380 = vmul.f32 %v1367, %v1377
      %v1381 = vmul.f32 %v1370, %v1377
      %v1382 = vsub.f32 %v1321, %v1378
      %v1383 = vsub.f32 %v1322, %v1379
      %v1384 = vsub.f32 %v1323, %v1380
      %v1385 = vsub.f32 %v1324, %v1381
      %v1386 = vmul.f32 %v1382, %v1382
      %v1387 = vmul.f32 %v1383, %v1383
      %v1388 = vmul.f32 %v1384, %v1384
      %v1389 = vmul.f32 %v1385, %v1385
      %v1390 = vsel %vm1358, %v1386, 0.0
      %1391 = vadd.xlane.f32.xlu0 %v1390
      %v1392 = vpop.xlane.xlu0 %1391
      %v1393 = vsel %vm1358, %v1387, 0.0
      %1394 = vadd.xlane.f32.xlu0 %v1393
      %v1395 = vpop.xlane.xlu0 %1394
      %v1396 = vsel %vm1358, %v1388, 0.0
      %1397 = vadd.xlane.f32.xlu0 %v1396
      %v1398 = vpop.xlane.xlu0 %1397
      %v1399 = vsel %vm1358, %v1389, 0.0
      %1400 = vadd.xlane.f32.xlu0 %v1399
      %v1401 = vpop.xlane.xlu0 %1400
      %v1402 = vmul.f32 %v1392, %v1377
      %v1403 = vmul.f32 %v1395, %v1377
      %v1404 = vmul.f32 %v1398, %v1377
      %v1405 = vmul.f32 %v1401, %v1377
      %v1406 = vadd.f32 %v1402, 1e-12
      %v1407 = vadd.f32 %v1403, 1e-12
      %v1408 = vadd.f32 %v1404, 1e-12
      %v1409 = vadd.f32 %v1405, 1e-12
      %v1410 = vrsqrt.pop %v1406
      %v1411 = vmul.f32 %v1410, %v1406
      %v1412 = vmul.f32 %v1411, %v1410
      %v1413 = vmul.f32 0.5, %v1412
      %v1414 = vsub.f32 1.5, %v1413
      %v1415 = vmul.f32 %v1410, %v1414
      %vm1416 = vweird.f32 %v1406
      %vm1417 = vweird.f32 %v1410
      %vm1418 = vmor %vm1416, %vm1417
      %v1419 = vsel %vm1418, %v1410, %v1415
      %v1420 = vrsqrt.pop %v1407
      %v1421 = vmul.f32 %v1420, %v1407
      %v1422 = vmul.f32 %v1421, %v1420
      %v1423 = vmul.f32 0.5, %v1422
      %v1424 = vsub.f32 1.5, %v1423
      %v1425 = vmul.f32 %v1420, %v1424
      %vm1426 = vweird.f32 %v1407
      %vm1427 = vweird.f32 %v1420
      %vm1428 = vmor %vm1426, %vm1427
      %v1429 = vsel %vm1428, %v1420, %v1425
      %v1430 = vrsqrt.pop %v1408
      %v1431 = vmul.f32 %v1430, %v1408
      %v1432 = vmul.f32 %v1431, %v1430
      %v1433 = vmul.f32 0.5, %v1432
      %v1434 = vsub.f32 1.5, %v1433
      %v1435 = vmul.f32 %v1430, %v1434
      %vm1436 = vweird.f32 %v1408
      %vm1437 = vweird.f32 %v1430
      %vm1438 = vmor %vm1436, %vm1437
      %v1439 = vsel %vm1438, %v1430, %v1435
      %v1440 = vrsqrt.pop %v1409
      %v1441 = vmul.f32 %v1440, %v1409
      %v1442 = vmul.f32 %v1441, %v1440
      %v1443 = vmul.f32 0.5, %v1442
      %v1444 = vsub.f32 1.5, %v1443
      %v1445 = vmul.f32 %v1440, %v1444
      %vm1446 = vweird.f32 %v1409
      %vm1447 = vweird.f32 %v1440
      %vm1448 = vmor %vm1446, %vm1447
      %v1449 = vsel %vm1448, %v1440, %v1445
      %v1450 = vmul.f32 %v1382, %v1419
      %v1451 = vmul.f32 %v1383, %v1429
      %v1452 = vmul.f32 %v1384, %v1439
      %v1453 = vmul.f32 %v1385, %v1449
      %v1454 = vld [vmem:[%s23] sm:$0x1]
      %v1456 = vperm.slane %v1454, 0
      %v1458 = vmul.f32 %v1450, %v1456
      %v1459 = vmul.f32 %v1451, %v1456
      %v1460 = vmul.f32 %v1452, %v1456
      %v1461 = vmul.f32 %v1453, %v1456
      %v1462 = vld [vmem:[%s25] sm:$0x1]
      %v1464 = vperm.slane %v1462, 0
      %v1466 = vadd.f32 %v1458, %v1464
      %v1467 = vadd.f32 %v1459, %v1464
      %v1468 = vadd.f32 %v1460, %v1464
      %v1469 = vadd.f32 %v1461, %v1464
      %v1470 = vld [vmem:[%s27] sm:$0xff]
      %v1471 = vld [vmem:[%s27 + $0x8] sm:$0xff]
      %v1472 = vld [vmem:[%s27 + $0x10] sm:$0xff]
      %v1473 = vld [vmem:[%s27 + $0x18] sm:$0xff]
      %v1474 = vld [vmem:[%s29] sm:$0x1]
      %v1476 = vperm.slane %v1474, 0
      %v1479 = vsel %vm1358, %v1466, 0
      %v1482 = vsel %vm1358, %v1467, 0
      %v1485 = vsel %vm1358, %v1468, 0
      %v1488 = vsel %vm1358, %v1469, 0
      %1490 = vmatpush.msra.mxu0 0.0
      %1491 = vmatpush.msra.mxu0 0.0
      %1492 = vmatpush.msra.mxu0 0.0
      %1493 = vmatpush.msra.mxu0 0.0
      %1494 = vmatpush.msra.mxu0 0.0
      %1495 = vmatpush.msra.mxu0 0.0
      %1496 = vmatpush.msra.mxu0 0.0
      %1497 = vmatpush.msra.mxu0 0.0
      %1498 = vmatpush.msra.mxu0 0.0
      %1499 = vmatpush.msra.mxu0 0.0
      %1500 = vmatpush.msra.mxu0 0.0
      %1501 = vmatpush.msra.mxu0 0.0
      %1502 = vmatpush.msra.mxu0 %v1473
      %1503 = vmatpush.msra.mxu0 %v1472
      %1504 = vmatpush.msra.mxu0 %v1471
      %1505 = vmatpush.msra.mxu0 %v1470
      %1506 = vmatmul.f32.gmra.mxu0 %v1479
      %v1507 = vpop.f32.mrf.mxu0
      %v1508 = vadd.f32 %v1476, %v1507
      %1509 = vmatmul.f32.gmra.mxu0 %v1482
      %v1510 = vpop.f32.mrf.mxu0
      %v1511 = vadd.f32 %v1476, %v1510
      %1512 = vmatmul.f32.gmra.mxu0 %v1485
      %v1513 = vpop.f32.mrf.mxu0
      %v1514 = vadd.f32 %v1476, %v1513
      %1515 = vmatmul.f32.gmra.mxu0 %v1488
      %v1516 = vpop.f32.mrf.mxu0
      %v1517 = vadd.f32 %v1476, %v1516
      %1518 = vdwg.mxu0
      %1535 = vrot.lane.b32.xlu0 %v1325, 32
      %v1536 = vpop.permute.xlu0 %1535
      %1537 = vrot.lane.b32.xlu0 %v1326, 32
      %v1538 = vpop.permute.xlu0 %1537
      %1539 = vrot.lane.b32.xlu0 %v1327, 32
      %v1540 = vpop.permute.xlu0 %1539
      %1541 = vrot.lane.b32.xlu0 %v1328, 32
      %v1542 = vpop.permute.xlu0 %1541
      %1543 = vrot.lane.b32.xlu0 %v1329, 32
      %v1544 = vpop.permute.xlu0 %1543
      %1545 = vrot.lane.b32.xlu0 %v1330, 32
      %v1546 = vpop.permute.xlu0 %1545
      %1547 = vrot.lane.b32.xlu0 %v1331, 32
      %v1548 = vpop.permute.xlu0 %1547
      %1549 = vrot.lane.b32.xlu0 %v1332, 32
      %v1550 = vpop.permute.xlu0 %1549
      %1551 = vrot.lane.b32.xlu0 %v1333, 32
      %v1552 = vpop.permute.xlu0 %1551
      %1553 = vrot.lane.b32.xlu0 %v1334, 32
      %v1554 = vpop.permute.xlu0 %1553
      %1555 = vrot.lane.b32.xlu0 %v1335, 32
      %v1556 = vpop.permute.xlu0 %1555
      %1557 = vrot.lane.b32.xlu0 %v1336, 32
      %v1558 = vpop.permute.xlu0 %1557
      %1559 = vrot.lane.b32.xlu0 %v1337, 32
      %v1560 = vpop.permute.xlu0 %1559
      %1561 = vrot.lane.b32.xlu0 %v1338, 32
      %v1562 = vpop.permute.xlu0 %1561
      %1563 = vrot.lane.b32.xlu0 %v1339, 32
      %v1564 = vpop.permute.xlu0 %1563
      %1565 = vrot.lane.b32.xlu0 %v1340, 32
      %v1566 = vpop.permute.xlu0 %1565
      %v1583 = vmul.f32 %v1508, %v1536
      %v1584 = vmul.f32 %v1511, %v1538
      %v1585 = vmul.f32 %v1514, %v1540
      %v1586 = vmul.f32 %v1517, %v1542
      %v1587 = vmul.f32 %v1508, %v1544
      %v1588 = vmul.f32 %v1511, %v1546
      %v1589 = vmul.f32 %v1514, %v1548
      %v1590 = vmul.f32 %v1517, %v1550
      %v1591 = vmul.f32 %v1508, %v1552
      %v1592 = vmul.f32 %v1511, %v1554
      %v1593 = vmul.f32 %v1514, %v1556
      %v1594 = vmul.f32 %v1517, %v1558
      %v1595 = vmul.f32 %v1508, %v1560
      %v1596 = vmul.f32 %v1511, %v1562
      %v1597 = vmul.f32 %v1514, %v1564
      %v1598 = vmul.f32 %v1517, %v1566
      %1599 = vrot.lane.b32.xlu0 %v1325, 64
      %v1600 = vpop.permute.xlu0 %1599
      %1601 = vrot.lane.b32.xlu0 %v1326, 64
      %v1602 = vpop.permute.xlu0 %1601
      %1603 = vrot.lane.b32.xlu0 %v1327, 64
      %v1604 = vpop.permute.xlu0 %1603
      %1605 = vrot.lane.b32.xlu0 %v1328, 64
      %v1606 = vpop.permute.xlu0 %1605
      %1607 = vrot.lane.b32.xlu0 %v1329, 64
      %v1608 = vpop.permute.xlu0 %1607
      %1609 = vrot.lane.b32.xlu0 %v1330, 64
      %v1610 = vpop.permute.xlu0 %1609
      %1611 = vrot.lane.b32.xlu0 %v1331, 64
      %v1612 = vpop.permute.xlu0 %1611
      %1613 = vrot.lane.b32.xlu0 %v1332, 64
      %v1614 = vpop.permute.xlu0 %1613
      %1615 = vrot.lane.b32.xlu0 %v1333, 64
      %v1616 = vpop.permute.xlu0 %1615
      %1617 = vrot.lane.b32.xlu0 %v1334, 64
      %v1618 = vpop.permute.xlu0 %1617
      %1619 = vrot.lane.b32.xlu0 %v1335, 64
      %v1620 = vpop.permute.xlu0 %1619
      %1621 = vrot.lane.b32.xlu0 %v1336, 64
      %v1622 = vpop.permute.xlu0 %1621
      %1623 = vrot.lane.b32.xlu0 %v1337, 64
      %v1624 = vpop.permute.xlu0 %1623
      %1625 = vrot.lane.b32.xlu0 %v1338, 64
      %v1626 = vpop.permute.xlu0 %1625
      %1627 = vrot.lane.b32.xlu0 %v1339, 64
      %v1628 = vpop.permute.xlu0 %1627
      %1629 = vrot.lane.b32.xlu0 %v1340, 64
      %v1630 = vpop.permute.xlu0 %1629
      %v1647 = vmul.f32 %v1508, %v1600
      %v1648 = vmul.f32 %v1511, %v1602
      %v1649 = vmul.f32 %v1514, %v1604
      %v1650 = vmul.f32 %v1517, %v1606
      %v1651 = vmul.f32 %v1508, %v1608
      %v1652 = vmul.f32 %v1511, %v1610
      %v1653 = vmul.f32 %v1514, %v1612
      %v1654 = vmul.f32 %v1517, %v1614
      %v1655 = vmul.f32 %v1508, %v1616
      %v1656 = vmul.f32 %v1511, %v1618
      %v1657 = vmul.f32 %v1514, %v1620
      %v1658 = vmul.f32 %v1517, %v1622
      %v1659 = vmul.f32 %v1508, %v1624
      %v1660 = vmul.f32 %v1511, %v1626
      %v1661 = vmul.f32 %v1514, %v1628
      %v1662 = vmul.f32 %v1517, %v1630
      %1679 = vrot.lane.b32.xlu0 %v1583, 96
      %v1680 = vpop.permute.xlu0 %1679
      %1681 = vrot.lane.b32.xlu0 %v1584, 96
      %v1682 = vpop.permute.xlu0 %1681
      %1683 = vrot.lane.b32.xlu0 %v1585, 96
      %v1684 = vpop.permute.xlu0 %1683
      %1685 = vrot.lane.b32.xlu0 %v1586, 96
      %v1686 = vpop.permute.xlu0 %1685
      %1687 = vrot.lane.b32.xlu0 %v1587, 96
      %v1688 = vpop.permute.xlu0 %1687
      %1689 = vrot.lane.b32.xlu0 %v1588, 96
      %v1690 = vpop.permute.xlu0 %1689
      %1691 = vrot.lane.b32.xlu0 %v1589, 96
      %v1692 = vpop.permute.xlu0 %1691
      %1693 = vrot.lane.b32.xlu0 %v1590, 96
      %v1694 = vpop.permute.xlu0 %1693
      %1695 = vrot.lane.b32.xlu0 %v1591, 96
      %v1696 = vpop.permute.xlu0 %1695
      %1697 = vrot.lane.b32.xlu0 %v1592, 96
      %v1698 = vpop.permute.xlu0 %1697
      %1699 = vrot.lane.b32.xlu0 %v1593, 96
      %v1700 = vpop.permute.xlu0 %1699
      %1701 = vrot.lane.b32.xlu0 %v1594, 96
      %v1702 = vpop.permute.xlu0 %1701
      %1703 = vrot.lane.b32.xlu0 %v1595, 96
      %v1704 = vpop.permute.xlu0 %1703
      %1705 = vrot.lane.b32.xlu0 %v1596, 96
      %v1706 = vpop.permute.xlu0 %1705
      %1707 = vrot.lane.b32.xlu0 %v1597, 96
      %v1708 = vpop.permute.xlu0 %1707
      %1709 = vrot.lane.b32.xlu0 %v1598, 96
      %v1710 = vpop.permute.xlu0 %1709
      %v1712 = vsel %vm1358, %v1508, 0
      %v1715 = vsel %vm1358, %v1511, 0
      %v1718 = vsel %vm1358, %v1514, 0
      %v1721 = vsel %vm1358, %v1517, 0
      %v1723 = vsel %vm1358, %v1680, 0
      %v1725 = vsel %vm1358, %v1682, 0
      %v1727 = vsel %vm1358, %v1684, 0
      %v1729 = vsel %vm1358, %v1686, 0
      %v1731 = vsel %vm1358, %v1688, 0
      %v1733 = vsel %vm1358, %v1690, 0
      %v1735 = vsel %vm1358, %v1692, 0
      %v1737 = vsel %vm1358, %v1694, 0
      %v1739 = vsel %vm1358, %v1696, 0
      %v1741 = vsel %vm1358, %v1698, 0
      %v1743 = vsel %vm1358, %v1700, 0
      %v1745 = vsel %vm1358, %v1702, 0
      %v1747 = vsel %vm1358, %v1704, 0
      %v1749 = vsel %vm1358, %v1706, 0
      %v1751 = vsel %vm1358, %v1708, 0
      %v1753 = vsel %vm1358, %v1710, 0
      %1755 = vmatpush.xpose.msra.mxu0 %v1753
      %1756 = vmatpush.xpose.msra.mxu0 %v1751
      %1757 = vmatpush.xpose.msra.mxu0 %v1749
      %1758 = vmatpush.xpose.msra.mxu0 %v1747
      %1759 = vmatpush.xpose.msra.mxu0 %v1745
      %1760 = vmatpush.xpose.msra.mxu0 %v1743
      %1761 = vmatpush.xpose.msra.mxu0 %v1741
      %1762 = vmatpush.xpose.msra.mxu0 %v1739
      %1763 = vmatpush.xpose.msra.mxu0 %v1737
      %1764 = vmatpush.xpose.msra.mxu0 %v1735
      %1765 = vmatpush.xpose.msra.mxu0 %v1733
      %1766 = vmatpush.xpose.msra.mxu0 %v1731
      %1767 = vmatpush.xpose.msra.mxu0 %v1729
      %1768 = vmatpush.xpose.msra.mxu0 %v1727
      %1769 = vmatpush.xpose.msra.mxu0 %v1725
      %1770 = vmatpush.xpose.msra.mxu0 %v1723
      %1771 = vmatmul.f32.gmra.mxu0 %v1712
      %v1772 = vpop.f32.mrf.mxu0
      %v1773 = vadd.f32 0.0, %v1772
      %1774 = vmatmul.f32.gmra.mxu0 %v1715
      %v1775 = vpop.f32.mrf.mxu0
      %v1776 = vadd.f32 0.0, %v1775
      %1777 = vmatmul.f32.gmra.mxu0 %v1718
      %v1778 = vpop.f32.mrf.mxu0
      %v1779 = vadd.f32 0.0, %v1778
      %1780 = vmatmul.f32.gmra.mxu0 %v1721
      %v1781 = vpop.f32.mrf.mxu0
      %v1782 = vadd.f32 0.0, %v1781
      %1783 = vdwg.mxu0
      %v1784 = vmul.f32 %v1773, 0.35355338
      %v1785 = vmul.f32 %v1776, 0.35355338
      %v1786 = vmul.f32 %v1779, 0.35355338
      %v1787 = vmul.f32 %v1782, 0.35355338
      %v1789 = vperm.slane %v1357, 0
      %v1791 = vadd.f32 %v1784, %v1789
      %v1792 = vadd.f32 %v1785, %v1789
      %v1793 = vadd.f32 %v1786, %v1789
      %v1794 = vadd.f32 %v1787, %v1789
      %1795 = vmax.xlane.f32.xlu0 %v1791
      %v1796 = vpop.xlane.xlu0 %1795
      %1797 = vmax.xlane.f32.xlu0 %v1792
      %v1798 = vpop.xlane.xlu0 %1797
      %1799 = vmax.xlane.f32.xlu0 %v1793
      %v1800 = vpop.xlane.xlu0 %1799
      %1801 = vmax.xlane.f32.xlu0 %v1794
      %v1802 = vpop.xlane.xlu0 %1801
      %v1803 = vsub.f32 %v1791, %v1796
      %v1804 = vsub.f32 %v1792, %v1798
      %v1805 = vsub.f32 %v1793, %v1800
      %v1806 = vsub.f32 %v1794, %v1802
      %v1807 = vmul.f32 %v1803, 1.442695
      %v1808 = vpow.pop %v1807
      %v1809 = vmul.f32 %v1804, 1.442695
      %v1810 = vpow.pop %v1809
      %v1811 = vmul.f32 %v1805, 1.442695
      %v1812 = vpow.pop %v1811
      %v1813 = vmul.f32 %v1806, 1.442695
      %v1814 = vpow.pop %v1813
      %1815 = vmatpush.msra.mxu0 %v1356
      %1816 = vmatpush.msra.mxu0 %v1355
      %1817 = vmatpush.msra.mxu0 %v1354
      %1818 = vmatpush.msra.mxu0 %v1353
      %1819 = vmatpush.msra.mxu0 %v1352
      %1820 = vmatpush.msra.mxu0 %v1351
      %1821 = vmatpush.msra.mxu0 %v1350
      %1822 = vmatpush.msra.mxu0 %v1349
      %1823 = vmatpush.msra.mxu0 %v1348
      %1824 = vmatpush.msra.mxu0 %v1347
      %1825 = vmatpush.msra.mxu0 %v1346
      %1826 = vmatpush.msra.mxu0 %v1345
      %1827 = vmatpush.msra.mxu0 %v1344
      %1828 = vmatpush.msra.mxu0 %v1343
      %1829 = vmatpush.msra.mxu0 %v1342
      %1830 = vmatpush.msra.mxu0 %v1341
      %1831 = vmatmul.f32.gmra.mxu0 %v1808
      %v1832 = vpop.f32.mrf.mxu0
      %v1833 = vadd.f32 0.0, %v1832
      %1834 = vmatmul.f32.gmra.mxu0 %v1810
      %v1835 = vpop.f32.mrf.mxu0
      %v1836 = vadd.f32 0.0, %v1835
      %1837 = vmatmul.f32.gmra.mxu0 %v1812
      %v1838 = vpop.f32.mrf.mxu0
      %v1839 = vadd.f32 0.0, %v1838
      %1840 = vmatmul.f32.gmra.mxu0 %v1814
      %v1841 = vpop.f32.mrf.mxu0
      %v1842 = vadd.f32 0.0, %v1841
      %1843 = vdwg.mxu0
      %v1844 = vrcp.pop %v1833
      %v1845 = vrcp.pop %v1836
      %v1846 = vrcp.pop %v1839
      %v1847 = vrcp.pop %v1842
      %v1848 = vmul.f32 %v1808, %v1844
      %v1849 = vmul.f32 %v1810, %v1845
      %v1850 = vmul.f32 %v1812, %v1846
      %v1851 = vmul.f32 %v1814, %v1847
      %1868 = vrot.lane.b32.xlu0 %v1647, 64
      %v1869 = vpop.permute.xlu0 %1868
      %1870 = vrot.lane.b32.xlu0 %v1648, 64
      %v1871 = vpop.permute.xlu0 %1870
      %1872 = vrot.lane.b32.xlu0 %v1649, 64
      %v1873 = vpop.permute.xlu0 %1872
      %1874 = vrot.lane.b32.xlu0 %v1650, 64
      %v1875 = vpop.permute.xlu0 %1874
      %1876 = vrot.lane.b32.xlu0 %v1651, 64
      %v1877 = vpop.permute.xlu0 %1876
      %1878 = vrot.lane.b32.xlu0 %v1652, 64
      %v1879 = vpop.permute.xlu0 %1878
      %1880 = vrot.lane.b32.xlu0 %v1653, 64
      %v1881 = vpop.permute.xlu0 %1880
      %1882 = vrot.lane.b32.xlu0 %v1654, 64
      %v1883 = vpop.permute.xlu0 %1882
      %1884 = vrot.lane.b32.xlu0 %v1655, 64
      %v1885 = vpop.permute.xlu0 %1884
      %1886 = vrot.lane.b32.xlu0 %v1656, 64
      %v1887 = vpop.permute.xlu0 %1886
      %1888 = vrot.lane.b32.xlu0 %v1657, 64
      %v1889 = vpop.permute.xlu0 %1888
      %1890 = vrot.lane.b32.xlu0 %v1658, 64
      %v1891 = vpop.permute.xlu0 %1890
      %1892 = vrot.lane.b32.xlu0 %v1659, 64
      %v1893 = vpop.permute.xlu0 %1892
      %1894 = vrot.lane.b32.xlu0 %v1660, 64
      %v1895 = vpop.permute.xlu0 %1894
      %1896 = vrot.lane.b32.xlu0 %v1661, 64
      %v1897 = vpop.permute.xlu0 %1896
      %1898 = vrot.lane.b32.xlu0 %v1662, 64
      %v1899 = vpop.permute.xlu0 %1898
      %1916 = vmatpush.msra.mxu0 %v1899
      %1917 = vmatpush.msra.mxu0 %v1897
      %1918 = vmatpush.msra.mxu0 %v1895
      %1919 = vmatpush.msra.mxu0 %v1893
      %1920 = vmatpush.msra.mxu0 %v1891
      %1921 = vmatpush.msra.mxu0 %v1889
      %1922 = vmatpush.msra.mxu0 %v1887
      %1923 = vmatpush.msra.mxu0 %v1885
      %1924 = vmatpush.msra.mxu0 %v1883
      %1925 = vmatpush.msra.mxu0 %v1881
      %1926 = vmatpush.msra.mxu0 %v1879
      %1927 = vmatpush.msra.mxu0 %v1877
      %1928 = vmatpush.msra.mxu0 %v1875
      %1929 = vmatpush.msra.mxu0 %v1873
      %1930 = vmatpush.msra.mxu0 %v1871
      %1931 = vmatpush.msra.mxu0 %v1869
      %1932 = vmatmul.f32.gmra.mxu0 %v1848
      %v1933 = vpop.f32.mrf.mxu0
      %v1934 = vadd.f32 0.0, %v1933
      %1935 = vmatmul.f32.gmra.mxu0 %v1849
      %v1936 = vpop.f32.mrf.mxu0
      %v1937 = vadd.f32 0.0, %v1936
      %1938 = vmatmul.f32.gmra.mxu0 %v1850
      %v1939 = vpop.f32.mrf.mxu0
      %v1940 = vadd.f32 0.0, %v1939
      %1941 = vmatmul.f32.gmra.mxu0 %v1851
      %v1942 = vpop.f32.mrf.mxu0
      %v1943 = vadd.f32 0.0, %v1942
      %1944 = vdwg.mxu0
      %v1945 = vld [vmem:[%s31] sm:$0xff]
      %v1946 = vld [vmem:[%s31 + $0x8] sm:$0xff]
      %v1947 = vld [vmem:[%s31 + $0x10] sm:$0xff]
      %v1948 = vld [vmem:[%s31 + $0x18] sm:$0xff]
      %v1950 = vsel %vm1358, %v1934, 0
      %v1953 = vsel %vm1358, %v1937, 0
      %v1956 = vsel %vm1358, %v1940, 0
      %v1959 = vsel %vm1358, %v1943, 0
      %1961 = vmatpush.msra.mxu0 0.0
      %1962 = vmatpush.msra.mxu0 0.0
      %1963 = vmatpush.msra.mxu0 0.0
      %1964 = vmatpush.msra.mxu0 0.0
      %1965 = vmatpush.msra.mxu0 0.0
      %1966 = vmatpush.msra.mxu0 0.0
      %1967 = vmatpush.msra.mxu0 0.0
      %1968 = vmatpush.msra.mxu0 0.0
      %1969 = vmatpush.msra.mxu0 0.0
      %1970 = vmatpush.msra.mxu0 0.0
      %1971 = vmatpush.msra.mxu0 0.0
      %1972 = vmatpush.msra.mxu0 0.0
      %1973 = vmatpush.msra.mxu0 %v1948
      %1974 = vmatpush.msra.mxu0 %v1947
      %1975 = vmatpush.msra.mxu0 %v1946
      %1976 = vmatpush.msra.mxu0 %v1945
      %1977 = vmatmul.f32.gmra.mxu0 %v1950
      %v1978 = vpop.f32.mrf.mxu0
      %v1979 = vadd.f32 0.0, %v1978
      %1980 = vmatmul.f32.gmra.mxu0 %v1953
      %v1981 = vpop.f32.mrf.mxu0
      %v1982 = vadd.f32 0.0, %v1981
      %1983 = vmatmul.f32.gmra.mxu0 %v1956
      %v1984 = vpop.f32.mrf.mxu0
      %v1985 = vadd.f32 0.0, %v1984
      %1986 = vmatmul.f32.gmra.mxu0 %v1959
      %v1987 = vpop.f32.mrf.mxu0
      %v1988 = vadd.f32 0.0, %v1987
      %1989 = vdwg.mxu0
      %v1990 = vadd.f32 %v1321, %v1979
      %v1991 = vadd.f32 %v1322, %v1982
      %v1992 = vadd.f32 %v1323, %v1985
      %v1993 = vadd.f32 %v1324, %v1988
      %v1994 = vld [vmem:[%s33] sm:$0x1]
      %v1996 = vperm.slane %v1994, 0
      %v1998 = vadd.f32 %v1990, %v1996
      %v1999 = vadd.f32 %v1991, %v1996
      %v2000 = vadd.f32 %v1992, %v1996
      %v2001 = vadd.f32 %v1993, %v1996
      %v2002 = vsel %vm1358, %v1998, 0.0
      %2003 = vadd.xlane.f32.xlu0 %v2002
      %v2004 = vpop.xlane.xlu0 %2003
      %v2005 = vsel %vm1358, %v1999, 0.0
      %2006 = vadd.xlane.f32.xlu0 %v2005
      %v2007 = vpop.xlane.xlu0 %2006
      %v2008 = vsel %vm1358, %v2000, 0.0
      %2009 = vadd.xlane.f32.xlu0 %v2008
      %v2010 = vpop.xlane.xlu0 %2009
      %v2011 = vsel %vm1358, %v2001, 0.0
      %2012 = vadd.xlane.f32.xlu0 %v2011
      %v2013 = vpop.xlane.xlu0 %2012
      %v2014 = vmul.f32 %v2004, %v1377
      %v2015 = vmul.f32 %v2007, %v1377
      %v2016 = vmul.f32 %v2010, %v1377
      %v2017 = vmul.f32 %v2013, %v1377
      %v2018 = vsub.f32 %v1998, %v2014
      %v2019 = vsub.f32 %v1999, %v2015
      %v2020 = vsub.f32 %v2000, %v2016
      %v2021 = vsub.f32 %v2001, %v2017
      %v2022 = vmul.f32 %v2018, %v2018
      %v2023 = vmul.f32 %v2019, %v2019
      %v2024 = vmul.f32 %v2020, %v2020
      %v2025 = vmul.f32 %v2021, %v2021
      %v2026 = vsel %vm1358, %v2022, 0.0
      %2027 = vadd.xlane.f32.xlu0 %v2026
      %v2028 = vpop.xlane.xlu0 %2027
      %v2029 = vsel %vm1358, %v2023, 0.0
      %2030 = vadd.xlane.f32.xlu0 %v2029
      %v2031 = vpop.xlane.xlu0 %2030
      %v2032 = vsel %vm1358, %v2024, 0.0
      %2033 = vadd.xlane.f32.xlu0 %v2032
      %v2034 = vpop.xlane.xlu0 %2033
      %v2035 = vsel %vm1358, %v2025, 0.0
      %2036 = vadd.xlane.f32.xlu0 %v2035
      %v2037 = vpop.xlane.xlu0 %2036
      %v2038 = vmul.f32 %v2028, %v1377
      %v2039 = vmul.f32 %v2031, %v1377
      %v2040 = vmul.f32 %v2034, %v1377
      %v2041 = vmul.f32 %v2037, %v1377
      %v2042 = vadd.f32 %v2038, 1e-12
      %v2043 = vadd.f32 %v2039, 1e-12
      %v2044 = vadd.f32 %v2040, 1e-12
      %v2045 = vadd.f32 %v2041, 1e-12
      %v2046 = vrsqrt.pop %v2042
      %v2047 = vmul.f32 %v2046, %v2042
      %v2048 = vmul.f32 %v2047, %v2046
      %v2049 = vmul.f32 0.5, %v2048
      %v2050 = vsub.f32 1.5, %v2049
      %v2051 = vmul.f32 %v2046, %v2050
      %vm2052 = vweird.f32 %v2042
      %vm2053 = vweird.f32 %v2046
      %vm2054 = vmor %vm2052, %vm2053
      %v2055 = vsel %vm2054, %v2046, %v2051
      %v2056 = vrsqrt.pop %v2043
      %v2057 = vmul.f32 %v2056, %v2043
      %v2058 = vmul.f32 %v2057, %v2056
      %v2059 = vmul.f32 0.5, %v2058
      %v2060 = vsub.f32 1.5, %v2059
      %v2061 = vmul.f32 %v2056, %v2060
      %vm2062 = vweird.f32 %v2043
      %vm2063 = vweird.f32 %v2056
      %vm2064 = vmor %vm2062, %vm2063
      %v2065 = vsel %vm2064, %v2056, %v2061
      %v2066 = vrsqrt.pop %v2044
      %v2067 = vmul.f32 %v2066, %v2044
      %v2068 = vmul.f32 %v2067, %v2066
      %v2069 = vmul.f32 0.5, %v2068
      %v2070 = vsub.f32 1.5, %v2069
      %v2071 = vmul.f32 %v2066, %v2070
      %vm2072 = vweird.f32 %v2044
      %vm2073 = vweird.f32 %v2066
      %vm2074 = vmor %vm2072, %vm2073
      %v2075 = vsel %vm2074, %v2066, %v2071
      %v2076 = vrsqrt.pop %v2045
      %v2077 = vmul.f32 %v2076, %v2045
      %v2078 = vmul.f32 %v2077, %v2076
      %v2079 = vmul.f32 0.5, %v2078
      %v2080 = vsub.f32 1.5, %v2079
      %v2081 = vmul.f32 %v2076, %v2080
      %vm2082 = vweird.f32 %v2045
      %vm2083 = vweird.f32 %v2076
      %vm2084 = vmor %vm2082, %vm2083
      %v2085 = vsel %vm2084, %v2076, %v2081
      %v2086 = vmul.f32 %v2018, %v2055
      %v2087 = vmul.f32 %v2019, %v2065
      %v2088 = vmul.f32 %v2020, %v2075
      %v2089 = vmul.f32 %v2021, %v2085
      %v2090 = vld [vmem:[%s35] sm:$0x1]
      %v2092 = vperm.slane %v2090, 0
      %v2094 = vmul.f32 %v2086, %v2092
      %v2095 = vmul.f32 %v2087, %v2092
      %v2096 = vmul.f32 %v2088, %v2092
      %v2097 = vmul.f32 %v2089, %v2092
      %v2098 = vld [vmem:[%s37] sm:$0x1]
      %v2100 = vperm.slane %v2098, 0
      %v2102 = vadd.f32 %v2094, %v2100
      %v2103 = vadd.f32 %v2095, %v2100
      %v2104 = vadd.f32 %v2096, %v2100
      %v2105 = vadd.f32 %v2097, %v2100
      %v2106 = vld [vmem:[%s39] sm:$0xff]
      %v2107 = vld [vmem:[%s39 + $0x8] sm:$0xff]
      %v2108 = vld [vmem:[%s39 + $0x10] sm:$0xff]
      %v2109 = vld [vmem:[%s39 + $0x18] sm:$0xff]
      %v2110 = vld [vmem:[%s41] sm:$0x1]
      %v2112 = vperm.slane %v2110, 0
      %v2115 = vsel %vm1358, %v2102, 0
      %v2118 = vsel %vm1358, %v2103, 0
      %v2121 = vsel %vm1358, %v2104, 0
      %v2124 = vsel %vm1358, %v2105, 0
      %2126 = vmatpush.msra.mxu0 0.0
      %2127 = vmatpush.msra.mxu0 0.0
      %2128 = vmatpush.msra.mxu0 0.0
      %2129 = vmatpush.msra.mxu0 0.0
      %2130 = vmatpush.msra.mxu0 0.0
      %2131 = vmatpush.msra.mxu0 0.0
      %2132 = vmatpush.msra.mxu0 0.0
      %2133 = vmatpush.msra.mxu0 0.0
      %2134 = vmatpush.msra.mxu0 0.0
      %2135 = vmatpush.msra.mxu0 0.0
      %2136 = vmatpush.msra.mxu0 0.0
      %2137 = vmatpush.msra.mxu0 0.0
      %2138 = vmatpush.msra.mxu0 %v2109
      %2139 = vmatpush.msra.mxu0 %v2108
      %2140 = vmatpush.msra.mxu0 %v2107
      %2141 = vmatpush.msra.mxu0 %v2106
      %2142 = vmatmul.f32.gmra.mxu0 %v2115
      %v2143 = vpop.f32.mrf.mxu0
      %v2144 = vadd.f32 %v2112, %v2143
      %2145 = vmatmul.f32.gmra.mxu0 %v2118
      %v2146 = vpop.f32.mrf.mxu0
      %v2147 = vadd.f32 %v2112, %v2146
      %2148 = vmatmul.f32.gmra.mxu0 %v2121
      %v2149 = vpop.f32.mrf.mxu0
      %v2150 = vadd.f32 %v2112, %v2149
      %2151 = vmatmul.f32.gmra.mxu0 %v2124
      %v2152 = vpop.f32.mrf.mxu0
      %v2153 = vadd.f32 %v2112, %v2152
      %2154 = vdwg.mxu0
      %v2155 = vmul.f32 %v2144, 0.5
      %v2156 = vmul.f32 %v2147, 0.5
      %v2157 = vmul.f32 %v2150, 0.5
      %v2158 = vmul.f32 %v2153, 0.5
      %v2159 = vmul.f32 %v2144, 0.044715
      %v2160 = vmul.f32 %v2147, 0.044715
      %v2161 = vmul.f32 %v2150, 0.044715
      %v2162 = vmul.f32 %v2153, 0.044715
      %v2163 = vmul.f32 %v2159, %v2144
      %v2164 = vmul.f32 %v2160, %v2147
      %v2165 = vmul.f32 %v2161, %v2150
      %v2166 = vmul.f32 %v2162, %v2153
      %v2167 = vmul.f32 %v2163, %v2144
      %v2168 = vmul.f32 %v2164, %v2147
      %v2169 = vmul.f32 %v2165, %v2150
      %v2170 = vmul.f32 %v2166, %v2153
      %v2171 = vadd.f32 %v2144, %v2167
      %v2172 = vadd.f32 %v2147, %v2168
      %v2173 = vadd.f32 %v2150, %v2169
      %v2174 = vadd.f32 %v2153, %v2170
      %v2175 = vmul.f32 %v2171, 0.7978846
      %v2176 = vmul.f32 %v2172, 0.7978846
      %v2177 = vmul.f32 %v2173, 0.7978846
      %v2178 = vmul.f32 %v2174, 0.7978846
      %v2179 = vtanh.pop %v2175
      %v2180 = vtanh.pop %v2176
      %v2181 = vtanh.pop %v2177
      %v2182 = vtanh.pop %v2178
      %v2183 = vadd.f32 %v2179, 1.0
      %v2184 = vadd.f32 %v2180, 1.0
      %v2185 = vadd.f32 %v2181, 1.0
      %v2186 = vadd.f32 %v2182, 1.0
      %v2187 = vmul.f32 %v2155, %v2183
      %v2188 = vmul.f32 %v2156, %v2184
      %v2189 = vmul.f32 %v2157, %v2185
      %v2190 = vmul.f32 %v2158, %v2186
      %v2191 = vld [vmem:[%s43] sm:$0xff]
      %v2192 = vld [vmem:[%s43 + $0x8] sm:$0xff]
      %v2193 = vld [vmem:[%s43 + $0x10] sm:$0xff]
      %v2194 = vld [vmem:[%s43 + $0x18] sm:$0xff]
      %v2195 = vld [vmem:[%s43 + $0x20] sm:$0xff]
      %v2196 = vld [vmem:[%s43 + $0x28] sm:$0xff]
      %v2197 = vld [vmem:[%s43 + $0x30] sm:$0xff]
      %v2198 = vld [vmem:[%s43 + $0x38] sm:$0xff]
      %v2199 = vld [vmem:[%s43 + $0x40] sm:$0xff]
      %v2200 = vld [vmem:[%s43 + $0x48] sm:$0xff]
      %v2201 = vld [vmem:[%s43 + $0x50] sm:$0xff]
      %v2202 = vld [vmem:[%s43 + $0x58] sm:$0xff]
      %v2203 = vld [vmem:[%s43 + $0x60] sm:$0xff]
      %v2204 = vld [vmem:[%s43 + $0x68] sm:$0xff]
      %v2205 = vld [vmem:[%s43 + $0x70] sm:$0xff]
      %v2206 = vld [vmem:[%s43 + $0x78] sm:$0xff]
      %2207 = vmatpush.msra.mxu0 %v2206
      %2208 = vmatpush.msra.mxu0 %v2205
      %2209 = vmatpush.msra.mxu0 %v2204
      %2210 = vmatpush.msra.mxu0 %v2203
      %2211 = vmatpush.msra.mxu0 %v2202
      %2212 = vmatpush.msra.mxu0 %v2201
      %2213 = vmatpush.msra.mxu0 %v2200
      %2214 = vmatpush.msra.mxu0 %v2199
      %2215 = vmatpush.msra.mxu0 %v2198
      %2216 = vmatpush.msra.mxu0 %v2197
      %2217 = vmatpush.msra.mxu0 %v2196
      %2218 = vmatpush.msra.mxu0 %v2195
      %2219 = vmatpush.msra.mxu0 %v2194
      %2220 = vmatpush.msra.mxu0 %v2193
      %2221 = vmatpush.msra.mxu0 %v2192
      %2222 = vmatpush.msra.mxu0 %v2191
      %2223 = vmatmul.f32.gmra.mxu0 %v2187
      %v2224 = vpop.f32.mrf.mxu0
      %v2225 = vadd.f32 0.0, %v2224
      %2226 = vmatmul.f32.gmra.mxu0 %v2188
      %v2227 = vpop.f32.mrf.mxu0
      %v2228 = vadd.f32 0.0, %v2227
      %2229 = vmatmul.f32.gmra.mxu0 %v2189
      %v2230 = vpop.f32.mrf.mxu0
      %v2231 = vadd.f32 0.0, %v2230
      %2232 = vmatmul.f32.gmra.mxu0 %v2190
      %v2233 = vpop.f32.mrf.mxu0
      %v2234 = vadd.f32 0.0, %v2233
      %2235 = vdwg.mxu0
      %v2236 = vadd.f32 %v1998, %v2225
      %v2237 = vadd.f32 %v1999, %v2228
      %v2238 = vadd.f32 %v2000, %v2231
      %v2239 = vadd.f32 %v2001, %v2234
      %v2240 = vld [vmem:[%s45] sm:$0x1]
      %v2242 = vperm.slane %v2240, 0
      %v2244 = vadd.f32 %v2236, %v2242
      %v2245 = vadd.f32 %v2237, %v2242
      %v2246 = vadd.f32 %v2238, %v2242
      %v2247 = vadd.f32 %v2239, %v2242
      %v2248 = vsel %vm1358, %v2244, 0.0
      %2249 = vadd.xlane.f32.xlu0 %v2248
      %v2250 = vpop.xlane.xlu0 %2249
      %v2251 = vsel %vm1358, %v2245, 0.0
      %2252 = vadd.xlane.f32.xlu0 %v2251
      %v2253 = vpop.xlane.xlu0 %2252
      %v2254 = vsel %vm1358, %v2246, 0.0
      %2255 = vadd.xlane.f32.xlu0 %v2254
      %v2256 = vpop.xlane.xlu0 %2255
      %v2257 = vsel %vm1358, %v2247, 0.0
      %2258 = vadd.xlane.f32.xlu0 %v2257
      %v2259 = vpop.xlane.xlu0 %2258
      %v2260 = vmul.f32 %v2250, %v1377
      %v2261 = vmul.f32 %v2253, %v1377
      %v2262 = vmul.f32 %v2256, %v1377
      %v2263 = vmul.f32 %v2259, %v1377
      %v2264 = vsub.f32 %v2244, %v2260
      %v2265 = vsub.f32 %v2245, %v2261
      %v2266 = vsub.f32 %v2246, %v2262
      %v2267 = vsub.f32 %v2247, %v2263
      %v2268 = vmul.f32 %v2264, %v2264
      %v2269 = vmul.f32 %v2265, %v2265
      %v2270 = vmul.f32 %v2266, %v2266
      %v2271 = vmul.f32 %v2267, %v2267
      %v2272 = vsel %vm1358, %v2268, 0.0
      %2273 = vadd.xlane.f32.xlu0 %v2272
      %v2274 = vpop.xlane.xlu0 %2273
      %v2275 = vsel %vm1358, %v2269, 0.0
      %2276 = vadd.xlane.f32.xlu0 %v2275
      %v2277 = vpop.xlane.xlu0 %2276
      %v2278 = vsel %vm1358, %v2270, 0.0
      %2279 = vadd.xlane.f32.xlu0 %v2278
      %v2280 = vpop.xlane.xlu0 %2279
      %v2281 = vsel %vm1358, %v2271, 0.0
      %2282 = vadd.xlane.f32.xlu0 %v2281
      %v2283 = vpop.xlane.xlu0 %2282
      %v2284 = vmul.f32 %v2274, %v1377
      %v2285 = vmul.f32 %v2277, %v1377
      %v2286 = vmul.f32 %v2280, %v1377
      %v2287 = vmul.f32 %v2283, %v1377
      %v2288 = vadd.f32 %v2284, 1e-12
      %v2289 = vadd.f32 %v2285, 1e-12
      %v2290 = vadd.f32 %v2286, 1e-12
      %v2291 = vadd.f32 %v2287, 1e-12
      %v2292 = vrsqrt.pop %v2288
      %v2293 = vmul.f32 %v2292, %v2288
      %v2294 = vmul.f32 %v2293, %v2292
      %v2295 = vmul.f32 0.5, %v2294
      %v2296 = vsub.f32 1.5, %v2295
      %v2297 = vmul.f32 %v2292, %v2296
      %vm2298 = vweird.f32 %v2288
      %vm2299 = vweird.f32 %v2292
      %vm2300 = vmor %vm2298, %vm2299
      %v2301 = vsel %vm2300, %v2292, %v2297
      %v2302 = vrsqrt.pop %v2289
      %v2303 = vmul.f32 %v2302, %v2289
      %v2304 = vmul.f32 %v2303, %v2302
      %v2305 = vmul.f32 0.5, %v2304
      %v2306 = vsub.f32 1.5, %v2305
      %v2307 = vmul.f32 %v2302, %v2306
      %vm2308 = vweird.f32 %v2289
      %vm2309 = vweird.f32 %v2302
      %vm2310 = vmor %vm2308, %vm2309
      %v2311 = vsel %vm2310, %v2302, %v2307
      %v2312 = vrsqrt.pop %v2290
      %v2313 = vmul.f32 %v2312, %v2290
      %v2314 = vmul.f32 %v2313, %v2312
      %v2315 = vmul.f32 0.5, %v2314
      %v2316 = vsub.f32 1.5, %v2315
      %v2317 = vmul.f32 %v2312, %v2316
      %vm2318 = vweird.f32 %v2290
      %vm2319 = vweird.f32 %v2312
      %vm2320 = vmor %vm2318, %vm2319
      %v2321 = vsel %vm2320, %v2312, %v2317
      %v2322 = vrsqrt.pop %v2291
      %v2323 = vmul.f32 %v2322, %v2291
      %v2324 = vmul.f32 %v2323, %v2322
      %v2325 = vmul.f32 0.5, %v2324
      %v2326 = vsub.f32 1.5, %v2325
      %v2327 = vmul.f32 %v2322, %v2326
      %vm2328 = vweird.f32 %v2291
      %vm2329 = vweird.f32 %v2322
      %vm2330 = vmor %vm2328, %vm2329
      %v2331 = vsel %vm2330, %v2322, %v2327
      %v2332 = vmul.f32 %v2264, %v2301
      %v2333 = vmul.f32 %v2265, %v2311
      %v2334 = vmul.f32 %v2266, %v2321
      %v2335 = vmul.f32 %v2267, %v2331
      %v2336 = vld [vmem:[%s47] sm:$0x1]
      %v2338 = vperm.slane %v2336, 0
      %v2340 = vmul.f32 %v2332, %v2338
      %v2341 = vmul.f32 %v2333, %v2338
      %v2342 = vmul.f32 %v2334, %v2338
      %v2343 = vmul.f32 %v2335, %v2338
      %v2344 = vld [vmem:[%s49] sm:$0x1]
      %v2346 = vperm.slane %v2344, 0
      %v2348 = vadd.f32 %v2340, %v2346
      %v2349 = vadd.f32 %v2341, %v2346
      %v2350 = vadd.f32 %v2342, %v2346
      %v2351 = vadd.f32 %v2343, %v2346
      %v2352 = vld [vmem:[%s51] sm:$0xff]
      %v2353 = vld [vmem:[%s51 + $0x8] sm:$0xff]
      %v2354 = vld [vmem:[%s51 + $0x10] sm:$0xff]
      %v2355 = vld [vmem:[%s51 + $0x18] sm:$0xff]
      %v2356 = vld [vmem:[%s53] sm:$0x1]
      %v2358 = vperm.slane %v2356, 0
      %v2361 = vsel %vm1358, %v2348, 0
      %v2364 = vsel %vm1358, %v2349, 0
      %v2367 = vsel %vm1358, %v2350, 0
      %v2370 = vsel %vm1358, %v2351, 0
      %2372 = vmatpush.msra.mxu0 0.0
      %2373 = vmatpush.msra.mxu0 0.0
      %2374 = vmatpush.msra.mxu0 0.0
      %2375 = vmatpush.msra.mxu0 0.0
      %2376 = vmatpush.msra.mxu0 0.0
      %2377 = vmatpush.msra.mxu0 0.0
      %2378 = vmatpush.msra.mxu0 0.0
      %2379 = vmatpush.msra.mxu0 0.0
      %2380 = vmatpush.msra.mxu0 0.0
      %2381 = vmatpush.msra.mxu0 0.0
      %2382 = vmatpush.msra.mxu0 0.0
      %2383 = vmatpush.msra.mxu0 0.0
      %2384 = vmatpush.msra.mxu0 %v2355
      %2385 = vmatpush.msra.mxu0 %v2354
      %2386 = vmatpush.msra.mxu0 %v2353
      %2387 = vmatpush.msra.mxu0 %v2352
      %2388 = vmatmul.f32.gmra.mxu0 %v2361
      %v2389 = vpop.f32.mrf.mxu0
      %v2390 = vadd.f32 %v2358, %v2389
      %2391 = vmatmul.f32.gmra.mxu0 %v2364
      %v2392 = vpop.f32.mrf.mxu0
      %v2393 = vadd.f32 %v2358, %v2392
      %2394 = vmatmul.f32.gmra.mxu0 %v2367
      %v2395 = vpop.f32.mrf.mxu0
      %v2396 = vadd.f32 %v2358, %v2395
      %2397 = vmatmul.f32.gmra.mxu0 %v2370
      %v2398 = vpop.f32.mrf.mxu0
      %v2399 = vadd.f32 %v2358, %v2398
      %2400 = vdwg.mxu0
      %v2401 = vmul.f32 %v2390, %v1536
      %v2402 = vmul.f32 %v2393, %v1538
      %v2403 = vmul.f32 %v2396, %v1540
      %v2404 = vmul.f32 %v2399, %v1542
      %v2405 = vmul.f32 %v2390, %v1544
      %v2406 = vmul.f32 %v2393, %v1546
      %v2407 = vmul.f32 %v2396, %v1548
      %v2408 = vmul.f32 %v2399, %v1550
      %v2409 = vmul.f32 %v2390, %v1552
      %v2410 = vmul.f32 %v2393, %v1554
      %v2411 = vmul.f32 %v2396, %v1556
      %v2412 = vmul.f32 %v2399, %v1558
      %v2413 = vmul.f32 %v2390, %v1560
      %v2414 = vmul.f32 %v2393, %v1562
      %v2415 = vmul.f32 %v2396, %v1564
      %v2416 = vmul.f32 %v2399, %v1566
      %v2417 = vmul.f32 %v2390, %v1600
      %v2418 = vmul.f32 %v2393, %v1602
      %v2419 = vmul.f32 %v2396, %v1604
      %v2420 = vmul.f32 %v2399, %v1606
      %v2421 = vmul.f32 %v2390, %v1608
      %v2422 = vmul.f32 %v2393, %v1610
      %v2423 = vmul.f32 %v2396, %v1612
      %v2424 = vmul.f32 %v2399, %v1614
      %v2425 = vmul.f32 %v2390, %v1616
      %v2426 = vmul.f32 %v2393, %v1618
      %v2427 = vmul.f32 %v2396, %v1620
      %v2428 = vmul.f32 %v2399, %v1622
      %v2429 = vmul.f32 %v2390, %v1624
      %v2430 = vmul.f32 %v2393, %v1626
      %v2431 = vmul.f32 %v2396, %v1628
      %v2432 = vmul.f32 %v2399, %v1630
      %2449 = vrot.lane.b32.xlu0 %v2401, 96
      %v2450 = vpop.permute.xlu0 %2449
      %2451 = vrot.lane.b32.xlu0 %v2402, 96
      %v2452 = vpop.permute.xlu0 %2451
      %2453 = vrot.lane.b32.xlu0 %v2403, 96
      %v2454 = vpop.permute.xlu0 %2453
      %2455 = vrot.lane.b32.xlu0 %v2404, 96
      %v2456 = vpop.permute.xlu0 %2455
      %2457 = vrot.lane.b32.xlu0 %v2405, 96
      %v2458 = vpop.permute.xlu0 %2457
      %2459 = vrot.lane.b32.xlu0 %v2406, 96
      %v2460 = vpop.permute.xlu0 %2459
      %2461 = vrot.lane.b32.xlu0 %v2407, 96
      %v2462 = vpop.permute.xlu0 %2461
      %2463 = vrot.lane.b32.xlu0 %v2408, 96
      %v2464 = vpop.permute.xlu0 %2463
      %2465 = vrot.lane.b32.xlu0 %v2409, 96
      %v2466 = vpop.permute.xlu0 %2465
      %2467 = vrot.lane.b32.xlu0 %v2410, 96
      %v2468 = vpop.permute.xlu0 %2467
      %2469 = vrot.lane.b32.xlu0 %v2411, 96
      %v2470 = vpop.permute.xlu0 %2469
      %2471 = vrot.lane.b32.xlu0 %v2412, 96
      %v2472 = vpop.permute.xlu0 %2471
      %2473 = vrot.lane.b32.xlu0 %v2413, 96
      %v2474 = vpop.permute.xlu0 %2473
      %2475 = vrot.lane.b32.xlu0 %v2414, 96
      %v2476 = vpop.permute.xlu0 %2475
      %2477 = vrot.lane.b32.xlu0 %v2415, 96
      %v2478 = vpop.permute.xlu0 %2477
      %2479 = vrot.lane.b32.xlu0 %v2416, 96
      %v2480 = vpop.permute.xlu0 %2479
      %v2482 = vsel %vm1358, %v2390, 0
      %v2485 = vsel %vm1358, %v2393, 0
      %v2488 = vsel %vm1358, %v2396, 0
      %v2491 = vsel %vm1358, %v2399, 0
      %v2493 = vsel %vm1358, %v2450, 0
      %v2495 = vsel %vm1358, %v2452, 0
      %v2497 = vsel %vm1358, %v2454, 0
      %v2499 = vsel %vm1358, %v2456, 0
      %v2501 = vsel %vm1358, %v2458, 0
      %v2503 = vsel %vm1358, %v2460, 0
      %v2505 = vsel %vm1358, %v2462, 0
      %v2507 = vsel %vm1358, %v2464, 0
      %v2509 = vsel %vm1358, %v2466, 0
      %v2511 = vsel %vm1358, %v2468, 0
      %v2513 = vsel %vm1358, %v2470, 0
      %v2515 = vsel %vm1358, %v2472, 0
      %v2517 = vsel %vm1358, %v2474, 0
      %v2519 = vsel %vm1358, %v2476, 0
      %v2521 = vsel %vm1358, %v2478, 0
      %v2523 = vsel %vm1358, %v2480, 0
      %2525 = vmatpush.xpose.msra.mxu0 %v2523
      %2526 = vmatpush.xpose.msra.mxu0 %v2521
      %2527 = vmatpush.xpose.msra.mxu0 %v2519
      %2528 = vmatpush.xpose.msra.mxu0 %v2517
      %2529 = vmatpush.xpose.msra.mxu0 %v2515
      %2530 = vmatpush.xpose.msra.mxu0 %v2513
      %2531 = vmatpush.xpose.msra.mxu0 %v2511
      %2532 = vmatpush.xpose.msra.mxu0 %v2509
      %2533 = vmatpush.xpose.msra.mxu0 %v2507
      %2534 = vmatpush.xpose.msra.mxu0 %v2505
      %2535 = vmatpush.xpose.msra.mxu0 %v2503
      %2536 = vmatpush.xpose.msra.mxu0 %v2501
      %2537 = vmatpush.xpose.msra.mxu0 %v2499
      %2538 = vmatpush.xpose.msra.mxu0 %v2497
      %2539 = vmatpush.xpose.msra.mxu0 %v2495
      %2540 = vmatpush.xpose.msra.mxu0 %v2493
      %2541 = vmatmul.f32.gmra.mxu0 %v2482
      %v2542 = vpop.f32.mrf.mxu0
      %v2543 = vadd.f32 0.0, %v2542
      %2544 = vmatmul.f32.gmra.mxu0 %v2485
      %v2545 = vpop.f32.mrf.mxu0
      %v2546 = vadd.f32 0.0, %v2545
      %2547 = vmatmul.f32.gmra.mxu0 %v2488
      %v2548 = vpop.f32.mrf.mxu0
      %v2549 = vadd.f32 0.0, %v2548
      %2550 = vmatmul.f32.gmra.mxu0 %v2491
      %v2551 = vpop.f32.mrf.mxu0
      %v2552 = vadd.f32 0.0, %v2551
      %2553 = vdwg.mxu0
      %v2554 = vmul.f32 %v2543, 0.35355338
      %v2555 = vmul.f32 %v2546, 0.35355338
      %v2556 = vmul.f32 %v2549, 0.35355338
      %v2557 = vmul.f32 %v2552, 0.35355338
      %v2558 = vadd.f32 %v2554, %v1789
      %v2559 = vadd.f32 %v2555, %v1789
      %v2560 = vadd.f32 %v2556, %v1789
      %v2561 = vadd.f32 %v2557, %v1789
      %2562 = vmax.xlane.f32.xlu0 %v2558
      %v2563 = vpop.xlane.xlu0 %2562
      %2564 = vmax.xlane.f32.xlu0 %v2559
      %v2565 = vpop.xlane.xlu0 %2564
      %2566 = vmax.xlane.f32.xlu0 %v2560
      %v2567 = vpop.xlane.xlu0 %2566
      %2568 = vmax.xlane.f32.xlu0 %v2561
      %v2569 = vpop.xlane.xlu0 %2568
      %v2570 = vsub.f32 %v2558, %v2563
      %v2571 = vsub.f32 %v2559, %v2565
      %v2572 = vsub.f32 %v2560, %v2567
      %v2573 = vsub.f32 %v2561, %v2569
      %v2574 = vmul.f32 %v2570, 1.442695
      %v2575 = vpow.pop %v2574
      %v2576 = vmul.f32 %v2571, 1.442695
      %v2577 = vpow.pop %v2576
      %v2578 = vmul.f32 %v2572, 1.442695
      %v2579 = vpow.pop %v2578
      %v2580 = vmul.f32 %v2573, 1.442695
      %v2581 = vpow.pop %v2580
      %2582 = vmatpush.msra.mxu0 %v1356
      %2583 = vmatpush.msra.mxu0 %v1355
      %2584 = vmatpush.msra.mxu0 %v1354
      %2585 = vmatpush.msra.mxu0 %v1353
      %2586 = vmatpush.msra.mxu0 %v1352
      %2587 = vmatpush.msra.mxu0 %v1351
      %2588 = vmatpush.msra.mxu0 %v1350
      %2589 = vmatpush.msra.mxu0 %v1349
      %2590 = vmatpush.msra.mxu0 %v1348
      %2591 = vmatpush.msra.mxu0 %v1347
      %2592 = vmatpush.msra.mxu0 %v1346
      %2593 = vmatpush.msra.mxu0 %v1345
      %2594 = vmatpush.msra.mxu0 %v1344
      %2595 = vmatpush.msra.mxu0 %v1343
      %2596 = vmatpush.msra.mxu0 %v1342
      %2597 = vmatpush.msra.mxu0 %v1341
      %2598 = vmatmul.f32.gmra.mxu0 %v2575
      %v2599 = vpop.f32.mrf.mxu0
      %v2600 = vadd.f32 0.0, %v2599
      %2601 = vmatmul.f32.gmra.mxu0 %v2577
      %v2602 = vpop.f32.mrf.mxu0
      %v2603 = vadd.f32 0.0, %v2602
      %2604 = vmatmul.f32.gmra.mxu0 %v2579
      %v2605 = vpop.f32.mrf.mxu0
      %v2606 = vadd.f32 0.0, %v2605
      %2607 = vmatmul.f32.gmra.mxu0 %v2581
      %v2608 = vpop.f32.mrf.mxu0
      %v2609 = vadd.f32 0.0, %v2608
      %2610 = vdwg.mxu0
      %v2611 = vrcp.pop %v2600
      %v2612 = vrcp.pop %v2603
      %v2613 = vrcp.pop %v2606
      %v2614 = vrcp.pop %v2609
      %v2615 = vmul.f32 %v2575, %v2611
      %v2616 = vmul.f32 %v2577, %v2612
      %v2617 = vmul.f32 %v2579, %v2613
      %v2618 = vmul.f32 %v2581, %v2614
      %2635 = vrot.lane.b32.xlu0 %v2417, 64
      %v2636 = vpop.permute.xlu0 %2635
      %2637 = vrot.lane.b32.xlu0 %v2418, 64
      %v2638 = vpop.permute.xlu0 %2637
      %2639 = vrot.lane.b32.xlu0 %v2419, 64
      %v2640 = vpop.permute.xlu0 %2639
      %2641 = vrot.lane.b32.xlu0 %v2420, 64
      %v2642 = vpop.permute.xlu0 %2641
      %2643 = vrot.lane.b32.xlu0 %v2421, 64
      %v2644 = vpop.permute.xlu0 %2643
      %2645 = vrot.lane.b32.xlu0 %v2422, 64
      %v2646 = vpop.permute.xlu0 %2645
      %2647 = vrot.lane.b32.xlu0 %v2423, 64
      %v2648 = vpop.permute.xlu0 %2647
      %2649 = vrot.lane.b32.xlu0 %v2424, 64
      %v2650 = vpop.permute.xlu0 %2649
      %2651 = vrot.lane.b32.xlu0 %v2425, 64
      %v2652 = vpop.permute.xlu0 %2651
      %2653 = vrot.lane.b32.xlu0 %v2426, 64
      %v2654 = vpop.permute.xlu0 %2653
      %2655 = vrot.lane.b32.xlu0 %v2427, 64
      %v2656 = vpop.permute.xlu0 %2655
      %2657 = vrot.lane.b32.xlu0 %v2428, 64
      %v2658 = vpop.permute.xlu0 %2657
      %2659 = vrot.lane.b32.xlu0 %v2429, 64
      %v2660 = vpop.permute.xlu0 %2659
      %2661 = vrot.lane.b32.xlu0 %v2430, 64
      %v2662 = vpop.permute.xlu0 %2661
      %2663 = vrot.lane.b32.xlu0 %v2431, 64
      %v2664 = vpop.permute.xlu0 %2663
      %2665 = vrot.lane.b32.xlu0 %v2432, 64
      %v2666 = vpop.permute.xlu0 %2665
      %2683 = vmatpush.msra.mxu0 %v2666
      %2684 = vmatpush.msra.mxu0 %v2664
      %2685 = vmatpush.msra.mxu0 %v2662
      %2686 = vmatpush.msra.mxu0 %v2660
      %2687 = vmatpush.msra.mxu0 %v2658
      %2688 = vmatpush.msra.mxu0 %v2656
      %2689 = vmatpush.msra.mxu0 %v2654
      %2690 = vmatpush.msra.mxu0 %v2652
      %2691 = vmatpush.msra.mxu0 %v2650
      %2692 = vmatpush.msra.mxu0 %v2648
      %2693 = vmatpush.msra.mxu0 %v2646
      %2694 = vmatpush.msra.mxu0 %v2644
      %2695 = vmatpush.msra.mxu0 %v2642
      %2696 = vmatpush.msra.mxu0 %v2640
      %2697 = vmatpush.msra.mxu0 %v2638
      %2698 = vmatpush.msra.mxu0 %v2636
      %2699 = vmatmul.f32.gmra.mxu0 %v2615
      %v2700 = vpop.f32.mrf.mxu0
      %v2701 = vadd.f32 0.0, %v2700
      %2702 = vmatmul.f32.gmra.mxu0 %v2616
      %v2703 = vpop.f32.mrf.mxu0
      %v2704 = vadd.f32 0.0, %v2703
      %2705 = vmatmul.f32.gmra.mxu0 %v2617
      %v2706 = vpop.f32.mrf.mxu0
      %v2707 = vadd.f32 0.0, %v2706
      %2708 = vmatmul.f32.gmra.mxu0 %v2618
      %v2709 = vpop.f32.mrf.mxu0
      %v2710 = vadd.f32 0.0, %v2709
      %2711 = vdwg.mxu0
      %v2712 = vld [vmem:[%s55] sm:$0xff]
      %v2713 = vld [vmem:[%s55 + $0x8] sm:$0xff]
      %v2714 = vld [vmem:[%s55 + $0x10] sm:$0xff]
      %v2715 = vld [vmem:[%s55 + $0x18] sm:$0xff]
      %v2717 = vsel %vm1358, %v2701, 0
      %v2720 = vsel %vm1358, %v2704, 0
      %v2723 = vsel %vm1358, %v2707, 0
      %v2726 = vsel %vm1358, %v2710, 0
      %2728 = vmatpush.msra.mxu0 0.0
      %2729 = vmatpush.msra.mxu0 0.0
      %2730 = vmatpush.msra.mxu0 0.0
      %2731 = vmatpush.msra.mxu0 0.0
      %2732 = vmatpush.msra.mxu0 0.0
      %2733 = vmatpush.msra.mxu0 0.0
      %2734 = vmatpush.msra.mxu0 0.0
      %2735 = vmatpush.msra.mxu0 0.0
      %2736 = vmatpush.msra.mxu0 0.0
      %2737 = vmatpush.msra.mxu0 0.0
      %2738 = vmatpush.msra.mxu0 0.0
      %2739 = vmatpush.msra.mxu0 0.0
      %2740 = vmatpush.msra.mxu0 %v2715
      %2741 = vmatpush.msra.mxu0 %v2714
      %2742 = vmatpush.msra.mxu0 %v2713
      %2743 = vmatpush.msra.mxu0 %v2712
      %2744 = vmatmul.f32.gmra.mxu0 %v2717
      %v2745 = vpop.f32.mrf.mxu0
      %v2746 = vadd.f32 0.0, %v2745
      %2747 = vmatmul.f32.gmra.mxu0 %v2720
      %v2748 = vpop.f32.mrf.mxu0
      %v2749 = vadd.f32 0.0, %v2748
      %2750 = vmatmul.f32.gmra.mxu0 %v2723
      %v2751 = vpop.f32.mrf.mxu0
      %v2752 = vadd.f32 0.0, %v2751
      %2753 = vmatmul.f32.gmra.mxu0 %v2726
      %v2754 = vpop.f32.mrf.mxu0
      %v2755 = vadd.f32 0.0, %v2754
      %2756 = vdwg.mxu0
      %v2757 = vadd.f32 %v2244, %v2746
      %v2758 = vadd.f32 %v2245, %v2749
      %v2759 = vadd.f32 %v2246, %v2752
      %v2760 = vadd.f32 %v2247, %v2755
      %v2761 = vld [vmem:[%s57] sm:$0x1]
      %v2763 = vperm.slane %v2761, 0
      %v2765 = vadd.f32 %v2757, %v2763
      %v2766 = vadd.f32 %v2758, %v2763
      %v2767 = vadd.f32 %v2759, %v2763
      %v2768 = vadd.f32 %v2760, %v2763
      %v2769 = vsel %vm1358, %v2765, 0.0
      %2770 = vadd.xlane.f32.xlu0 %v2769
      %v2771 = vpop.xlane.xlu0 %2770
      %v2772 = vsel %vm1358, %v2766, 0.0
      %2773 = vadd.xlane.f32.xlu0 %v2772
      %v2774 = vpop.xlane.xlu0 %2773
      %v2775 = vsel %vm1358, %v2767, 0.0
      %2776 = vadd.xlane.f32.xlu0 %v2775
      %v2777 = vpop.xlane.xlu0 %2776
      %v2778 = vsel %vm1358, %v2768, 0.0
      %2779 = vadd.xlane.f32.xlu0 %v2778
      %v2780 = vpop.xlane.xlu0 %2779
      %v2781 = vmul.f32 %v2771, %v1377
      %v2782 = vmul.f32 %v2774, %v1377
      %v2783 = vmul.f32 %v2777, %v1377
      %v2784 = vmul.f32 %v2780, %v1377
      %v2785 = vsub.f32 %v2765, %v2781
      %v2786 = vsub.f32 %v2766, %v2782
      %v2787 = vsub.f32 %v2767, %v2783
      %v2788 = vsub.f32 %v2768, %v2784
      %v2789 = vmul.f32 %v2785, %v2785
      %v2790 = vmul.f32 %v2786, %v2786
      %v2791 = vmul.f32 %v2787, %v2787
      %v2792 = vmul.f32 %v2788, %v2788
      %v2793 = vsel %vm1358, %v2789, 0.0
      %2794 = vadd.xlane.f32.xlu0 %v2793
      %v2795 = vpop.xlane.xlu0 %2794
      %v2796 = vsel %vm1358, %v2790, 0.0
      %2797 = vadd.xlane.f32.xlu0 %v2796
      %v2798 = vpop.xlane.xlu0 %2797
      %v2799 = vsel %vm1358, %v2791, 0.0
      %2800 = vadd.xlane.f32.xlu0 %v2799
      %v2801 = vpop.xlane.xlu0 %2800
      %v2802 = vsel %vm1358, %v2792, 0.0
      %2803 = vadd.xlane.f32.xlu0 %v2802
      %v2804 = vpop.xlane.xlu0 %2803
      %v2805 = vmul.f32 %v2795, %v1377
      %v2806 = vmul.f32 %v2798, %v1377
      %v2807 = vmul.f32 %v2801, %v1377
      %v2808 = vmul.f32 %v2804, %v1377
      %v2809 = vadd.f32 %v2805, 1e-12
      %v2810 = vadd.f32 %v2806, 1e-12
      %v2811 = vadd.f32 %v2807, 1e-12
      %v2812 = vadd.f32 %v2808, 1e-12
      %v2813 = vrsqrt.pop %v2809
      %v2814 = vmul.f32 %v2813, %v2809
      %v2815 = vmul.f32 %v2814, %v2813
      %v2816 = vmul.f32 0.5, %v2815
      %v2817 = vsub.f32 1.5, %v2816
      %v2818 = vmul.f32 %v2813, %v2817
      %vm2819 = vweird.f32 %v2809
      %vm2820 = vweird.f32 %v2813
      %vm2821 = vmor %vm2819, %vm2820
      %v2822 = vsel %vm2821, %v2813, %v2818
      %v2823 = vrsqrt.pop %v2810
      %v2824 = vmul.f32 %v2823, %v2810
      %v2825 = vmul.f32 %v2824, %v2823
      %v2826 = vmul.f32 0.5, %v2825
      %v2827 = vsub.f32 1.5, %v2826
      %v2828 = vmul.f32 %v2823, %v2827
      %vm2829 = vweird.f32 %v2810
      %vm2830 = vweird.f32 %v2823
      %vm2831 = vmor %vm2829, %vm2830
      %v2832 = vsel %vm2831, %v2823, %v2828
      %v2833 = vrsqrt.pop %v2811
      %v2834 = vmul.f32 %v2833, %v2811
      %v2835 = vmul.f32 %v2834, %v2833
      %v2836 = vmul.f32 0.5, %v2835
      %v2837 = vsub.f32 1.5, %v2836
      %v2838 = vmul.f32 %v2833, %v2837
      %vm2839 = vweird.f32 %v2811
      %vm2840 = vweird.f32 %v2833
      %vm2841 = vmor %vm2839, %vm2840
      %v2842 = vsel %vm2841, %v2833, %v2838
      %v2843 = vrsqrt.pop %v2812
      %v2844 = vmul.f32 %v2843, %v2812
      %v2845 = vmul.f32 %v2844, %v2843
      %v2846 = vmul.f32 0.5, %v2845
      %v2847 = vsub.f32 1.5, %v2846
      %v2848 = vmul.f32 %v2843, %v2847
      %vm2849 = vweird.f32 %v2812
      %vm2850 = vweird.f32 %v2843
      %vm2851 = vmor %vm2849, %vm2850
      %v2852 = vsel %vm2851, %v2843, %v2848
      %v2853 = vmul.f32 %v2785, %v2822
      %v2854 = vmul.f32 %v2786, %v2832
      %v2855 = vmul.f32 %v2787, %v2842
      %v2856 = vmul.f32 %v2788, %v2852
      %v2857 = vld [vmem:[%s59] sm:$0x1]
      %v2859 = vperm.slane %v2857, 0
      %v2861 = vmul.f32 %v2853, %v2859
      %v2862 = vmul.f32 %v2854, %v2859
      %v2863 = vmul.f32 %v2855, %v2859
      %v2864 = vmul.f32 %v2856, %v2859
      %v2865 = vld [vmem:[%s61] sm:$0x1]
      %v2867 = vperm.slane %v2865, 0
      %v2869 = vadd.f32 %v2861, %v2867
      %v2870 = vadd.f32 %v2862, %v2867
      %v2871 = vadd.f32 %v2863, %v2867
      %v2872 = vadd.f32 %v2864, %v2867
      %v2873 = vld [vmem:[%s63] sm:$0xff]
      %v2874 = vld [vmem:[%s63 + $0x8] sm:$0xff]
      %v2875 = vld [vmem:[%s63 + $0x10] sm:$0xff]
      %v2876 = vld [vmem:[%s63 + $0x18] sm:$0xff]
      %v2877 = vld [vmem:[%s65] sm:$0x1]
      %v2879 = vperm.slane %v2877, 0
      %v2882 = vsel %vm1358, %v2869, 0
      %v2885 = vsel %vm1358, %v2870, 0
      %v2888 = vsel %vm1358, %v2871, 0
      %v2891 = vsel %vm1358, %v2872, 0
      %2893 = vmatpush.msra.mxu0 0.0
      %2894 = vmatpush.msra.mxu0 0.0
      %2895 = vmatpush.msra.mxu0 0.0
      %2896 = vmatpush.msra.mxu0 0.0
      %2897 = vmatpush.msra.mxu0 0.0
      %2898 = vmatpush.msra.mxu0 0.0
      %2899 = vmatpush.msra.mxu0 0.0
      %2900 = vmatpush.msra.mxu0 0.0
      %2901 = vmatpush.msra.mxu0 0.0
      %2902 = vmatpush.msra.mxu0 0.0
      %2903 = vmatpush.msra.mxu0 0.0
      %2904 = vmatpush.msra.mxu0 0.0
      %2905 = vmatpush.msra.mxu0 %v2876
      %2906 = vmatpush.msra.mxu0 %v2875
      %2907 = vmatpush.msra.mxu0 %v2874
      %2908 = vmatpush.msra.mxu0 %v2873
      %2909 = vmatmul.f32.gmra.mxu0 %v2882
      %v2910 = vpop.f32.mrf.mxu0
      %v2911 = vadd.f32 %v2879, %v2910
      %2912 = vmatmul.f32.gmra.mxu0 %v2885
      %v2913 = vpop.f32.mrf.mxu0
      %v2914 = vadd.f32 %v2879, %v2913
      %2915 = vmatmul.f32.gmra.mxu0 %v2888
      %v2916 = vpop.f32.mrf.mxu0
      %v2917 = vadd.f32 %v2879, %v2916
      %2918 = vmatmul.f32.gmra.mxu0 %v2891
      %v2919 = vpop.f32.mrf.mxu0
      %v2920 = vadd.f32 %v2879, %v2919
      %2921 = vdwg.mxu0
      %v2922 = vmul.f32 %v2911, 0.5
      %v2923 = vmul.f32 %v2914, 0.5
      %v2924 = vmul.f32 %v2917, 0.5
      %v2925 = vmul.f32 %v2920, 0.5
      %v2926 = vmul.f32 %v2911, 0.044715
      %v2927 = vmul.f32 %v2914, 0.044715
      %v2928 = vmul.f32 %v2917, 0.044715
      %v2929 = vmul.f32 %v2920, 0.044715
      %v2930 = vmul.f32 %v2926, %v2911
      %v2931 = vmul.f32 %v2927, %v2914
      %v2932 = vmul.f32 %v2928, %v2917
      %v2933 = vmul.f32 %v2929, %v2920
      %v2934 = vmul.f32 %v2930, %v2911
      %v2935 = vmul.f32 %v2931, %v2914
      %v2936 = vmul.f32 %v2932, %v2917
      %v2937 = vmul.f32 %v2933, %v2920
      %v2938 = vadd.f32 %v2911, %v2934
      %v2939 = vadd.f32 %v2914, %v2935
      %v2940 = vadd.f32 %v2917, %v2936
      %v2941 = vadd.f32 %v2920, %v2937
      %v2942 = vmul.f32 %v2938, 0.7978846
      %v2943 = vmul.f32 %v2939, 0.7978846
      %v2944 = vmul.f32 %v2940, 0.7978846
      %v2945 = vmul.f32 %v2941, 0.7978846
      %v2946 = vtanh.pop %v2942
      %v2947 = vtanh.pop %v2943
      %v2948 = vtanh.pop %v2944
      %v2949 = vtanh.pop %v2945
      %v2950 = vadd.f32 %v2946, 1.0
      %v2951 = vadd.f32 %v2947, 1.0
      %v2952 = vadd.f32 %v2948, 1.0
      %v2953 = vadd.f32 %v2949, 1.0
      %v2954 = vmul.f32 %v2922, %v2950
      %v2955 = vmul.f32 %v2923, %v2951
      %v2956 = vmul.f32 %v2924, %v2952
      %v2957 = vmul.f32 %v2925, %v2953
      %v2958 = vld [vmem:[%s67] sm:$0xff]
      %v2959 = vld [vmem:[%s67 + $0x8] sm:$0xff]
      %v2960 = vld [vmem:[%s67 + $0x10] sm:$0xff]
      %v2961 = vld [vmem:[%s67 + $0x18] sm:$0xff]
      %v2962 = vld [vmem:[%s67 + $0x20] sm:$0xff]
      %v2963 = vld [vmem:[%s67 + $0x28] sm:$0xff]
      %v2964 = vld [vmem:[%s67 + $0x30] sm:$0xff]
      %v2965 = vld [vmem:[%s67 + $0x38] sm:$0xff]
      %v2966 = vld [vmem:[%s67 + $0x40] sm:$0xff]
      %v2967 = vld [vmem:[%s67 + $0x48] sm:$0xff]
      %v2968 = vld [vmem:[%s67 + $0x50] sm:$0xff]
      %v2969 = vld [vmem:[%s67 + $0x58] sm:$0xff]
      %v2970 = vld [vmem:[%s67 + $0x60] sm:$0xff]
      %v2971 = vld [vmem:[%s67 + $0x68] sm:$0xff]
      %v2972 = vld [vmem:[%s67 + $0x70] sm:$0xff]
      %v2973 = vld [vmem:[%s67 + $0x78] sm:$0xff]
      %2974 = vmatpush.msra.mxu0 %v2973
      %2975 = vmatpush.msra.mxu0 %v2972
      %2976 = vmatpush.msra.mxu0 %v2971
      %2977 = vmatpush.msra.mxu0 %v2970
      %2978 = vmatpush.msra.mxu0 %v2969
      %2979 = vmatpush.msra.mxu0 %v2968
      %2980 = vmatpush.msra.mxu0 %v2967
      %2981 = vmatpush.msra.mxu0 %v2966
      %2982 = vmatpush.msra.mxu0 %v2965
      %2983 = vmatpush.msra.mxu0 %v2964
      %2984 = vmatpush.msra.mxu0 %v2963
      %2985 = vmatpush.msra.mxu0 %v2962
      %2986 = vmatpush.msra.mxu0 %v2961
      %2987 = vmatpush.msra.mxu0 %v2960
      %2988 = vmatpush.msra.mxu0 %v2959
      %2989 = vmatpush.msra.mxu0 %v2958
      %2990 = vmatmul.f32.gmra.mxu0 %v2954
      %v2991 = vpop.f32.mrf.mxu0
      %v2992 = vadd.f32 0.0, %v2991
      %2993 = vmatmul.f32.gmra.mxu0 %v2955
      %v2994 = vpop.f32.mrf.mxu0
      %v2995 = vadd.f32 0.0, %v2994
      %2996 = vmatmul.f32.gmra.mxu0 %v2956
      %v2997 = vpop.f32.mrf.mxu0
      %2998 = vmatmul.f32.gmra.mxu0 %v2957
      %v2999 = vpop.f32.mrf.mxu0
      %3000 = vdwg.mxu0
      %v3001 = vadd.f32 %v2765, %v2992
      %v3002 = vadd.f32 %v2766, %v2995
      %v3003 = vld [vmem:[%s69] sm:$0x1]
      %v3005 = vperm.slane %v3003, 0
      %v3007 = vadd.f32 %v3001, %v3005
      %v3008 = vadd.f32 %v3002, %v3005
      %v3009 = vsel %vm1358, %v3007, 0.0
      %3010 = vadd.xlane.f32.xlu0 %v3009
      %v3011 = vpop.xlane.xlu0 %3010
      %v3012 = vsel %vm1358, %v3008, 0.0
      %3013 = vadd.xlane.f32.xlu0 %v3012
      %v3014 = vpop.xlane.xlu0 %3013
      %v3015 = vmul.f32 %v3011, %v1377
      %v3016 = vmul.f32 %v3014, %v1377
      %v3017 = vsub.f32 %v3007, %v3015
      %v3018 = vsub.f32 %v3008, %v3016
      %v3019 = vmul.f32 %v3017, %v3017
      %v3020 = vmul.f32 %v3018, %v3018
      %v3021 = vsel %vm1358, %v3019, 0.0
      %3022 = vadd.xlane.f32.xlu0 %v3021
      %v3023 = vpop.xlane.xlu0 %3022
      %v3024 = vsel %vm1358, %v3020, 0.0
      %3025 = vadd.xlane.f32.xlu0 %v3024
      %v3026 = vpop.xlane.xlu0 %3025
      %v3027 = vmul.f32 %v3023, %v1377
      %v3028 = vmul.f32 %v3026, %v1377
      %v3029 = vadd.f32 %v3027, 1e-12
      %v3030 = vadd.f32 %v3028, 1e-12
      %v3031 = vrsqrt.pop %v3029
      %v3032 = vmul.f32 %v3031, %v3029
      %v3033 = vmul.f32 %v3032, %v3031
      %v3034 = vmul.f32 0.5, %v3033
      %v3035 = vsub.f32 1.5, %v3034
      %v3036 = vmul.f32 %v3031, %v3035
      %vm3037 = vweird.f32 %v3029
      %vm3038 = vweird.f32 %v3031
      %vm3039 = vmor %vm3037, %vm3038
      %v3040 = vsel %vm3039, %v3031, %v3036
      %v3041 = vrsqrt.pop %v3030
      %v3042 = vmul.f32 %v3041, %v3030
      %v3043 = vmul.f32 %v3042, %v3041
      %v3044 = vmul.f32 0.5, %v3043
      %v3045 = vsub.f32 1.5, %v3044
      %v3046 = vmul.f32 %v3041, %v3045
      %vm3047 = vweird.f32 %v3030
      %vm3048 = vweird.f32 %v3041
      %vm3049 = vmor %vm3047, %vm3048
      %v3050 = vsel %vm3049, %v3041, %v3046
      %v3051 = vmul.f32 %v3017, %v3040
      %v3052 = vmul.f32 %v3018, %v3050
      %v3053 = vld [vmem:[%s13] sm:$0x1]
      %v3055 = vperm.slane %v3053, 0
      %v3057 = vmul.f32 %v3051, %v3055
      %v3058 = vmul.f32 %v3052, %v3055
      %v3059 = vld [vmem:[%s15] sm:$0x1]
      %v3061 = vperm.slane %v3059, 0
      %v3063 = vadd.f32 %v3057, %v3061
      %v3064 = vadd.f32 %v3058, %v3061
      %v3065 = vld [vmem:[%s17] sm:$0xf]
      %v3066 = vld [vmem:[%s19] sm:$0xf]
      %3068 = vset.pattern.permute.xlu0 0
      %3069 = vperm.xlu0 %3068, %v3066
      %v3070 = vpop.permute.xlu0 %3069
      %v3073 = vsel %vm1358, %v3065, 0
      %v3076 = vsel %vm1358, %v3063, 0
      %v3079 = vsel %vm1358, %v3064, 0
      %3081 = vmatpush.xpose.msra.mxu0 0.0
      %3082 = vmatpush.xpose.msra.mxu0 0.0
      %3083 = vmatpush.xpose.msra.mxu0 0.0
      %3084 = vmatpush.xpose.msra.mxu0 0.0
      %3085 = vmatpush.xpose.msra.mxu0 0.0
      %3086 = vmatpush.xpose.msra.mxu0 0.0
      %3087 = vmatpush.xpose.msra.mxu0 0.0
      %3088 = vmatpush.xpose.msra.mxu0 0.0
      %3089 = vmatpush.xpose.msra.mxu0 0.0
      %3090 = vmatpush.xpose.msra.mxu0 0.0
      %3091 = vmatpush.xpose.msra.mxu0 0.0
      %3092 = vmatpush.xpose.msra.mxu0 0.0
      %3093 = vmatpush.xpose.msra.mxu0 0.0
      %3094 = vmatpush.xpose.msra.mxu0 0.0
      %3095 = vmatpush.xpose.msra.mxu0 %v3079
      %3096 = vmatpush.xpose.msra.mxu0 %v3076
      %3097 = vmatmul.f32.gmra.mxu0 %v3073
      %v3098 = vpop.f32.mrf.mxu0
      %v3099 = vadd.f32 %v3070, %v3098
      %3100 = vdwg.mxu0
      %v3101 = vld [vmem:[%s21] sm:$0xff]
      %v3102 = vld [vmem:[%s21 + $0x8] sm:$0xff]
      %v3103 = vld [vmem:[%s21 + $0x10] sm:$0xff]
      %v3104 = vld [vmem:[%s21 + $0x18] sm:$0xff]
      %v3105 = vld [vmem:[%s21 + $0x20] sm:$0xff]
      %v3106 = vld [vmem:[%s21 + $0x28] sm:$0xff]
      %vm3107 = vcmask 130048
      %v3109 = vsel %vm3107, %v3099, 0
      %3111 = vmatpush.msra.mxu0 0.0
      %3112 = vmatpush.msra.mxu0 0.0
      %3113 = vmatpush.msra.mxu0 0.0
      %3114 = vmatpush.msra.mxu0 0.0
      %3115 = vmatpush.msra.mxu0 0.0
      %3116 = vmatpush.msra.mxu0 0.0
      %3117 = vmatpush.msra.mxu0 0.0
      %3118 = vmatpush.msra.mxu0 0.0
      %3119 = vmatpush.msra.mxu0 0.0
      %3120 = vmatpush.msra.mxu0 0.0
      %3121 = vmatpush.msra.mxu0 0.0
      %3122 = vmatpush.msra.mxu0 0.0
      %3123 = vmatpush.msra.mxu0 0.0
      %3124 = vmatpush.msra.mxu0 0.0
      %3125 = vmatpush.msra.mxu0 %v3104
      %3126 = vmatpush.msra.mxu0 %v3101
      %3127 = vmatmul.f32.gmra.mxu0 %v3109
      %v3128 = vpop.f32.mrf.mxu0
      %v3129 = vadd.f32 0.0, %v3128
      %3130 = vdwg.mxu0
      %3131 = vmatpush.msra.mxu0 0.0
      %3132 = vmatpush.msra.mxu0 0.0
      %3133 = vmatpush.msra.mxu0 0.0
      %3134 = vmatpush.msra.mxu0 0.0
      %3135 = vmatpush.msra.mxu0 0.0
      %3136 = vmatpush.msra.mxu0 0.0
      %3137 = vmatpush.msra.mxu0 0.0
      %3138 = vmatpush.msra.mxu0 0.0
      %3139 = vmatpush.msra.mxu0 0.0
      %3140 = vmatpush.msra.mxu0 0.0
      %3141 = vmatpush.msra.mxu0 0.0
      %3142 = vmatpush.msra.mxu0 0.0
      %3143 = vmatpush.msra.mxu0 0.0
      %3144 = vmatpush.msra.mxu0 0.0
      %3145 = vmatpush.msra.mxu0 %v3105
      %3146 = vmatpush.msra.mxu0 %v3102
      %3147 = vmatmul.f32.gmra.mxu0 %v3109
      %v3148 = vpop.f32.mrf.mxu0
      %v3149 = vadd.f32 0.0, %v3148
      %3150 = vdwg.mxu0
      %3151 = vmatpush.msra.mxu0 0.0
      %3152 = vmatpush.msra.mxu0 0.0
      %3153 = vmatpush.msra.mxu0 0.0
      %3154 = vmatpush.msra.mxu0 0.0
      %3155 = vmatpush.msra.mxu0 0.0
      %3156 = vmatpush.msra.mxu0 0.0
      %3157 = vmatpush.msra.mxu0 0.0
      %3158 = vmatpush.msra.mxu0 0.0
      %3159 = vmatpush.msra.mxu0 0.0
      %3160 = vmatpush.msra.mxu0 0.0
      %3161 = vmatpush.msra.mxu0 0.0
      %3162 = vmatpush.msra.mxu0 0.0
      %3163 = vmatpush.msra.mxu0 0.0
      %3164 = vmatpush.msra.mxu0 0.0
      %3165 = vmatpush.msra.mxu0 %v3106
      %3166 = vmatpush.msra.mxu0 %v3103
      %3167 = vmatmul.f32.gmra.mxu0 %v3109
      %v3168 = vpop.f32.mrf.mxu0
      %v3169 = vadd.f32 0.0, %v3168
      %3170 = vdwg.mxu0
      %v3173 = vrot.slane %v3149, 4
      %vm3174 = vcmask 1043456
      %v3175 = vsel %vm3174, %v3129, %v3173
      %3177 = vst [vmem:[%s1070] sm:$0xff] %v3175
      %3178 = vst [vmem:[%s1070 + $0x8] sm:$0xf] %v3169
      %p3179 = scmp.lt.s32.totalorder %s82, 1
      %s3180 = scalar_select %p3179, %s82, 1
      %s3181 = smul.addr %s3180, 3
      %s3182 = smul.addr %s3181, 4
      %s3183 = scalar_lea.vmem %s71, %s3182
      // Predicated region
      $region161: #{vision_transformer_forward.3} parent=159 // pred_check
        %p3184 = pneg %p840
      $region162: #{vision_transformer_forward.3} parent=159 // pred_check_branch
        %3186 = sbr.rel (%p3184) target = $region164
      $region163: #{vision_transformer_forward.3} parent=159 // pred_region
        _
      $region164: #{vision_transformer_forward.3} parent=159 // pred_fallthru
        _
    $region160: #{vision_transformer_forward.3} parent=5 // pred_fallthru
      _
    %p3187 = scmp.le.s32.totalorder 2, %s77
    // Predicated region
    $region165: #{vision_transformer_forward.3} parent=5 // pred_check
      %p3188 = pneg %p3187
    $region166: #{vision_transformer_forward.3} parent=5 // pred_check_branch
      %3190 = sbr.rel (%p3188) target = $region168
    $region167: #{vision_transformer_forward.3} parent=5 // pred_region
      %s3191 = ssub.s32 %s77, 2
      // Predicated region
      $region169: #{vision_transformer_forward.3} parent=167 // pred_check
        %p3192 = pneg %p846
      $region170: #{vision_transformer_forward.3} parent=167 // pred_check_branch
        %3194 = sbr.rel (%p3192) target = $region172
      $region171: #{vision_transformer_forward.3} parent=167 // pred_region
        %p3195 = scmp.lt.s32.totalorder %s83, 1
        %s3196 = scalar_select %p3195, %s83, 1
        %s3197 = smul.addr %s3196, 3
        %s3198 = smul.addr %s3197, 4
        %s3199 = scalar_lea.vmem %s71, %s3198
      $region172: #{vision_transformer_forward.3} parent=167 // pred_fallthru
        _
    $region168: #{vision_transformer_forward.3} parent=5 // pred_fallthru
      _
  $region6: #{vision_transformer_forward.3} parent=0 // loop_footer
    %s81 = sadd.s32 1, %s77
  $region7: #{vision_transformer_forward.3} parent=0 // loop_footer_branch
    %76 = sbr.rel target = $region3
  $region8: #{vision_transformer_forward.3} parent=0 // loop_exit
    _

</llo_original>
